<compile_context>
chip_gen: v5e
topology: v5e:2x2
jax: 0.10.0
libtpu: 0.0.40
codegen_flags: <defaults>
</compile_context>

<pallas_src>
from functools import partial

import jax
import jax.numpy as jnp
from jax.experimental import pallas as pl
from jax.experimental.pallas import tpu as pltpu

# ----------------------------- hyper params ---------------------------------
LATENT_DIM = 64        # input feature size
HIDDEN_DIM = 32        # LSTM hidden size  (4*H = 128 -> lane-dense gates)
NUM_LAYERS = 2
BIDIRECTIONAL = True
BATCH = 2
SEQ = 8


# --------------------------- fused LSTM kernel -------------------------------
def _lstm_kernel(num_layers, num_dirs, hidden, seq_len, b_pad,
                 x_ref, h0_ref, c0_ref, *rest):
    """Whole multi-layer (bi)directional LSTM in one kernel invocation.

    x_ref  : (T*Bp, D0)       time-major rows (row = t*Bp + b), batch padded to Bp
    h0_ref : (L*Dirs*Bp, H)   initial hidden state (PyTorch layer-major order)
    c0_ref : (L*Dirs*Bp, H)   initial cell state
    rest   : per (layer, dir): w_ih_t (D_in,4H), w_hh_t (H,4H), b (1,4H)
             then outputs: y (T*Bp, Dirs*H), h_n (L*Dirs*Bp, H), c_n (L*Dirs*Bp, H)
             then scratch: lay_ref (T*Bp, Dirs*H) for intermediate layer output.
    """
    H = hidden
    n_cells = num_layers * num_dirs
    w_refs = rest[:3 * n_cells]
    y_ref, hn_ref, cn_ref, lay_ref = rest[3 * n_cells:]

    cur = x_ref[...]                                   # layer input, (T*Bp, D_in)

    for layer in range(num_layers):
        last = layer == num_layers - 1
        out_ref = y_ref if last else lay_ref           # last layer writes y directly

        # ---- per-direction weights, initial state, batched input projection.
        #      The (T*Bp, 4H) projection is one lane-dense MXU matmul per
        #      direction and is off the recurrent critical path. ----
        xp, w_hh, h, c = [], [], [], []
        for d in range(num_dirs):
            cell = layer * num_dirs + d
            w_ih = w_refs[3 * cell][...]               # (D_in, 4H)
            w_hh.append(w_refs[3 * cell + 1][...])     # (H,    4H)
            b = w_refs[3 * cell + 2][...]              # (1,    4H) (= b_ih + b_hh)
            xp.append(jnp.dot(cur, w_ih, preferred_element_type=jnp.float32) + b)
            h.append(h0_ref[cell * b_pad:(cell + 1) * b_pad, :])   # (Bp, H)
            c.append(c0_ref[cell * b_pad:(cell + 1) * b_pad, :])

        # ---- interleaved recurrence: both directions advance every step so
        #      their independent serial MXU/EUP chains overlap.  Static unroll
        #      (small T) so the LLO scheduler sees the whole recurrence. ----
        for s in range(seq_len):
            for d in range(num_dirs):
                t = s if d == 0 else seq_len - 1 - s
                r0, r1 = t * b_pad, (t + 1) * b_pad    # 8-sublane aligned rows
                g = xp[d][r0:r1, :] + jnp.dot(
                    h[d], w_hh[d], preferred_element_type=jnp.float32)  # (Bp,4H)
                # PyTorch gate order: i, f, g, o.  One wide sigmoid covers
                # i/f/o lanes; only the g-gate needs a (narrow) tanh.
                sg = jax.nn.sigmoid(g)
                gg = jnp.tanh(g[:, 2 * H:3 * H])
                c[d] = sg[:, H:2 * H] * c[d] + sg[:, 0:H] * gg
                h[d] = sg[:, 3 * H:4 * H] * jnp.tanh(c[d])
                # direct slab store (no Python-list accumulation / concat)
                out_ref[r0:r1, d * H:(d + 1) * H] = h[d]

        # final per-cell states straight into the output refs (no concat)
        for d in range(num_dirs):
            cell = layer * num_dirs + d
            hn_ref[cell * b_pad:(cell + 1) * b_pad, :] = h[d]
            cn_ref[cell * b_pad:(cell + 1) * b_pad, :] = c[d]

        if not last:
            cur = lay_ref[...]                          # next layer input (T*Bp, Dirs*H)


# ------------------------------- wrapper --------------------------------------
def lstm_forward(x, prepared_weights, hidden_dim, num_layers, bidirectional,
                 hidden_state=None):
    """x: (B, T, latent_dim), batch_first like nn.LSTM.  Returns (y, (h_n, c_n))."""
    b, t, d0 = x.shape
    num_dirs = 2 if bidirectional else 1
    n_cells = num_layers * num_dirs
    b_pad = max(8, ((b + 7) // 8) * 8)                  # pad batch to full sublane tile

    x = x.astype(jnp.float32)
    # time-major rows (row = t*b_pad + b), zero-padded batch rows
    x_tm = jnp.transpose(x, (1, 0, 2))                  # (T, B, D0)
    if b_pad != b:
        x_tm = jnp.pad(x_tm, ((0, 0), (0, b_pad - b), (0, 0)))
    x2d = x_tm.reshape(t * b_pad, d0)

    if hidden_state is None:
        h0 = jnp.zeros((n_cells * b_pad, hidden_dim), jnp.float32)
        c0 = jnp.zeros((n_cells * b_pad, hidden_dim), jnp.float32)
    else:
        def _pad_state(s):
            s = s.reshape(n_cells, b, hidden_dim).astype(jnp.float32)
            if b_pad != b:
                s = jnp.pad(s, ((0, 0), (0, b_pad - b), (0, 0)))
            return s.reshape(n_cells * b_pad, hidden_dim)
        h0 = _pad_state(hidden_state[0])
        c0 = _pad_state(hidden_state[1])

    flat_w = []
    for p in prepared_weights:                          # already transposed / folded
        flat_w += [p['w_ih_t'], p['w_hh_t'], p['b']]

    y2d, hn, cn = pl.pallas_call(
        partial(_lstm_kernel, num_layers, num_dirs, hidden_dim, t, b_pad),
        out_shape=(
            jax.ShapeDtypeStruct((t * b_pad, num_dirs * hidden_dim), jnp.float32),
            jax.ShapeDtypeStruct((n_cells * b_pad, hidden_dim), jnp.float32),
            jax.ShapeDtypeStruct((n_cells * b_pad, hidden_dim), jnp.float32),
        ),
        scratch_shapes=[
            pltpu.VMEM((t * b_pad, num_dirs * hidden_dim), jnp.float32),
        ],
    )(x2d, h0, c0, *flat_w)

    # drop batch padding, back to batch_first
    y = y2d.reshape(t, b_pad, num_dirs * hidden_dim)[:, :b].transpose(1, 0, 2)
    h_n = hn.reshape(n_cells, b_pad, hidden_dim)[:, :b]
    c_n = cn.reshape(n_cells, b_pad, hidden_dim)[:, :b]
    return y, (h_n, c_n)


# --------------------------- parameter creation --------------------------------
def init_lstm_params(key, latent_dim, hidden_dim, num_layers, bidirectional):
    """Mirrors nn.LSTM init: U(-1/sqrt(H), 1/sqrt(H)) for all weights/biases."""
    num_dirs = 2 if bidirectional else 1
    bound = hidden_dim ** -0.5
    params = []
    d_in = latent_dim
    for _layer in range(num_layers):
        for _d in range(num_dirs):
            key, k1, k2, k3, k4 = jax.random.split(key, 5)
            params.append({
                'w_ih': jax.random.uniform(k1, (4 * hidden_dim, d_in),
                                           jnp.float32, -bound, bound),
                'w_hh': jax.random.uniform(k2, (4 * hidden_dim, hidden_dim),
                                           jnp.float32, -bound, bound),
                'b_ih': jax.random.uniform(k3, (4 * hidden_dim,),
                                           jnp.float32, -bound, bound),
                'b_hh': jax.random.uniform(k4, (4 * hidden_dim,),
                                           jnp.float32, -bound, bound),
            })
        d_in = hidden_dim * num_dirs
    return params


def prepare_lstm_weights(params):
    """One-time layout prep, hoisted out of the forward path:
    transpose to (D_in,4H)/(H,4H) and fold the two PyTorch biases."""
    return [{
        'w_ih_t': jnp.transpose(p['w_ih']),
        'w_hh_t': jnp.transpose(p['w_hh']),
        'b': (p['b_ih'] + p['b_hh']).reshape(1, -1),
    } for p in params]


# ----------------------- pure-JAX reference (for checking) ---------------------
def lstm_reference(x, params, hidden_dim, num_layers, bidirectional):
    num_dirs = 2 if bidirectional else 1
    b, t, _ = x.shape
    hp = jax.lax.Precision.HIGHEST
    cur = x.astype(jnp.float32)
    for layer in range(num_layers):
        dir_outs = []
        for d in range(num_dirs):
            p = params[layer * num_dirs + d]
            bias = p['b_ih'] + p['b_hh']
            h = jnp.zeros((b, hidden_dim), jnp.float32)
            c = jnp.zeros((b, hidden_dim), jnp.float32)
            hs = [None] * t
            t_iter = range(t) if d == 0 else range(t - 1, -1, -1)
            for tt in t_iter:
                g = (jnp.dot(cur[:, tt, :], p['w_ih'].T, precision=hp)
                     + jnp.dot(h, p['w_hh'].T, precision=hp) + bias)
                i_g = jax.nn.sigmoid(g[:, 0 * hidden_dim:1 * hidden_dim])
                f_g = jax.nn.sigmoid(g[:, 1 * hidden_dim:2 * hidden_dim])
                g_g = jnp.tanh(g[:, 2 * hidden_dim:3 * hidden_dim])
                o_g = jax.nn.sigmoid(g[:, 3 * hidden_dim:4 * hidden_dim])
                c = f_g * c + i_g * g_g
                h = o_g * jnp.tanh(c)
                hs[tt] = h
            dir_outs.append(jnp.stack(hs, axis=1))       # (B, T, H)
        cur = (jnp.concatenate(dir_outs, axis=-1)
               if num_dirs > 1 else dir_outs[0])
    return cur


# ------------------------------------ main -------------------------------------
if __name__ == "__main__":
    key = jax.random.PRNGKey(0)
    kp, kx = jax.random.split(key)

    params = init_lstm_params(kp, LATENT_DIM, HIDDEN_DIM, NUM_LAYERS, BIDIRECTIONAL)
    prepared = prepare_lstm_weights(params)     # hoisted one-time layout work
    x = jax.random.normal(kx, (BATCH, SEQ, LATENT_DIM), jnp.float32)

    fwd = jax.jit(lambda xx, ww: lstm_forward(
        xx, ww, HIDDEN_DIM, NUM_LAYERS, BIDIRECTIONAL))
    y, (h_n, c_n) = fwd(x, prepared)
    y = jax.block_until_ready(y)

    num_dirs = 2 if BIDIRECTIONAL else 1
    assert y.shape == (BATCH, SEQ, num_dirs * HIDDEN_DIM)
    assert h_n.shape == (NUM_LAYERS * num_dirs, BATCH, HIDDEN_DIM)
    assert c_n.shape == (NUM_LAYERS * num_dirs, BATCH, HIDDEN_DIM)
    assert bool(jnp.all(jnp.isfinite(y)))

    y_ref = lstm_reference(x, params, HIDDEN_DIM, NUM_LAYERS, BIDIRECTIONAL)
    max_diff = float(jnp.max(jnp.abs(y - y_ref)))
    assert max_diff < 2e-2, f"kernel vs reference mismatch: {max_diff}"

    print("KERNEL_OK")
</pallas_src>

<mosaic_0001>
module attributes {stable_mosaic.version = 11 : i64} {
  func.func @_lstm_kernel(%arg0: memref<64x64xf32, #tpu.memory_space<vmem>>, %arg1: memref<32x32xf32, #tpu.memory_space<vmem>>, %arg2: memref<32x32xf32, #tpu.memory_space<vmem>>, %arg3: memref<64x128xf32, #tpu.memory_space<vmem>>, %arg4: memref<32x128xf32, #tpu.memory_space<vmem>>, %arg5: memref<1x128xf32, #tpu.memory_space<vmem>>, %arg6: memref<64x128xf32, #tpu.memory_space<vmem>>, %arg7: memref<32x128xf32, #tpu.memory_space<vmem>>, %arg8: memref<1x128xf32, #tpu.memory_space<vmem>>, %arg9: memref<64x128xf32, #tpu.memory_space<vmem>>, %arg10: memref<32x128xf32, #tpu.memory_space<vmem>>, %arg11: memref<1x128xf32, #tpu.memory_space<vmem>>, %arg12: memref<64x128xf32, #tpu.memory_space<vmem>>, %arg13: memref<32x128xf32, #tpu.memory_space<vmem>>, %arg14: memref<1x128xf32, #tpu.memory_space<vmem>>, %arg15: memref<64x64xf32, #tpu.memory_space<vmem>>, %arg16: memref<32x32xf32, #tpu.memory_space<vmem>>, %arg17: memref<32x32xf32, #tpu.memory_space<vmem>>, %arg18: memref<64x64xf32, #tpu.memory_space<vmem>>) attributes {dimension_semantics = [], scalar_prefetch = 0 : i64, scratch_operands = 1 : i64, tpu.core_type = #tpu.core_type<tc>} {
    %c0 = arith.constant 0 : index
    %c0_0 = arith.constant 0 : index
    %0 = vector.load %arg0[%c0, %c0_0] : memref<64x64xf32, #tpu.memory_space<vmem>>, vector<64x64xf32>
    %c0_1 = arith.constant 0 : index
    %c0_2 = arith.constant 0 : index
    %1 = vector.load %arg3[%c0_1, %c0_2] : memref<64x128xf32, #tpu.memory_space<vmem>>, vector<64x128xf32>
    %c0_3 = arith.constant 0 : index
    %c0_4 = arith.constant 0 : index
    %2 = vector.load %arg4[%c0_3, %c0_4] : memref<32x128xf32, #tpu.memory_space<vmem>>, vector<32x128xf32>
    %c0_5 = arith.constant 0 : index
    %c0_6 = arith.constant 0 : index
    %3 = vector.load %arg5[%c0_5, %c0_6] : memref<1x128xf32, #tpu.memory_space<vmem>>, vector<1x128xf32>
    %cst = arith.constant dense<0.000000e+00> : vector<64x128xf32>
    %4 = tpu.matmul %0, %1, %cst {dimension_numbers = #tpu.dot_dimension_numbers<[1], [0], [0], [1], [0, 0, 1, 1], [], []>} : vector<64x64xf32>, vector<64x128xf32>, vector<64x128xf32> -> vector<64x128xf32>
    %5 = vector.broadcast %3 : vector<1x128xf32> to vector<64x128xf32>
    %6 = arith.addf %4, %5 : vector<64x128xf32>
    %c0_7 = arith.constant 0 : index
    %c0_8 = arith.constant 0 : index
    %7 = vector.load %arg1[%c0_7, %c0_8] : memref<32x32xf32, #tpu.memory_space<vmem>>, vector<8x32xf32>
    %c0_9 = arith.constant 0 : index
    %c0_10 = arith.constant 0 : index
    %8 = vector.load %arg2[%c0_9, %c0_10] : memref<32x32xf32, #tpu.memory_space<vmem>>, vector<8x32xf32>
    %c0_11 = arith.constant 0 : index
    %c0_12 = arith.constant 0 : index
    %9 = vector.load %arg6[%c0_11, %c0_12] : memref<64x128xf32, #tpu.memory_space<vmem>>, vector<64x128xf32>
    %c0_13 = arith.constant 0 : index
    %c0_14 = arith.constant 0 : index
    %10 = vector.load %arg7[%c0_13, %c0_14] : memref<32x128xf32, #tpu.memory_space<vmem>>, vector<32x128xf32>
    %c0_15 = arith.constant 0 : index
    %c0_16 = arith.constant 0 : index
    %11 = vector.load %arg8[%c0_15, %c0_16] : memref<1x128xf32, #tpu.memory_space<vmem>>, vector<1x128xf32>
    %cst_17 = arith.constant dense<0.000000e+00> : vector<64x128xf32>
    %12 = tpu.matmul %0, %9, %cst_17 {dimension_numbers = #tpu.dot_dimension_numbers<[1], [0], [0], [1], [0, 0, 1, 1], [], []>} : vector<64x64xf32>, vector<64x128xf32>, vector<64x128xf32> -> vector<64x128xf32>
    %13 = vector.broadcast %11 : vector<1x128xf32> to vector<64x128xf32>
    %14 = arith.addf %12, %13 : vector<64x128xf32>
    %c8 = arith.constant 8 : index
    %c0_18 = arith.constant 0 : index
    %15 = vector.load %arg1[%c8, %c0_18] : memref<32x32xf32, #tpu.memory_space<vmem>>, vector<8x32xf32>
    %c8_19 = arith.constant 8 : index
    %c0_20 = arith.constant 0 : index
    %16 = vector.load %arg2[%c8_19, %c0_20] : memref<32x32xf32, #tpu.memory_space<vmem>>, vector<8x32xf32>
    %17 = vector.extract_strided_slice %6 {offsets = [0, 0], sizes = [8, 128], strides = [1, 1]} : vector<64x128xf32> to vector<8x128xf32>
    %cst_21 = arith.constant dense<0.000000e+00> : vector<8x128xf32>
    %18 = tpu.matmul %7, %2, %cst_21 {dimension_numbers = #tpu.dot_dimension_numbers<[1], [0], [0], [1], [0, 0, 1, 1], [], []>} : vector<8x32xf32>, vector<32x128xf32>, vector<8x128xf32> -> vector<8x128xf32>
    %19 = arith.addf %17, %18 : vector<8x128xf32>
    %20 = arith.negf %19 : vector<8x128xf32>
    %21 = math.exp %20 : vector<8x128xf32>
    %cst_22 = arith.constant 1.000000e+00 : f32
    %22 = vector.broadcast %cst_22 : f32 to vector<8x128xf32>
    %23 = arith.addf %22, %21 : vector<8x128xf32>
    %24 = arith.divf %22, %23 : vector<8x128xf32>
    %25 = vector.extract_strided_slice %19 {offsets = [0, 64], sizes = [8, 32], strides = [1, 1]} : vector<8x128xf32> to vector<8x32xf32>
    %26 = math.tanh %25 : vector<8x32xf32>
    %27 = vector.extract_strided_slice %24 {offsets = [0, 32], sizes = [8, 32], strides = [1, 1]} : vector<8x128xf32> to vector<8x32xf32>
    %28 = arith.mulf %27, %8 : vector<8x32xf32>
    %29 = vector.extract_strided_slice %24 {offsets = [0, 0], sizes = [8, 32], strides = [1, 1]} : vector<8x128xf32> to vector<8x32xf32>
    %30 = arith.mulf %29, %26 : vector<8x32xf32>
    %31 = arith.addf %28, %30 : vector<8x32xf32>
    %32 = vector.extract_strided_slice %24 {offsets = [0, 96], sizes = [8, 32], strides = [1, 1]} : vector<8x128xf32> to vector<8x32xf32>
    %33 = math.tanh %31 : vector<8x32xf32>
    %34 = arith.mulf %32, %33 : vector<8x32xf32>
    %c0_23 = arith.constant 0 : index
    %c0_24 = arith.constant 0 : index
    %35 = vector.load %arg18[%c0_23, %c0_24] : memref<64x64xf32, #tpu.memory_space<vmem>>, vector<8x32xf32>
    tpu.vector_store %arg18[%c0_23, %c0_24], %34 {strides = array<i32>} : memref<64x64xf32, #tpu.memory_space<vmem>>, vector<8x32xf32>,
    %36 = vector.extract_strided_slice %14 {offsets = [56, 0], sizes = [8, 128], strides = [1, 1]} : vector<64x128xf32> to vector<8x128xf32>
    %cst_25 = arith.constant dense<0.000000e+00> : vector<8x128xf32>
    %37 = tpu.matmul %15, %10, %cst_25 {dimension_numbers = #tpu.dot_dimension_numbers<[1], [0], [0], [1], [0, 0, 1, 1], [], []>} : vector<8x32xf32>, vector<32x128xf32>, vector<8x128xf32> -> vector<8x128xf32>
    %38 = arith.addf %36, %37 : vector<8x128xf32>
    %39 = arith.negf %38 : vector<8x128xf32>
    %40 = math.exp %39 : vector<8x128xf32>
    %cst_26 = arith.constant 1.000000e+00 : f32
    %41 = vector.broadcast %cst_26 : f32 to vector<8x128xf32>
    %42 = arith.addf %41, %40 : vector<8x128xf32>
    %43 = arith.divf %41, %42 : vector<8x128xf32>
    %44 = vector.extract_strided_slice %38 {offsets = [0, 64], sizes = [8, 32], strides = [1, 1]} : vector<8x128xf32> to vector<8x32xf32>
    %45 = math.tanh %44 : vector<8x32xf32>
    %46 = vector.extract_strided_slice %43 {offsets = [0, 32], sizes = [8, 32], strides = [1, 1]} : vector<8x128xf32> to vector<8x32xf32>
    %47 = arith.mulf %46, %16 : vector<8x32xf32>
    %48 = vector.extract_strided_slice %43 {offsets = [0, 0], sizes = [8, 32], strides = [1, 1]} : vector<8x128xf32> to vector<8x32xf32>
    %49 = arith.mulf %48, %45 : vector<8x32xf32>
    %50 = arith.addf %47, %49 : vector<8x32xf32>
    %51 = vector.extract_strided_slice %43 {offsets = [0, 96], sizes = [8, 32], strides = [1, 1]} : vector<8x128xf32> to vector<8x32xf32>
    %52 = math.tanh %50 : vector<8x32xf32>
    %53 = arith.mulf %51, %52 : vector<8x32xf32>
    %c56 = arith.constant 56 : index
    %c32 = arith.constant 32 : index
    %54 = vector.load %arg18[%c56, %c32] : memref<64x64xf32, #tpu.memory_space<vmem>>, vector<8x32xf32>
    tpu.vector_store %arg18[%c56, %c32], %53 {strides = array<i32>} : memref<64x64xf32, #tpu.memory_space<vmem>>, vector<8x32xf32>,
    %55 = vector.extract_strided_slice %6 {offsets = [8, 0], sizes = [8, 128], strides = [1, 1]} : vector<64x128xf32> to vector<8x128xf32>
    %cst_27 = arith.constant dense<0.000000e+00> : vector<8x128xf32>
    %56 = tpu.matmul %34, %2, %cst_27 {dimension_numbers = #tpu.dot_dimension_numbers<[1], [0], [0], [1], [0, 0, 1, 1], [], []>} : vector<8x32xf32>, vector<32x128xf32>, vector<8x128xf32> -> vector<8x128xf32>
    %57 = arith.addf %55, %56 : vector<8x128xf32>
    %58 = arith.negf %57 : vector<8x128xf32>
    %59 = math.exp %58 : vector<8x128xf32>
    %cst_28 = arith.constant 1.000000e+00 : f32
    %60 = vector.broadcast %cst_28 : f32 to vector<8x128xf32>
    %61 = arith.addf %60, %59 : vector<8x128xf32>
    %62 = arith.divf %60, %61 : vector<8x128xf32>
    %63 = vector.extract_strided_slice %57 {offsets = [0, 64], sizes = [8, 32], strides = [1, 1]} : vector<8x128xf32> to vector<8x32xf32>
    %64 = math.tanh %63 : vector<8x32xf32>
    %65 = vector.extract_strided_slice %62 {offsets = [0, 32], sizes = [8, 32], strides = [1, 1]} : vector<8x128xf32> to vector<8x32xf32>
    %66 = arith.mulf %65, %31 : vector<8x32xf32>
    %67 = vector.extract_strided_slice %62 {offsets = [0, 0], sizes = [8, 32], strides = [1, 1]} : vector<8x128xf32> to vector<8x32xf32>
    %68 = arith.mulf %67, %64 : vector<8x32xf32>
    %69 = arith.addf %66, %68 : vector<8x32xf32>
    %70 = vector.extract_strided_slice %62 {offsets = [0, 96], sizes = [8, 32], strides = [1, 1]} : vector<8x128xf32> to vector<8x32xf32>
    %71 = math.tanh %69 : vector<8x32xf32>
    %72 = arith.mulf %70, %71 : vector<8x32xf32>
    %c8_29 = arith.constant 8 : index
    %c0_30 = arith.constant 0 : index
    %73 = vector.load %arg18[%c8_29, %c0_30] : memref<64x64xf32, #tpu.memory_space<vmem>>, vector<8x32xf32>
    tpu.vector_store %arg18[%c8_29, %c0_30], %72 {strides = array<i32>} : memref<64x64xf32, #tpu.memory_space<vmem>>, vector<8x32xf32>,
    %74 = vector.extract_strided_slice %14 {offsets = [48, 0], sizes = [8, 128], strides = [1, 1]} : vector<64x128xf32> to vector<8x128xf32>
    %cst_31 = arith.constant dense<0.000000e+00> : vector<8x128xf32>
    %75 = tpu.matmul %53, %10, %cst_31 {dimension_numbers = #tpu.dot_dimension_numbers<[1], [0], [0], [1], [0, 0, 1, 1], [], []>} : vector<8x32xf32>, vector<32x128xf32>, vector<8x128xf32> -> vector<8x128xf32>
    %76 = arith.addf %74, %75 : vector<8x128xf32>
    %77 = arith.negf %76 : vector<8x128xf32>
    %78 = math.exp %77 : vector<8x128xf32>
    %cst_32 = arith.constant 1.000000e+00 : f32
    %79 = vector.broadcast %cst_32 : f32 to vector<8x128xf32>
    %80 = arith.addf %79, %78 : vector<8x128xf32>
    %81 = arith.divf %79, %80 : vector<8x128xf32>
    %82 = vector.extract_strided_slice %76 {offsets = [0, 64], sizes = [8, 32], strides = [1, 1]} : vector<8x128xf32> to vector<8x32xf32>
    %83 = math.tanh %82 : vector<8x32xf32>
    %84 = vector.extract_strided_slice %81 {offsets = [0, 32], sizes = [8, 32], strides = [1, 1]} : vector<8x128xf32> to vector<8x32xf32>
    %85 = arith.mulf %84, %50 : vector<8x32xf32>
    %86 = vector.extract_strided_slice %81 {offsets = [0, 0], sizes = [8, 32], strides = [1, 1]} : vector<8x128xf32> to vector<8x32xf32>
    %87 = arith.mulf %86, %83 : vector<8x32xf32>
    %88 = arith.addf %85, %87 : vector<8x32xf32>
    %89 = vector.extract_strided_slice %81 {offsets = [0, 96], sizes = [8, 32], strides = [1, 1]} : vector<8x128xf32> to vector<8x32xf32>
    %90 = math.tanh %88 : vector<8x32xf32>
    %91 = arith.mulf %89, %90 : vector<8x32xf32>
    %c48 = arith.constant 48 : index
    %c32_33 = arith.constant 32 : index
    %92 = vector.load %arg18[%c48, %c32_33] : memref<64x64xf32, #tpu.memory_space<vmem>>, vector<8x32xf32>
    tpu.vector_store %arg18[%c48, %c32_33], %91 {strides = array<i32>} : memref<64x64xf32, #tpu.memory_space<vmem>>, vector<8x32xf32>,
    %93 = vector.extract_strided_slice %6 {offsets = [16, 0], sizes = [8, 128], strides = [1, 1]} : vector<64x128xf32> to vector<8x128xf32>
    %cst_34 = arith.constant dense<0.000000e+00> : vector<8x128xf32>
    %94 = tpu.matmul %72, %2, %cst_34 {dimension_numbers = #tpu.dot_dimension_numbers<[1], [0], [0], [1], [0, 0, 1, 1], [], []>} : vector<8x32xf32>, vector<32x128xf32>, vector<8x128xf32> -> vector<8x128xf32>
    %95 = arith.addf %93, %94 : vector<8x128xf32>
    %96 = arith.negf %95 : vector<8x128xf32>
    %97 = math.exp %96 : vector<8x128xf32>
    %cst_35 = arith.constant 1.000000e+00 : f32
    %98 = vector.broadcast %cst_35 : f32 to vector<8x128xf32>
    %99 = arith.addf %98, %97 : vector<8x128xf32>
    %100 = arith.divf %98, %99 : vector<8x128xf32>
    %101 = vector.extract_strided_slice %95 {offsets = [0, 64], sizes = [8, 32], strides = [1, 1]} : vector<8x128xf32> to vector<8x32xf32>
    %102 = math.tanh %101 : vector<8x32xf32>
    %103 = vector.extract_strided_slice %100 {offsets = [0, 32], sizes = [8, 32], strides = [1, 1]} : vector<8x128xf32> to vector<8x32xf32>
    %104 = arith.mulf %103, %69 : vector<8x32xf32>
    %105 = vector.extract_strided_slice %100 {offsets = [0, 0], sizes = [8, 32], strides = [1, 1]} : vector<8x128xf32> to vector<8x32xf32>
    %106 = arith.mulf %105, %102 : vector<8x32xf32>
    %107 = arith.addf %104, %106 : vector<8x32xf32>
    %108 = vector.extract_strided_slice %100 {offsets = [0, 96], sizes = [8, 32], strides = [1, 1]} : vector<8x128xf32> to vector<8x32xf32>
    %109 = math.tanh %107 : vector<8x32xf32>
    %110 = arith.mulf %108, %109 : vector<8x32xf32>
    %c16 = arith.constant 16 : index
    %c0_36 = arith.constant 0 : index
    %111 = vector.load %arg18[%c16, %c0_36] : memref<64x64xf32, #tpu.memory_space<vmem>>, vector<8x32xf32>
    tpu.vector_store %arg18[%c16, %c0_36], %110 {strides = array<i32>} : memref<64x64xf32, #tpu.memory_space<vmem>>, vector<8x32xf32>,
    %112 = vector.extract_strided_slice %14 {offsets = [40, 0], sizes = [8, 128], strides = [1, 1]} : vector<64x128xf32> to vector<8x128xf32>
    %cst_37 = arith.constant dense<0.000000e+00> : vector<8x128xf32>
    %113 = tpu.matmul %91, %10, %cst_37 {dimension_numbers = #tpu.dot_dimension_numbers<[1], [0], [0], [1], [0, 0, 1, 1], [], []>} : vector<8x32xf32>, vector<32x128xf32>, vector<8x128xf32> -> vector<8x128xf32>
    %114 = arith.addf %112, %113 : vector<8x128xf32>
    %115 = arith.negf %114 : vector<8x128xf32>
    %116 = math.exp %115 : vector<8x128xf32>
    %cst_38 = arith.constant 1.000000e+00 : f32
    %117 = vector.broadcast %cst_38 : f32 to vector<8x128xf32>
    %118 = arith.addf %117, %116 : vector<8x128xf32>
    %119 = arith.divf %117, %118 : vector<8x128xf32>
    %120 = vector.extract_strided_slice %114 {offsets = [0, 64], sizes = [8, 32], strides = [1, 1]} : vector<8x128xf32> to vector<8x32xf32>
    %121 = math.tanh %120 : vector<8x32xf32>
    %122 = vector.extract_strided_slice %119 {offsets = [0, 32], sizes = [8, 32], strides = [1, 1]} : vector<8x128xf32> to vector<8x32xf32>
    %123 = arith.mulf %122, %88 : vector<8x32xf32>
    %124 = vector.extract_strided_slice %119 {offsets = [0, 0], sizes = [8, 32], strides = [1, 1]} : vector<8x128xf32> to vector<8x32xf32>
    %125 = arith.mulf %124, %121 : vector<8x32xf32>
    %126 = arith.addf %123, %125 : vector<8x32xf32>
    %127 = vector.extract_strided_slice %119 {offsets = [0, 96], sizes = [8, 32], strides = [1, 1]} : vector<8x128xf32> to vector<8x32xf32>
    %128 = math.tanh %126 : vector<8x32xf32>
    %129 = arith.mulf %127, %128 : vector<8x32xf32>
    %c40 = arith.constant 40 : index
    %c32_39 = arith.constant 32 : index
    %130 = vector.load %arg18[%c40, %c32_39] : memref<64x64xf32, #tpu.memory_space<vmem>>, vector<8x32xf32>
    tpu.vector_store %arg18[%c40, %c32_39], %129 {strides = array<i32>} : memref<64x64xf32, #tpu.memory_space<vmem>>, vector<8x32xf32>,
    %131 = vector.extract_strided_slice %6 {offsets = [24, 0], sizes = [8, 128], strides = [1, 1]} : vector<64x128xf32> to vector<8x128xf32>
    %cst_40 = arith.constant dense<0.000000e+00> : vector<8x128xf32>
    %132 = tpu.matmul %110, %2, %cst_40 {dimension_numbers = #tpu.dot_dimension_numbers<[1], [0], [0], [1], [0, 0, 1, 1], [], []>} : vector<8x32xf32>, vector<32x128xf32>, vector<8x128xf32> -> vector<8x128xf32>
    %133 = arith.addf %131, %132 : vector<8x128xf32>
    %134 = arith.negf %133 : vector<8x128xf32>
    %135 = math.exp %134 : vector<8x128xf32>
    %cst_41 = arith.constant 1.000000e+00 : f32
    %136 = vector.broadcast %cst_41 : f32 to vector<8x128xf32>
    %137 = arith.addf %136, %135 : vector<8x128xf32>
    %138 = arith.divf %136, %137 : vector<8x128xf32>
    %139 = vector.extract_strided_slice %133 {offsets = [0, 64], sizes = [8, 32], strides = [1, 1]} : vector<8x128xf32> to vector<8x32xf32>
    %140 = math.tanh %139 : vector<8x32xf32>
    %141 = vector.extract_strided_slice %138 {offsets = [0, 32], sizes = [8, 32], strides = [1, 1]} : vector<8x128xf32> to vector<8x32xf32>
    %142 = arith.mulf %141, %107 : vector<8x32xf32>
    %143 = vector.extract_strided_slice %138 {offsets = [0, 0], sizes = [8, 32], strides = [1, 1]} : vector<8x128xf32> to vector<8x32xf32>
    %144 = arith.mulf %143, %140 : vector<8x32xf32>
    %145 = arith.addf %142, %144 : vector<8x32xf32>
    %146 = vector.extract_strided_slice %138 {offsets = [0, 96], sizes = [8, 32], strides = [1, 1]} : vector<8x128xf32> to vector<8x32xf32>
    %147 = math.tanh %145 : vector<8x32xf32>
    %148 = arith.mulf %146, %147 : vector<8x32xf32>
    %c24 = arith.constant 24 : index
    %c0_42 = arith.constant 0 : index
    %149 = vector.load %arg18[%c24, %c0_42] : memref<64x64xf32, #tpu.memory_space<vmem>>, vector<8x32xf32>
    tpu.vector_store %arg18[%c24, %c0_42], %148 {strides = array<i32>} : memref<64x64xf32, #tpu.memory_space<vmem>>, vector<8x32xf32>,
    %150 = vector.extract_strided_slice %14 {offsets = [32, 0], sizes = [8, 128], strides = [1, 1]} : vector<64x128xf32> to vector<8x128xf32>
    %cst_43 = arith.constant dense<0.000000e+00> : vector<8x128xf32>
    %151 = tpu.matmul %129, %10, %cst_43 {dimension_numbers = #tpu.dot_dimension_numbers<[1], [0], [0], [1], [0, 0, 1, 1], [], []>} : vector<8x32xf32>, vector<32x128xf32>, vector<8x128xf32> -> vector<8x128xf32>
    %152 = arith.addf %150, %151 : vector<8x128xf32>
    %153 = arith.negf %152 : vector<8x128xf32>
    %154 = math.exp %153 : vector<8x128xf32>
    %cst_44 = arith.constant 1.000000e+00 : f32
    %155 = vector.broadcast %cst_44 : f32 to vector<8x128xf32>
    %156 = arith.addf %155, %154 : vector<8x128xf32>
    %157 = arith.divf %155, %156 : vector<8x128xf32>
    %158 = vector.extract_strided_slice %152 {offsets = [0, 64], sizes = [8, 32], strides = [1, 1]} : vector<8x128xf32> to vector<8x32xf32>
    %159 = math.tanh %158 : vector<8x32xf32>
    %160 = vector.extract_strided_slice %157 {offsets = [0, 32], sizes = [8, 32], strides = [1, 1]} : vector<8x128xf32> to vector<8x32xf32>
    %161 = arith.mulf %160, %126 : vector<8x32xf32>
    %162 = vector.extract_strided_slice %157 {offsets = [0, 0], sizes = [8, 32], strides = [1, 1]} : vector<8x128xf32> to vector<8x32xf32>
    %163 = arith.mulf %162, %159 : vector<8x32xf32>
    %164 = arith.addf %161, %163 : vector<8x32xf32>
    %165 = vector.extract_strided_slice %157 {offsets = [0, 96], sizes = [8, 32], strides = [1, 1]} : vector<8x128xf32> to vector<8x32xf32>
    %166 = math.tanh %164 : vector<8x32xf32>
    %167 = arith.mulf %165, %166 : vector<8x32xf32>
    %c32_45 = arith.constant 32 : index
    %c32_46 = arith.constant 32 : index
    %168 = vector.load %arg18[%c32_45, %c32_46] : memref<64x64xf32, #tpu.memory_space<vmem>>, vector<8x32xf32>
    tpu.vector_store %arg18[%c32_45, %c32_46], %167 {strides = array<i32>} : memref<64x64xf32, #tpu.memory_space<vmem>>, vector<8x32xf32>,
    %169 = vector.extract_strided_slice %6 {offsets = [32, 0], sizes = [8, 128], strides = [1, 1]} : vector<64x128xf32> to vector<8x128xf32>
    %cst_47 = arith.constant dense<0.000000e+00> : vector<8x128xf32>
    %170 = tpu.matmul %148, %2, %cst_47 {dimension_numbers = #tpu.dot_dimension_numbers<[1], [0], [0], [1], [0, 0, 1, 1], [], []>} : vector<8x32xf32>, vector<32x128xf32>, vector<8x128xf32> -> vector<8x128xf32>
    %171 = arith.addf %169, %170 : vector<8x128xf32>
    %172 = arith.negf %171 : vector<8x128xf32>
    %173 = math.exp %172 : vector<8x128xf32>
    %cst_48 = arith.constant 1.000000e+00 : f32
    %174 = vector.broadcast %cst_48 : f32 to vector<8x128xf32>
    %175 = arith.addf %174, %173 : vector<8x128xf32>
    %176 = arith.divf %174, %175 : vector<8x128xf32>
    %177 = vector.extract_strided_slice %171 {offsets = [0, 64], sizes = [8, 32], strides = [1, 1]} : vector<8x128xf32> to vector<8x32xf32>
    %178 = math.tanh %177 : vector<8x32xf32>
    %179 = vector.extract_strided_slice %176 {offsets = [0, 32], sizes = [8, 32], strides = [1, 1]} : vector<8x128xf32> to vector<8x32xf32>
    %180 = arith.mulf %179, %145 : vector<8x32xf32>
    %181 = vector.extract_strided_slice %176 {offsets = [0, 0], sizes = [8, 32], strides = [1, 1]} : vector<8x128xf32> to vector<8x32xf32>
    %182 = arith.mulf %181, %178 : vector<8x32xf32>
    %183 = arith.addf %180, %182 : vector<8x32xf32>
    %184 = vector.extract_strided_slice %176 {offsets = [0, 96], sizes = [8, 32], strides = [1, 1]} : vector<8x128xf32> to vector<8x32xf32>
    %185 = math.tanh %183 : vector<8x32xf32>
    %186 = arith.mulf %184, %185 : vector<8x32xf32>
    %c32_49 = arith.constant 32 : index
    %c0_50 = arith.constant 0 : index
    %187 = vector.load %arg18[%c32_49, %c0_50] : memref<64x64xf32, #tpu.memory_space<vmem>>, vector<8x32xf32>
    tpu.vector_store %arg18[%c32_49, %c0_50], %186 {strides = array<i32>} : memref<64x64xf32, #tpu.memory_space<vmem>>, vector<8x32xf32>,
    %188 = vector.extract_strided_slice %14 {offsets = [24, 0], sizes = [8, 128], strides = [1, 1]} : vector<64x128xf32> to vector<8x128xf32>
    %cst_51 = arith.constant dense<0.000000e+00> : vector<8x128xf32>
    %189 = tpu.matmul %167, %10, %cst_51 {dimension_numbers = #tpu.dot_dimension_numbers<[1], [0], [0], [1], [0, 0, 1, 1], [], []>} : vector<8x32xf32>, vector<32x128xf32>, vector<8x128xf32> -> vector<8x128xf32>
    %190 = arith.addf %188, %189 : vector<8x128xf32>
    %191 = arith.negf %190 : vector<8x128xf32>
    %192 = math.exp %191 : vector<8x128xf32>
    %cst_52 = arith.constant 1.000000e+00 : f32
    %193 = vector.broadcast %cst_52 : f32 to vector<8x128xf32>
    %194 = arith.addf %193, %192 : vector<8x128xf32>
    %195 = arith.divf %193, %194 : vector<8x128xf32>
    %196 = vector.extract_strided_slice %190 {offsets = [0, 64], sizes = [8, 32], strides = [1, 1]} : vector<8x128xf32> to vector<8x32xf32>
    %197 = math.tanh %196 : vector<8x32xf32>
    %198 = vector.extract_strided_slice %195 {offsets = [0, 32], sizes = [8, 32], strides = [1, 1]} : vector<8x128xf32> to vector<8x32xf32>
    %199 = arith.mulf %198, %164 : vector<8x32xf32>
    %200 = vector.extract_strided_slice %195 {offsets = [0, 0], sizes = [8, 32], strides = [1, 1]} : vector<8x128xf32> to vector<8x32xf32>
    %201 = arith.mulf %200, %197 : vector<8x32xf32>
    %202 = arith.addf %199, %201 : vector<8x32xf32>
    %203 = vector.extract_strided_slice %195 {offsets = [0, 96], sizes = [8, 32], strides = [1, 1]} : vector<8x128xf32> to vector<8x32xf32>
    %204 = math.tanh %202 : vector<8x32xf32>
    %205 = arith.mulf %203, %204 : vector<8x32xf32>
    %c24_53 = arith.constant 24 : index
    %c32_54 = arith.constant 32 : index
    %206 = vector.load %arg18[%c24_53, %c32_54] : memref<64x64xf32, #tpu.memory_space<vmem>>, vector<8x32xf32>
    tpu.vector_store %arg18[%c24_53, %c32_54], %205 {strides = array<i32>} : memref<64x64xf32, #tpu.memory_space<vmem>>, vector<8x32xf32>,
    %207 = vector.extract_strided_slice %6 {offsets = [40, 0], sizes = [8, 128], strides = [1, 1]} : vector<64x128xf32> to vector<8x128xf32>
    %cst_55 = arith.constant dense<0.000000e+00> : vector<8x128xf32>
    %208 = tpu.matmul %186, %2, %cst_55 {dimension_numbers = #tpu.dot_dimension_numbers<[1], [0], [0], [1], [0, 0, 1, 1], [], []>} : vector<8x32xf32>, vector<32x128xf32>, vector<8x128xf32> -> vector<8x128xf32>
    %209 = arith.addf %207, %208 : vector<8x128xf32>
    %210 = arith.negf %209 : vector<8x128xf32>
    %211 = math.exp %210 : vector<8x128xf32>
    %cst_56 = arith.constant 1.000000e+00 : f32
    %212 = vector.broadcast %cst_56 : f32 to vector<8x128xf32>
    %213 = arith.addf %212, %211 : vector<8x128xf32>
    %214 = arith.divf %212, %213 : vector<8x128xf32>
    %215 = vector.extract_strided_slice %209 {offsets = [0, 64], sizes = [8, 32], strides = [1, 1]} : vector<8x128xf32> to vector<8x32xf32>
    %216 = math.tanh %215 : vector<8x32xf32>
    %217 = vector.extract_strided_slice %214 {offsets = [0, 32], sizes = [8, 32], strides = [1, 1]} : vector<8x128xf32> to vector<8x32xf32>
    %218 = arith.mulf %217, %183 : vector<8x32xf32>
    %219 = vector.extract_strided_slice %214 {offsets = [0, 0], sizes = [8, 32], strides = [1, 1]} : vector<8x128xf32> to vector<8x32xf32>
    %220 = arith.mulf %219, %216 : vector<8x32xf32>
    %221 = arith.addf %218, %220 : vector<8x32xf32>
    %222 = vector.extract_strided_slice %214 {offsets = [0, 96], sizes = [8, 32], strides = [1, 1]} : vector<8x128xf32> to vector<8x32xf32>
    %223 = math.tanh %221 : vector<8x32xf32>
    %224 = arith.mulf %222, %223 : vector<8x32xf32>
    %c40_57 = arith.constant 40 : index
    %c0_58 = arith.constant 0 : index
    %225 = vector.load %arg18[%c40_57, %c0_58] : memref<64x64xf32, #tpu.memory_space<vmem>>, vector<8x32xf32>
    tpu.vector_store %arg18[%c40_57, %c0_58], %224 {strides = array<i32>} : memref<64x64xf32, #tpu.memory_space<vmem>>, vector<8x32xf32>,
    %226 = vector.extract_strided_slice %14 {offsets = [16, 0], sizes = [8, 128], strides = [1, 1]} : vector<64x128xf32> to vector<8x128xf32>
    %cst_59 = arith.constant dense<0.000000e+00> : vector<8x128xf32>
    %227 = tpu.matmul %205, %10, %cst_59 {dimension_numbers = #tpu.dot_dimension_numbers<[1], [0], [0], [1], [0, 0, 1, 1], [], []>} : vector<8x32xf32>, vector<32x128xf32>, vector<8x128xf32> -> vector<8x128xf32>
    %228 = arith.addf %226, %227 : vector<8x128xf32>
    %229 = arith.negf %228 : vector<8x128xf32>
    %230 = math.exp %229 : vector<8x128xf32>
    %cst_60 = arith.constant 1.000000e+00 : f32
    %231 = vector.broadcast %cst_60 : f32 to vector<8x128xf32>
    %232 = arith.addf %231, %230 : vector<8x128xf32>
    %233 = arith.divf %231, %232 : vector<8x128xf32>
    %234 = vector.extract_strided_slice %228 {offsets = [0, 64], sizes = [8, 32], strides = [1, 1]} : vector<8x128xf32> to vector<8x32xf32>
    %235 = math.tanh %234 : vector<8x32xf32>
    %236 = vector.extract_strided_slice %233 {offsets = [0, 32], sizes = [8, 32], strides = [1, 1]} : vector<8x128xf32> to vector<8x32xf32>
    %237 = arith.mulf %236, %202 : vector<8x32xf32>
    %238 = vector.extract_strided_slice %233 {offsets = [0, 0], sizes = [8, 32], strides = [1, 1]} : vector<8x128xf32> to vector<8x32xf32>
    %239 = arith.mulf %238, %235 : vector<8x32xf32>
    %240 = arith.addf %237, %239 : vector<8x32xf32>
    %241 = vector.extract_strided_slice %233 {offsets = [0, 96], sizes = [8, 32], strides = [1, 1]} : vector<8x128xf32> to vector<8x32xf32>
    %242 = math.tanh %240 : vector<8x32xf32>
    %243 = arith.mulf %241, %242 : vector<8x32xf32>
    %c16_61 = arith.constant 16 : index
    %c32_62 = arith.constant 32 : index
    %244 = vector.load %arg18[%c16_61, %c32_62] : memref<64x64xf32, #tpu.memory_space<vmem>>, vector<8x32xf32>
    tpu.vector_store %arg18[%c16_61, %c32_62], %243 {strides = array<i32>} : memref<64x64xf32, #tpu.memory_space<vmem>>, vector<8x32xf32>,
    %245 = vector.extract_strided_slice %6 {offsets = [48, 0], sizes = [8, 128], strides = [1, 1]} : vector<64x128xf32> to vector<8x128xf32>
    %cst_63 = arith.constant dense<0.000000e+00> : vector<8x128xf32>
    %246 = tpu.matmul %224, %2, %cst_63 {dimension_numbers = #tpu.dot_dimension_numbers<[1], [0], [0], [1], [0, 0, 1, 1], [], []>} : vector<8x32xf32>, vector<32x128xf32>, vector<8x128xf32> -> vector<8x128xf32>
    %247 = arith.addf %245, %246 : vector<8x128xf32>
    %248 = arith.negf %247 : vector<8x128xf32>
    %249 = math.exp %248 : vector<8x128xf32>
    %cst_64 = arith.constant 1.000000e+00 : f32
    %250 = vector.broadcast %cst_64 : f32 to vector<8x128xf32>
    %251 = arith.addf %250, %249 : vector<8x128xf32>
    %252 = arith.divf %250, %251 : vector<8x128xf32>
    %253 = vector.extract_strided_slice %247 {offsets = [0, 64], sizes = [8, 32], strides = [1, 1]} : vector<8x128xf32> to vector<8x32xf32>
    %254 = math.tanh %253 : vector<8x32xf32>
    %255 = vector.extract_strided_slice %252 {offsets = [0, 32], sizes = [8, 32], strides = [1, 1]} : vector<8x128xf32> to vector<8x32xf32>
    %256 = arith.mulf %255, %221 : vector<8x32xf32>
    %257 = vector.extract_strided_slice %252 {offsets = [0, 0], sizes = [8, 32], strides = [1, 1]} : vector<8x128xf32> to vector<8x32xf32>
    %258 = arith.mulf %257, %254 : vector<8x32xf32>
    %259 = arith.addf %256, %258 : vector<8x32xf32>
    %260 = vector.extract_strided_slice %252 {offsets = [0, 96], sizes = [8, 32], strides = [1, 1]} : vector<8x128xf32> to vector<8x32xf32>
    %261 = math.tanh %259 : vector<8x32xf32>
    %262 = arith.mulf %260, %261 : vector<8x32xf32>
    %c48_65 = arith.constant 48 : index
    %c0_66 = arith.constant 0 : index
    %263 = vector.load %arg18[%c48_65, %c0_66] : memref<64x64xf32, #tpu.memory_space<vmem>>, vector<8x32xf32>
    tpu.vector_store %arg18[%c48_65, %c0_66], %262 {strides = array<i32>} : memref<64x64xf32, #tpu.memory_space<vmem>>, vector<8x32xf32>,
    %264 = vector.extract_strided_slice %14 {offsets = [8, 0], sizes = [8, 128], strides = [1, 1]} : vector<64x128xf32> to vector<8x128xf32>
    %cst_67 = arith.constant dense<0.000000e+00> : vector<8x128xf32>
    %265 = tpu.matmul %243, %10, %cst_67 {dimension_numbers = #tpu.dot_dimension_numbers<[1], [0], [0], [1], [0, 0, 1, 1], [], []>} : vector<8x32xf32>, vector<32x128xf32>, vector<8x128xf32> -> vector<8x128xf32>
    %266 = arith.addf %264, %265 : vector<8x128xf32>
    %267 = arith.negf %266 : vector<8x128xf32>
    %268 = math.exp %267 : vector<8x128xf32>
    %cst_68 = arith.constant 1.000000e+00 : f32
    %269 = vector.broadcast %cst_68 : f32 to vector<8x128xf32>
    %270 = arith.addf %269, %268 : vector<8x128xf32>
    %271 = arith.divf %269, %270 : vector<8x128xf32>
    %272 = vector.extract_strided_slice %266 {offsets = [0, 64], sizes = [8, 32], strides = [1, 1]} : vector<8x128xf32> to vector<8x32xf32>
    %273 = math.tanh %272 : vector<8x32xf32>
    %274 = vector.extract_strided_slice %271 {offsets = [0, 32], sizes = [8, 32], strides = [1, 1]} : vector<8x128xf32> to vector<8x32xf32>
    %275 = arith.mulf %274, %240 : vector<8x32xf32>
    %276 = vector.extract_strided_slice %271 {offsets = [0, 0], sizes = [8, 32], strides = [1, 1]} : vector<8x128xf32> to vector<8x32xf32>
    %277 = arith.mulf %276, %273 : vector<8x32xf32>
    %278 = arith.addf %275, %277 : vector<8x32xf32>
    %279 = vector.extract_strided_slice %271 {offsets = [0, 96], sizes = [8, 32], strides = [1, 1]} : vector<8x128xf32> to vector<8x32xf32>
    %280 = math.tanh %278 : vector<8x32xf32>
    %281 = arith.mulf %279, %280 : vector<8x32xf32>
    %c8_69 = arith.constant 8 : index
    %c32_70 = arith.constant 32 : index
    %282 = vector.load %arg18[%c8_69, %c32_70] : memref<64x64xf32, #tpu.memory_space<vmem>>, vector<8x32xf32>
    tpu.vector_store %arg18[%c8_69, %c32_70], %281 {strides = array<i32>} : memref<64x64xf32, #tpu.memory_space<vmem>>, vector<8x32xf32>,
    %283 = vector.extract_strided_slice %6 {offsets = [56, 0], sizes = [8, 128], strides = [1, 1]} : vector<64x128xf32> to vector<8x128xf32>
    %cst_71 = arith.constant dense<0.000000e+00> : vector<8x128xf32>
    %284 = tpu.matmul %262, %2, %cst_71 {dimension_numbers = #tpu.dot_dimension_numbers<[1], [0], [0], [1], [0, 0, 1, 1], [], []>} : vector<8x32xf32>, vector<32x128xf32>, vector<8x128xf32> -> vector<8x128xf32>
    %285 = arith.addf %283, %284 : vector<8x128xf32>
    %286 = arith.negf %285 : vector<8x128xf32>
    %287 = math.exp %286 : vector<8x128xf32>
    %cst_72 = arith.constant 1.000000e+00 : f32
    %288 = vector.broadcast %cst_72 : f32 to vector<8x128xf32>
    %289 = arith.addf %288, %287 : vector<8x128xf32>
    %290 = arith.divf %288, %289 : vector<8x128xf32>
    %291 = vector.extract_strided_slice %285 {offsets = [0, 64], sizes = [8, 32], strides = [1, 1]} : vector<8x128xf32> to vector<8x32xf32>
    %292 = math.tanh %291 : vector<8x32xf32>
    %293 = vector.extract_strided_slice %290 {offsets = [0, 32], sizes = [8, 32], strides = [1, 1]} : vector<8x128xf32> to vector<8x32xf32>
    %294 = arith.mulf %293, %259 : vector<8x32xf32>
    %295 = vector.extract_strided_slice %290 {offsets = [0, 0], sizes = [8, 32], strides = [1, 1]} : vector<8x128xf32> to vector<8x32xf32>
    %296 = arith.mulf %295, %292 : vector<8x32xf32>
    %297 = arith.addf %294, %296 : vector<8x32xf32>
    %298 = vector.extract_strided_slice %290 {offsets = [0, 96], sizes = [8, 32], strides = [1, 1]} : vector<8x128xf32> to vector<8x32xf32>
    %299 = math.tanh %297 : vector<8x32xf32>
    %300 = arith.mulf %298, %299 : vector<8x32xf32>
    %c56_73 = arith.constant 56 : index
    %c0_74 = arith.constant 0 : index
    %301 = vector.load %arg18[%c56_73, %c0_74] : memref<64x64xf32, #tpu.memory_space<vmem>>, vector<8x32xf32>
    tpu.vector_store %arg18[%c56_73, %c0_74], %300 {strides = array<i32>} : memref<64x64xf32, #tpu.memory_space<vmem>>, vector<8x32xf32>,
    %302 = vector.extract_strided_slice %14 {offsets = [0, 0], sizes = [8, 128], strides = [1, 1]} : vector<64x128xf32> to vector<8x128xf32>
    %cst_75 = arith.constant dense<0.000000e+00> : vector<8x128xf32>
    %303 = tpu.matmul %281, %10, %cst_75 {dimension_numbers = #tpu.dot_dimension_numbers<[1], [0], [0], [1], [0, 0, 1, 1], [], []>} : vector<8x32xf32>, vector<32x128xf32>, vector<8x128xf32> -> vector<8x128xf32>
    %304 = arith.addf %302, %303 : vector<8x128xf32>
    %305 = arith.negf %304 : vector<8x128xf32>
    %306 = math.exp %305 : vector<8x128xf32>
    %cst_76 = arith.constant 1.000000e+00 : f32
    %307 = vector.broadcast %cst_76 : f32 to vector<8x128xf32>
    %308 = arith.addf %307, %306 : vector<8x128xf32>
    %309 = arith.divf %307, %308 : vector<8x128xf32>
    %310 = vector.extract_strided_slice %304 {offsets = [0, 64], sizes = [8, 32], strides = [1, 1]} : vector<8x128xf32> to vector<8x32xf32>
    %311 = math.tanh %310 : vector<8x32xf32>
    %312 = vector.extract_strided_slice %309 {offsets = [0, 32], sizes = [8, 32], strides = [1, 1]} : vector<8x128xf32> to vector<8x32xf32>
    %313 = arith.mulf %312, %278 : vector<8x32xf32>
    %314 = vector.extract_strided_slice %309 {offsets = [0, 0], sizes = [8, 32], strides = [1, 1]} : vector<8x128xf32> to vector<8x32xf32>
    %315 = arith.mulf %314, %311 : vector<8x32xf32>
    %316 = arith.addf %313, %315 : vector<8x32xf32>
    %317 = vector.extract_strided_slice %309 {offsets = [0, 96], sizes = [8, 32], strides = [1, 1]} : vector<8x128xf32> to vector<8x32xf32>
    %318 = math.tanh %316 : vector<8x32xf32>
    %319 = arith.mulf %317, %318 : vector<8x32xf32>
    %c0_77 = arith.constant 0 : index
    %c32_78 = arith.constant 32 : index
    %320 = vector.load %arg18[%c0_77, %c32_78] : memref<64x64xf32, #tpu.memory_space<vmem>>, vector<8x32xf32>
    tpu.vector_store %arg18[%c0_77, %c32_78], %319 {strides = array<i32>} : memref<64x64xf32, #tpu.memory_space<vmem>>, vector<8x32xf32>,
    %c0_79 = arith.constant 0 : index
    %c0_80 = arith.constant 0 : index
    %321 = vector.load %arg16[%c0_79, %c0_80] : memref<32x32xf32, #tpu.memory_space<vmem>>, vector<8x32xf32>
    tpu.vector_store %arg16[%c0_79, %c0_80], %300 {strides = array<i32>} : memref<32x32xf32, #tpu.memory_space<vmem>>, vector<8x32xf32>,
    %c0_81 = arith.constant 0 : index
    %c0_82 = arith.constant 0 : index
    %322 = vector.load %arg17[%c0_81, %c0_82] : memref<32x32xf32, #tpu.memory_space<vmem>>, vector<8x32xf32>
    tpu.vector_store %arg17[%c0_81, %c0_82], %297 {strides = array<i32>} : memref<32x32xf32, #tpu.memory_space<vmem>>, vector<8x32xf32>,
    %c8_83 = arith.constant 8 : index
    %c0_84 = arith.constant 0 : index
    %323 = vector.load %arg16[%c8_83, %c0_84] : memref<32x32xf32, #tpu.memory_space<vmem>>, vector<8x32xf32>
    tpu.vector_store %arg16[%c8_83, %c0_84], %319 {strides = array<i32>} : memref<32x32xf32, #tpu.memory_space<vmem>>, vector<8x32xf32>,
    %c8_85 = arith.constant 8 : index
    %c0_86 = arith.constant 0 : index
    %324 = vector.load %arg17[%c8_85, %c0_86] : memref<32x32xf32, #tpu.memory_space<vmem>>, vector<8x32xf32>
    tpu.vector_store %arg17[%c8_85, %c0_86], %316 {strides = array<i32>} : memref<32x32xf32, #tpu.memory_space<vmem>>, vector<8x32xf32>,
    %c0_87 = arith.constant 0 : index
    %c0_88 = arith.constant 0 : index
    %325 = vector.load %arg18[%c0_87, %c0_88] : memref<64x64xf32, #tpu.memory_space<vmem>>, vector<64x64xf32>
    %c0_89 = arith.constant 0 : index
    %c0_90 = arith.constant 0 : index
    %326 = vector.load %arg9[%c0_89, %c0_90] : memref<64x128xf32, #tpu.memory_space<vmem>>, vector<64x128xf32>
    %c0_91 = arith.constant 0 : index
    %c0_92 = arith.constant 0 : index
    %327 = vector.load %arg10[%c0_91, %c0_92] : memref<32x128xf32, #tpu.memory_space<vmem>>, vector<32x128xf32>
    %c0_93 = arith.constant 0 : index
    %c0_94 = arith.constant 0 : index
    %328 = vector.load %arg11[%c0_93, %c0_94] : memref<1x128xf32, #tpu.memory_space<vmem>>, vector<1x128xf32>
    %cst_95 = arith.constant dense<0.000000e+00> : vector<64x128xf32>
    %329 = tpu.matmul %325, %326, %cst_95 {dimension_numbers = #tpu.dot_dimension_numbers<[1], [0], [0], [1], [0, 0, 1, 1], [], []>} : vector<64x64xf32>, vector<64x128xf32>, vector<64x128xf32> -> vector<64x128xf32>
    %330 = vector.broadcast %328 : vector<1x128xf32> to vector<64x128xf32>
    %331 = arith.addf %329, %330 : vector<64x128xf32>
    %c16_96 = arith.constant 16 : index
    %c0_97 = arith.constant 0 : index
    %332 = vector.load %arg1[%c16_96, %c0_97] : memref<32x32xf32, #tpu.memory_space<vmem>>, vector<8x32xf32>
    %c16_98 = arith.constant 16 : index
    %c0_99 = arith.constant 0 : index
    %333 = vector.load %arg2[%c16_98, %c0_99] : memref<32x32xf32, #tpu.memory_space<vmem>>, vector<8x32xf32>
    %c0_100 = arith.constant 0 : index
    %c0_101 = arith.constant 0 : index
    %334 = vector.load %arg12[%c0_100, %c0_101] : memref<64x128xf32, #tpu.memory_space<vmem>>, vector<64x128xf32>
    %c0_102 = arith.constant 0 : index
    %c0_103 = arith.constant 0 : index
    %335 = vector.load %arg13[%c0_102, %c0_103] : memref<32x128xf32, #tpu.memory_space<vmem>>, vector<32x128xf32>
    %c0_104 = arith.constant 0 : index
    %c0_105 = arith.constant 0 : index
    %336 = vector.load %arg14[%c0_104, %c0_105] : memref<1x128xf32, #tpu.memory_space<vmem>>, vector<1x128xf32>
    %cst_106 = arith.constant dense<0.000000e+00> : vector<64x128xf32>
    %337 = tpu.matmul %325, %334, %cst_106 {dimension_numbers = #tpu.dot_dimension_numbers<[1], [0], [0], [1], [0, 0, 1, 1], [], []>} : vector<64x64xf32>, vector<64x128xf32>, vector<64x128xf32> -> vector<64x128xf32>
    %338 = vector.broadcast %336 : vector<1x128xf32> to vector<64x128xf32>
    %339 = arith.addf %337, %338 : vector<64x128xf32>
    %c24_107 = arith.constant 24 : index
    %c0_108 = arith.constant 0 : index
    %340 = vector.load %arg1[%c24_107, %c0_108] : memref<32x32xf32, #tpu.memory_space<vmem>>, vector<8x32xf32>
    %c24_109 = arith.constant 24 : index
    %c0_110 = arith.constant 0 : index
    %341 = vector.load %arg2[%c24_109, %c0_110] : memref<32x32xf32, #tpu.memory_space<vmem>>, vector<8x32xf32>
    %342 = vector.extract_strided_slice %331 {offsets = [0, 0], sizes = [8, 128], strides = [1, 1]} : vector<64x128xf32> to vector<8x128xf32>
    %cst_111 = arith.constant dense<0.000000e+00> : vector<8x128xf32>
    %343 = tpu.matmul %332, %327, %cst_111 {dimension_numbers = #tpu.dot_dimension_numbers<[1], [0], [0], [1], [0, 0, 1, 1], [], []>} : vector<8x32xf32>, vector<32x128xf32>, vector<8x128xf32> -> vector<8x128xf32>
    %344 = arith.addf %342, %343 : vector<8x128xf32>
    %345 = arith.negf %344 : vector<8x128xf32>
    %346 = math.exp %345 : vector<8x128xf32>
    %cst_112 = arith.constant 1.000000e+00 : f32
    %347 = vector.broadcast %cst_112 : f32 to vector<8x128xf32>
    %348 = arith.addf %347, %346 : vector<8x128xf32>
    %349 = arith.divf %347, %348 : vector<8x128xf32>
    %350 = vector.extract_strided_slice %344 {offsets = [0, 64], sizes = [8, 32], strides = [1, 1]} : vector<8x128xf32> to vector<8x32xf32>
    %351 = math.tanh %350 : vector<8x32xf32>
    %352 = vector.extract_strided_slice %349 {offsets = [0, 32], sizes = [8, 32], strides = [1, 1]} : vector<8x128xf32> to vector<8x32xf32>
    %353 = arith.mulf %352, %333 : vector<8x32xf32>
    %354 = vector.extract_strided_slice %349 {offsets = [0, 0], sizes = [8, 32], strides = [1, 1]} : vector<8x128xf32> to vector<8x32xf32>
    %355 = arith.mulf %354, %351 : vector<8x32xf32>
    %356 = arith.addf %353, %355 : vector<8x32xf32>
    %357 = vector.extract_strided_slice %349 {offsets = [0, 96], sizes = [8, 32], strides = [1, 1]} : vector<8x128xf32> to vector<8x32xf32>
    %358 = math.tanh %356 : vector<8x32xf32>
    %359 = arith.mulf %357, %358 : vector<8x32xf32>
    %c0_113 = arith.constant 0 : index
    %c0_114 = arith.constant 0 : index
    %360 = vector.load %arg15[%c0_113, %c0_114] : memref<64x64xf32, #tpu.memory_space<vmem>>, vector<8x32xf32>
    tpu.vector_store %arg15[%c0_113, %c0_114], %359 {strides = array<i32>} : memref<64x64xf32, #tpu.memory_space<vmem>>, vector<8x32xf32>,
    %361 = vector.extract_strided_slice %339 {offsets = [56, 0], sizes = [8, 128], strides = [1, 1]} : vector<64x128xf32> to vector<8x128xf32>
    %cst_115 = arith.constant dense<0.000000e+00> : vector<8x128xf32>
    %362 = tpu.matmul %340, %335, %cst_115 {dimension_numbers = #tpu.dot_dimension_numbers<[1], [0], [0], [1], [0, 0, 1, 1], [], []>} : vector<8x32xf32>, vector<32x128xf32>, vector<8x128xf32> -> vector<8x128xf32>
    %363 = arith.addf %361, %362 : vector<8x128xf32>
    %364 = arith.negf %363 : vector<8x128xf32>
    %365 = math.exp %364 : vector<8x128xf32>
    %cst_116 = arith.constant 1.000000e+00 : f32
    %366 = vector.broadcast %cst_116 : f32 to vector<8x128xf32>
    %367 = arith.addf %366, %365 : vector<8x128xf32>
    %368 = arith.divf %366, %367 : vector<8x128xf32>
    %369 = vector.extract_strided_slice %363 {offsets = [0, 64], sizes = [8, 32], strides = [1, 1]} : vector<8x128xf32> to vector<8x32xf32>
    %370 = math.tanh %369 : vector<8x32xf32>
    %371 = vector.extract_strided_slice %368 {offsets = [0, 32], sizes = [8, 32], strides = [1, 1]} : vector<8x128xf32> to vector<8x32xf32>
    %372 = arith.mulf %371, %341 : vector<8x32xf32>
    %373 = vector.extract_strided_slice %368 {offsets = [0, 0], sizes = [8, 32], strides = [1, 1]} : vector<8x128xf32> to vector<8x32xf32>
    %374 = arith.mulf %373, %370 : vector<8x32xf32>
    %375 = arith.addf %372, %374 : vector<8x32xf32>
    %376 = vector.extract_strided_slice %368 {offsets = [0, 96], sizes = [8, 32], strides = [1, 1]} : vector<8x128xf32> to vector<8x32xf32>
    %377 = math.tanh %375 : vector<8x32xf32>
    %378 = arith.mulf %376, %377 : vector<8x32xf32>
    %c56_117 = arith.constant 56 : index
    %c32_118 = arith.constant 32 : index
    %379 = vector.load %arg15[%c56_117, %c32_118] : memref<64x64xf32, #tpu.memory_space<vmem>>, vector<8x32xf32>
    tpu.vector_store %arg15[%c56_117, %c32_118], %378 {strides = array<i32>} : memref<64x64xf32, #tpu.memory_space<vmem>>, vector<8x32xf32>,
    %380 = vector.extract_strided_slice %331 {offsets = [8, 0], sizes = [8, 128], strides = [1, 1]} : vector<64x128xf32> to vector<8x128xf32>
    %cst_119 = arith.constant dense<0.000000e+00> : vector<8x128xf32>
    %381 = tpu.matmul %359, %327, %cst_119 {dimension_numbers = #tpu.dot_dimension_numbers<[1], [0], [0], [1], [0, 0, 1, 1], [], []>} : vector<8x32xf32>, vector<32x128xf32>, vector<8x128xf32> -> vector<8x128xf32>
    %382 = arith.addf %380, %381 : vector<8x128xf32>
    %383 = arith.negf %382 : vector<8x128xf32>
    %384 = math.exp %383 : vector<8x128xf32>
    %cst_120 = arith.constant 1.000000e+00 : f32
    %385 = vector.broadcast %cst_120 : f32 to vector<8x128xf32>
    %386 = arith.addf %385, %384 : vector<8x128xf32>
    %387 = arith.divf %385, %386 : vector<8x128xf32>
    %388 = vector.extract_strided_slice %382 {offsets = [0, 64], sizes = [8, 32], strides = [1, 1]} : vector<8x128xf32> to vector<8x32xf32>
    %389 = math.tanh %388 : vector<8x32xf32>
    %390 = vector.extract_strided_slice %387 {offsets = [0, 32], sizes = [8, 32], strides = [1, 1]} : vector<8x128xf32> to vector<8x32xf32>
    %391 = arith.mulf %390, %356 : vector<8x32xf32>
    %392 = vector.extract_strided_slice %387 {offsets = [0, 0], sizes = [8, 32], strides = [1, 1]} : vector<8x128xf32> to vector<8x32xf32>
    %393 = arith.mulf %392, %389 : vector<8x32xf32>
    %394 = arith.addf %391, %393 : vector<8x32xf32>
    %395 = vector.extract_strided_slice %387 {offsets = [0, 96], sizes = [8, 32], strides = [1, 1]} : vector<8x128xf32> to vector<8x32xf32>
    %396 = math.tanh %394 : vector<8x32xf32>
    %397 = arith.mulf %395, %396 : vector<8x32xf32>
    %c8_121 = arith.constant 8 : index
    %c0_122 = arith.constant 0 : index
    %398 = vector.load %arg15[%c8_121, %c0_122] : memref<64x64xf32, #tpu.memory_space<vmem>>, vector<8x32xf32>
    tpu.vector_store %arg15[%c8_121, %c0_122], %397 {strides = array<i32>} : memref<64x64xf32, #tpu.memory_space<vmem>>, vector<8x32xf32>,
    %399 = vector.extract_strided_slice %339 {offsets = [48, 0], sizes = [8, 128], strides = [1, 1]} : vector<64x128xf32> to vector<8x128xf32>
    %cst_123 = arith.constant dense<0.000000e+00> : vector<8x128xf32>
    %400 = tpu.matmul %378, %335, %cst_123 {dimension_numbers = #tpu.dot_dimension_numbers<[1], [0], [0], [1], [0, 0, 1, 1], [], []>} : vector<8x32xf32>, vector<32x128xf32>, vector<8x128xf32> -> vector<8x128xf32>
    %401 = arith.addf %399, %400 : vector<8x128xf32>
    %402 = arith.negf %401 : vector<8x128xf32>
    %403 = math.exp %402 : vector<8x128xf32>
    %cst_124 = arith.constant 1.000000e+00 : f32
    %404 = vector.broadcast %cst_124 : f32 to vector<8x128xf32>
    %405 = arith.addf %404, %403 : vector<8x128xf32>
    %406 = arith.divf %404, %405 : vector<8x128xf32>
    %407 = vector.extract_strided_slice %401 {offsets = [0, 64], sizes = [8, 32], strides = [1, 1]} : vector<8x128xf32> to vector<8x32xf32>
    %408 = math.tanh %407 : vector<8x32xf32>
    %409 = vector.extract_strided_slice %406 {offsets = [0, 32], sizes = [8, 32], strides = [1, 1]} : vector<8x128xf32> to vector<8x32xf32>
    %410 = arith.mulf %409, %375 : vector<8x32xf32>
    %411 = vector.extract_strided_slice %406 {offsets = [0, 0], sizes = [8, 32], strides = [1, 1]} : vector<8x128xf32> to vector<8x32xf32>
    %412 = arith.mulf %411, %408 : vector<8x32xf32>
    %413 = arith.addf %410, %412 : vector<8x32xf32>
    %414 = vector.extract_strided_slice %406 {offsets = [0, 96], sizes = [8, 32], strides = [1, 1]} : vector<8x128xf32> to vector<8x32xf32>
    %415 = math.tanh %413 : vector<8x32xf32>
    %416 = arith.mulf %414, %415 : vector<8x32xf32>
    %c48_125 = arith.constant 48 : index
    %c32_126 = arith.constant 32 : index
    %417 = vector.load %arg15[%c48_125, %c32_126] : memref<64x64xf32, #tpu.memory_space<vmem>>, vector<8x32xf32>
    tpu.vector_store %arg15[%c48_125, %c32_126], %416 {strides = array<i32>} : memref<64x64xf32, #tpu.memory_space<vmem>>, vector<8x32xf32>,
    %418 = vector.extract_strided_slice %331 {offsets = [16, 0], sizes = [8, 128], strides = [1, 1]} : vector<64x128xf32> to vector<8x128xf32>
    %cst_127 = arith.constant dense<0.000000e+00> : vector<8x128xf32>
    %419 = tpu.matmul %397, %327, %cst_127 {dimension_numbers = #tpu.dot_dimension_numbers<[1], [0], [0], [1], [0, 0, 1, 1], [], []>} : vector<8x32xf32>, vector<32x128xf32>, vector<8x128xf32> -> vector<8x128xf32>
    %420 = arith.addf %418, %419 : vector<8x128xf32>
    %421 = arith.negf %420 : vector<8x128xf32>
    %422 = math.exp %421 : vector<8x128xf32>
    %cst_128 = arith.constant 1.000000e+00 : f32
    %423 = vector.broadcast %cst_128 : f32 to vector<8x128xf32>
    %424 = arith.addf %423, %422 : vector<8x128xf32>
    %425 = arith.divf %423, %424 : vector<8x128xf32>
    %426 = vector.extract_strided_slice %420 {offsets = [0, 64], sizes = [8, 32], strides = [1, 1]} : vector<8x128xf32> to vector<8x32xf32>
    %427 = math.tanh %426 : vector<8x32xf32>
    %428 = vector.extract_strided_slice %425 {offsets = [0, 32], sizes = [8, 32], strides = [1, 1]} : vector<8x128xf32> to vector<8x32xf32>
    %429 = arith.mulf %428, %394 : vector<8x32xf32>
    %430 = vector.extract_strided_slice %425 {offsets = [0, 0], sizes = [8, 32], strides = [1, 1]} : vector<8x128xf32> to vector<8x32xf32>
    %431 = arith.mulf %430, %427 : vector<8x32xf32>
    %432 = arith.addf %429, %431 : vector<8x32xf32>
    %433 = vector.extract_strided_slice %425 {offsets = [0, 96], sizes = [8, 32], strides = [1, 1]} : vector<8x128xf32> to vector<8x32xf32>
    %434 = math.tanh %432 : vector<8x32xf32>
    %435 = arith.mulf %433, %434 : vector<8x32xf32>
    %c16_129 = arith.constant 16 : index
    %c0_130 = arith.constant 0 : index
    %436 = vector.load %arg15[%c16_129, %c0_130] : memref<64x64xf32, #tpu.memory_space<vmem>>, vector<8x32xf32>
    tpu.vector_store %arg15[%c16_129, %c0_130], %435 {strides = array<i32>} : memref<64x64xf32, #tpu.memory_space<vmem>>, vector<8x32xf32>,
    %437 = vector.extract_strided_slice %339 {offsets = [40, 0], sizes = [8, 128], strides = [1, 1]} : vector<64x128xf32> to vector<8x128xf32>
    %cst_131 = arith.constant dense<0.000000e+00> : vector<8x128xf32>
    %438 = tpu.matmul %416, %335, %cst_131 {dimension_numbers = #tpu.dot_dimension_numbers<[1], [0], [0], [1], [0, 0, 1, 1], [], []>} : vector<8x32xf32>, vector<32x128xf32>, vector<8x128xf32> -> vector<8x128xf32>
    %439 = arith.addf %437, %438 : vector<8x128xf32>
    %440 = arith.negf %439 : vector<8x128xf32>
    %441 = math.exp %440 : vector<8x128xf32>
    %cst_132 = arith.constant 1.000000e+00 : f32
    %442 = vector.broadcast %cst_132 : f32 to vector<8x128xf32>
    %443 = arith.addf %442, %441 : vector<8x128xf32>
    %444 = arith.divf %442, %443 : vector<8x128xf32>
    %445 = vector.extract_strided_slice %439 {offsets = [0, 64], sizes = [8, 32], strides = [1, 1]} : vector<8x128xf32> to vector<8x32xf32>
    %446 = math.tanh %445 : vector<8x32xf32>
    %447 = vector.extract_strided_slice %444 {offsets = [0, 32], sizes = [8, 32], strides = [1, 1]} : vector<8x128xf32> to vector<8x32xf32>
    %448 = arith.mulf %447, %413 : vector<8x32xf32>
    %449 = vector.extract_strided_slice %444 {offsets = [0, 0], sizes = [8, 32], strides = [1, 1]} : vector<8x128xf32> to vector<8x32xf32>
    %450 = arith.mulf %449, %446 : vector<8x32xf32>
    %451 = arith.addf %448, %450 : vector<8x32xf32>
    %452 = vector.extract_strided_slice %444 {offsets = [0, 96], sizes = [8, 32], strides = [1, 1]} : vector<8x128xf32> to vector<8x32xf32>
    %453 = math.tanh %451 : vector<8x32xf32>
    %454 = arith.mulf %452, %453 : vector<8x32xf32>
    %c40_133 = arith.constant 40 : index
    %c32_134 = arith.constant 32 : index
    %455 = vector.load %arg15[%c40_133, %c32_134] : memref<64x64xf32, #tpu.memory_space<vmem>>, vector<8x32xf32>
    tpu.vector_store %arg15[%c40_133, %c32_134], %454 {strides = array<i32>} : memref<64x64xf32, #tpu.memory_space<vmem>>, vector<8x32xf32>,
    %456 = vector.extract_strided_slice %331 {offsets = [24, 0], sizes = [8, 128], strides = [1, 1]} : vector<64x128xf32> to vector<8x128xf32>
    %cst_135 = arith.constant dense<0.000000e+00> : vector<8x128xf32>
    %457 = tpu.matmul %435, %327, %cst_135 {dimension_numbers = #tpu.dot_dimension_numbers<[1], [0], [0], [1], [0, 0, 1, 1], [], []>} : vector<8x32xf32>, vector<32x128xf32>, vector<8x128xf32> -> vector<8x128xf32>
    %458 = arith.addf %456, %457 : vector<8x128xf32>
    %459 = arith.negf %458 : vector<8x128xf32>
    %460 = math.exp %459 : vector<8x128xf32>
    %cst_136 = arith.constant 1.000000e+00 : f32
    %461 = vector.broadcast %cst_136 : f32 to vector<8x128xf32>
    %462 = arith.addf %461, %460 : vector<8x128xf32>
    %463 = arith.divf %461, %462 : vector<8x128xf32>
    %464 = vector.extract_strided_slice %458 {offsets = [0, 64], sizes = [8, 32], strides = [1, 1]} : vector<8x128xf32> to vector<8x32xf32>
    %465 = math.tanh %464 : vector<8x32xf32>
    %466 = vector.extract_strided_slice %463 {offsets = [0, 32], sizes = [8, 32], strides = [1, 1]} : vector<8x128xf32> to vector<8x32xf32>
    %467 = arith.mulf %466, %432 : vector<8x32xf32>
    %468 = vector.extract_strided_slice %463 {offsets = [0, 0], sizes = [8, 32], strides = [1, 1]} : vector<8x128xf32> to vector<8x32xf32>
    %469 = arith.mulf %468, %465 : vector<8x32xf32>
    %470 = arith.addf %467, %469 : vector<8x32xf32>
    %471 = vector.extract_strided_slice %463 {offsets = [0, 96], sizes = [8, 32], strides = [1, 1]} : vector<8x128xf32> to vector<8x32xf32>
    %472 = math.tanh %470 : vector<8x32xf32>
    %473 = arith.mulf %471, %472 : vector<8x32xf32>
    %c24_137 = arith.constant 24 : index
    %c0_138 = arith.constant 0 : index
    %474 = vector.load %arg15[%c24_137, %c0_138] : memref<64x64xf32, #tpu.memory_space<vmem>>, vector<8x32xf32>
    tpu.vector_store %arg15[%c24_137, %c0_138], %473 {strides = array<i32>} : memref<64x64xf32, #tpu.memory_space<vmem>>, vector<8x32xf32>,
    %475 = vector.extract_strided_slice %339 {offsets = [32, 0], sizes = [8, 128], strides = [1, 1]} : vector<64x128xf32> to vector<8x128xf32>
    %cst_139 = arith.constant dense<0.000000e+00> : vector<8x128xf32>
    %476 = tpu.matmul %454, %335, %cst_139 {dimension_numbers = #tpu.dot_dimension_numbers<[1], [0], [0], [1], [0, 0, 1, 1], [], []>} : vector<8x32xf32>, vector<32x128xf32>, vector<8x128xf32> -> vector<8x128xf32>
    %477 = arith.addf %475, %476 : vector<8x128xf32>
    %478 = arith.negf %477 : vector<8x128xf32>
    %479 = math.exp %478 : vector<8x128xf32>
    %cst_140 = arith.constant 1.000000e+00 : f32
    %480 = vector.broadcast %cst_140 : f32 to vector<8x128xf32>
    %481 = arith.addf %480, %479 : vector<8x128xf32>
    %482 = arith.divf %480, %481 : vector<8x128xf32>
    %483 = vector.extract_strided_slice %477 {offsets = [0, 64], sizes = [8, 32], strides = [1, 1]} : vector<8x128xf32> to vector<8x32xf32>
    %484 = math.tanh %483 : vector<8x32xf32>
    %485 = vector.extract_strided_slice %482 {offsets = [0, 32], sizes = [8, 32], strides = [1, 1]} : vector<8x128xf32> to vector<8x32xf32>
    %486 = arith.mulf %485, %451 : vector<8x32xf32>
    %487 = vector.extract_strided_slice %482 {offsets = [0, 0], sizes = [8, 32], strides = [1, 1]} : vector<8x128xf32> to vector<8x32xf32>
    %488 = arith.mulf %487, %484 : vector<8x32xf32>
    %489 = arith.addf %486, %488 : vector<8x32xf32>
    %490 = vector.extract_strided_slice %482 {offsets = [0, 96], sizes = [8, 32], strides = [1, 1]} : vector<8x128xf32> to vector<8x32xf32>
    %491 = math.tanh %489 : vector<8x32xf32>
    %492 = arith.mulf %490, %491 : vector<8x32xf32>
    %c32_141 = arith.constant 32 : index
    %c32_142 = arith.constant 32 : index
    %493 = vector.load %arg15[%c32_141, %c32_142] : memref<64x64xf32, #tpu.memory_space<vmem>>, vector<8x32xf32>
    tpu.vector_store %arg15[%c32_141, %c32_142], %492 {strides = array<i32>} : memref<64x64xf32, #tpu.memory_space<vmem>>, vector<8x32xf32>,
    %494 = vector.extract_strided_slice %331 {offsets = [32, 0], sizes = [8, 128], strides = [1, 1]} : vector<64x128xf32> to vector<8x128xf32>
    %cst_143 = arith.constant dense<0.000000e+00> : vector<8x128xf32>
    %495 = tpu.matmul %473, %327, %cst_143 {dimension_numbers = #tpu.dot_dimension_numbers<[1], [0], [0], [1], [0, 0, 1, 1], [], []>} : vector<8x32xf32>, vector<32x128xf32>, vector<8x128xf32> -> vector<8x128xf32>
    %496 = arith.addf %494, %495 : vector<8x128xf32>
    %497 = arith.negf %496 : vector<8x128xf32>
    %498 = math.exp %497 : vector<8x128xf32>
    %cst_144 = arith.constant 1.000000e+00 : f32
    %499 = vector.broadcast %cst_144 : f32 to vector<8x128xf32>
    %500 = arith.addf %499, %498 : vector<8x128xf32>
    %501 = arith.divf %499, %500 : vector<8x128xf32>
    %502 = vector.extract_strided_slice %496 {offsets = [0, 64], sizes = [8, 32], strides = [1, 1]} : vector<8x128xf32> to vector<8x32xf32>
    %503 = math.tanh %502 : vector<8x32xf32>
    %504 = vector.extract_strided_slice %501 {offsets = [0, 32], sizes = [8, 32], strides = [1, 1]} : vector<8x128xf32> to vector<8x32xf32>
    %505 = arith.mulf %504, %470 : vector<8x32xf32>
    %506 = vector.extract_strided_slice %501 {offsets = [0, 0], sizes = [8, 32], strides = [1, 1]} : vector<8x128xf32> to vector<8x32xf32>
    %507 = arith.mulf %506, %503 : vector<8x32xf32>
    %508 = arith.addf %505, %507 : vector<8x32xf32>
    %509 = vector.extract_strided_slice %501 {offsets = [0, 96], sizes = [8, 32], strides = [1, 1]} : vector<8x128xf32> to vector<8x32xf32>
    %510 = math.tanh %508 : vector<8x32xf32>
    %511 = arith.mulf %509, %510 : vector<8x32xf32>
    %c32_145 = arith.constant 32 : index
    %c0_146 = arith.constant 0 : index
    %512 = vector.load %arg15[%c32_145, %c0_146] : memref<64x64xf32, #tpu.memory_space<vmem>>, vector<8x32xf32>
    tpu.vector_store %arg15[%c32_145, %c0_146], %511 {strides = array<i32>} : memref<64x64xf32, #tpu.memory_space<vmem>>, vector<8x32xf32>,
    %513 = vector.extract_strided_slice %339 {offsets = [24, 0], sizes = [8, 128], strides = [1, 1]} : vector<64x128xf32> to vector<8x128xf32>
    %cst_147 = arith.constant dense<0.000000e+00> : vector<8x128xf32>
    %514 = tpu.matmul %492, %335, %cst_147 {dimension_numbers = #tpu.dot_dimension_numbers<[1], [0], [0], [1], [0, 0, 1, 1], [], []>} : vector<8x32xf32>, vector<32x128xf32>, vector<8x128xf32> -> vector<8x128xf32>
    %515 = arith.addf %513, %514 : vector<8x128xf32>
    %516 = arith.negf %515 : vector<8x128xf32>
    %517 = math.exp %516 : vector<8x128xf32>
    %cst_148 = arith.constant 1.000000e+00 : f32
    %518 = vector.broadcast %cst_148 : f32 to vector<8x128xf32>
    %519 = arith.addf %518, %517 : vector<8x128xf32>
    %520 = arith.divf %518, %519 : vector<8x128xf32>
    %521 = vector.extract_strided_slice %515 {offsets = [0, 64], sizes = [8, 32], strides = [1, 1]} : vector<8x128xf32> to vector<8x32xf32>
    %522 = math.tanh %521 : vector<8x32xf32>
    %523 = vector.extract_strided_slice %520 {offsets = [0, 32], sizes = [8, 32], strides = [1, 1]} : vector<8x128xf32> to vector<8x32xf32>
    %524 = arith.mulf %523, %489 : vector<8x32xf32>
    %525 = vector.extract_strided_slice %520 {offsets = [0, 0], sizes = [8, 32], strides = [1, 1]} : vector<8x128xf32> to vector<8x32xf32>
    %526 = arith.mulf %525, %522 : vector<8x32xf32>
    %527 = arith.addf %524, %526 : vector<8x32xf32>
    %528 = vector.extract_strided_slice %520 {offsets = [0, 96], sizes = [8, 32], strides = [1, 1]} : vector<8x128xf32> to vector<8x32xf32>
    %529 = math.tanh %527 : vector<8x32xf32>
    %530 = arith.mulf %528, %529 : vector<8x32xf32>
    %c24_149 = arith.constant 24 : index
    %c32_150 = arith.constant 32 : index
    %531 = vector.load %arg15[%c24_149, %c32_150] : memref<64x64xf32, #tpu.memory_space<vmem>>, vector<8x32xf32>
    tpu.vector_store %arg15[%c24_149, %c32_150], %530 {strides = array<i32>} : memref<64x64xf32, #tpu.memory_space<vmem>>, vector<8x32xf32>,
    %532 = vector.extract_strided_slice %331 {offsets = [40, 0], sizes = [8, 128], strides = [1, 1]} : vector<64x128xf32> to vector<8x128xf32>
    %cst_151 = arith.constant dense<0.000000e+00> : vector<8x128xf32>
    %533 = tpu.matmul %511, %327, %cst_151 {dimension_numbers = #tpu.dot_dimension_numbers<[1], [0], [0], [1], [0, 0, 1, 1], [], []>} : vector<8x32xf32>, vector<32x128xf32>, vector<8x128xf32> -> vector<8x128xf32>
    %534 = arith.addf %532, %533 : vector<8x128xf32>
    %535 = arith.negf %534 : vector<8x128xf32>
    %536 = math.exp %535 : vector<8x128xf32>
    %cst_152 = arith.constant 1.000000e+00 : f32
    %537 = vector.broadcast %cst_152 : f32 to vector<8x128xf32>
    %538 = arith.addf %537, %536 : vector<8x128xf32>
    %539 = arith.divf %537, %538 : vector<8x128xf32>
    %540 = vector.extract_strided_slice %534 {offsets = [0, 64], sizes = [8, 32], strides = [1, 1]} : vector<8x128xf32> to vector<8x32xf32>
    %541 = math.tanh %540 : vector<8x32xf32>
    %542 = vector.extract_strided_slice %539 {offsets = [0, 32], sizes = [8, 32], strides = [1, 1]} : vector<8x128xf32> to vector<8x32xf32>
    %543 = arith.mulf %542, %508 : vector<8x32xf32>
    %544 = vector.extract_strided_slice %539 {offsets = [0, 0], sizes = [8, 32], strides = [1, 1]} : vector<8x128xf32> to vector<8x32xf32>
    %545 = arith.mulf %544, %541 : vector<8x32xf32>
    %546 = arith.addf %543, %545 : vector<8x32xf32>
    %547 = vector.extract_strided_slice %539 {offsets = [0, 96], sizes = [8, 32], strides = [1, 1]} : vector<8x128xf32> to vector<8x32xf32>
    %548 = math.tanh %546 : vector<8x32xf32>
    %549 = arith.mulf %547, %548 : vector<8x32xf32>
    %c40_153 = arith.constant 40 : index
    %c0_154 = arith.constant 0 : index
    %550 = vector.load %arg15[%c40_153, %c0_154] : memref<64x64xf32, #tpu.memory_space<vmem>>, vector<8x32xf32>
    tpu.vector_store %arg15[%c40_153, %c0_154], %549 {strides = array<i32>} : memref<64x64xf32, #tpu.memory_space<vmem>>, vector<8x32xf32>,
    %551 = vector.extract_strided_slice %339 {offsets = [16, 0], sizes = [8, 128], strides = [1, 1]} : vector<64x128xf32> to vector<8x128xf32>
    %cst_155 = arith.constant dense<0.000000e+00> : vector<8x128xf32>
    %552 = tpu.matmul %530, %335, %cst_155 {dimension_numbers = #tpu.dot_dimension_numbers<[1], [0], [0], [1], [0, 0, 1, 1], [], []>} : vector<8x32xf32>, vector<32x128xf32>, vector<8x128xf32> -> vector<8x128xf32>
    %553 = arith.addf %551, %552 : vector<8x128xf32>
    %554 = arith.negf %553 : vector<8x128xf32>
    %555 = math.exp %554 : vector<8x128xf32>
    %cst_156 = arith.constant 1.000000e+00 : f32
    %556 = vector.broadcast %cst_156 : f32 to vector<8x128xf32>
    %557 = arith.addf %556, %555 : vector<8x128xf32>
    %558 = arith.divf %556, %557 : vector<8x128xf32>
    %559 = vector.extract_strided_slice %553 {offsets = [0, 64], sizes = [8, 32], strides = [1, 1]} : vector<8x128xf32> to vector<8x32xf32>
    %560 = math.tanh %559 : vector<8x32xf32>
    %561 = vector.extract_strided_slice %558 {offsets = [0, 32], sizes = [8, 32], strides = [1, 1]} : vector<8x128xf32> to vector<8x32xf32>
    %562 = arith.mulf %561, %527 : vector<8x32xf32>
    %563 = vector.extract_strided_slice %558 {offsets = [0, 0], sizes = [8, 32], strides = [1, 1]} : vector<8x128xf32> to vector<8x32xf32>
    %564 = arith.mulf %563, %560 : vector<8x32xf32>
    %565 = arith.addf %562, %564 : vector<8x32xf32>
    %566 = vector.extract_strided_slice %558 {offsets = [0, 96], sizes = [8, 32], strides = [1, 1]} : vector<8x128xf32> to vector<8x32xf32>
    %567 = math.tanh %565 : vector<8x32xf32>
    %568 = arith.mulf %566, %567 : vector<8x32xf32>
    %c16_157 = arith.constant 16 : index
    %c32_158 = arith.constant 32 : index
    %569 = vector.load %arg15[%c16_157, %c32_158] : memref<64x64xf32, #tpu.memory_space<vmem>>, vector<8x32xf32>
    tpu.vector_store %arg15[%c16_157, %c32_158], %568 {strides = array<i32>} : memref<64x64xf32, #tpu.memory_space<vmem>>, vector<8x32xf32>,
    %570 = vector.extract_strided_slice %331 {offsets = [48, 0], sizes = [8, 128], strides = [1, 1]} : vector<64x128xf32> to vector<8x128xf32>
    %cst_159 = arith.constant dense<0.000000e+00> : vector<8x128xf32>
    %571 = tpu.matmul %549, %327, %cst_159 {dimension_numbers = #tpu.dot_dimension_numbers<[1], [0], [0], [1], [0, 0, 1, 1], [], []>} : vector<8x32xf32>, vector<32x128xf32>, vector<8x128xf32> -> vector<8x128xf32>
    %572 = arith.addf %570, %571 : vector<8x128xf32>
    %573 = arith.negf %572 : vector<8x128xf32>
    %574 = math.exp %573 : vector<8x128xf32>
    %cst_160 = arith.constant 1.000000e+00 : f32
    %575 = vector.broadcast %cst_160 : f32 to vector<8x128xf32>
    %576 = arith.addf %575, %574 : vector<8x128xf32>
    %577 = arith.divf %575, %576 : vector<8x128xf32>
    %578 = vector.extract_strided_slice %572 {offsets = [0, 64], sizes = [8, 32], strides = [1, 1]} : vector<8x128xf32> to vector<8x32xf32>
    %579 = math.tanh %578 : vector<8x32xf32>
    %580 = vector.extract_strided_slice %577 {offsets = [0, 32], sizes = [8, 32], strides = [1, 1]} : vector<8x128xf32> to vector<8x32xf32>
    %581 = arith.mulf %580, %546 : vector<8x32xf32>
    %582 = vector.extract_strided_slice %577 {offsets = [0, 0], sizes = [8, 32], strides = [1, 1]} : vector<8x128xf32> to vector<8x32xf32>
    %583 = arith.mulf %582, %579 : vector<8x32xf32>
    %584 = arith.addf %581, %583 : vector<8x32xf32>
    %585 = vector.extract_strided_slice %577 {offsets = [0, 96], sizes = [8, 32], strides = [1, 1]} : vector<8x128xf32> to vector<8x32xf32>
    %586 = math.tanh %584 : vector<8x32xf32>
    %587 = arith.mulf %585, %586 : vector<8x32xf32>
    %c48_161 = arith.constant 48 : index
    %c0_162 = arith.constant 0 : index
    %588 = vector.load %arg15[%c48_161, %c0_162] : memref<64x64xf32, #tpu.memory_space<vmem>>, vector<8x32xf32>
    tpu.vector_store %arg15[%c48_161, %c0_162], %587 {strides = array<i32>} : memref<64x64xf32, #tpu.memory_space<vmem>>, vector<8x32xf32>,
    %589 = vector.extract_strided_slice %339 {offsets = [8, 0], sizes = [8, 128], strides = [1, 1]} : vector<64x128xf32> to vector<8x128xf32>
    %cst_163 = arith.constant dense<0.000000e+00> : vector<8x128xf32>
    %590 = tpu.matmul %568, %335, %cst_163 {dimension_numbers = #tpu.dot_dimension_numbers<[1], [0], [0], [1], [0, 0, 1, 1], [], []>} : vector<8x32xf32>, vector<32x128xf32>, vector<8x128xf32> -> vector<8x128xf32>
    %591 = arith.addf %589, %590 : vector<8x128xf32>
    %592 = arith.negf %591 : vector<8x128xf32>
    %593 = math.exp %592 : vector<8x128xf32>
    %cst_164 = arith.constant 1.000000e+00 : f32
    %594 = vector.broadcast %cst_164 : f32 to vector<8x128xf32>
    %595 = arith.addf %594, %593 : vector<8x128xf32>
    %596 = arith.divf %594, %595 : vector<8x128xf32>
    %597 = vector.extract_strided_slice %591 {offsets = [0, 64], sizes = [8, 32], strides = [1, 1]} : vector<8x128xf32> to vector<8x32xf32>
    %598 = math.tanh %597 : vector<8x32xf32>
    %599 = vector.extract_strided_slice %596 {offsets = [0, 32], sizes = [8, 32], strides = [1, 1]} : vector<8x128xf32> to vector<8x32xf32>
    %600 = arith.mulf %599, %565 : vector<8x32xf32>
    %601 = vector.extract_strided_slice %596 {offsets = [0, 0], sizes = [8, 32], strides = [1, 1]} : vector<8x128xf32> to vector<8x32xf32>
    %602 = arith.mulf %601, %598 : vector<8x32xf32>
    %603 = arith.addf %600, %602 : vector<8x32xf32>
    %604 = vector.extract_strided_slice %596 {offsets = [0, 96], sizes = [8, 32], strides = [1, 1]} : vector<8x128xf32> to vector<8x32xf32>
    %605 = math.tanh %603 : vector<8x32xf32>
    %606 = arith.mulf %604, %605 : vector<8x32xf32>
    %c8_165 = arith.constant 8 : index
    %c32_166 = arith.constant 32 : index
    %607 = vector.load %arg15[%c8_165, %c32_166] : memref<64x64xf32, #tpu.memory_space<vmem>>, vector<8x32xf32>
    tpu.vector_store %arg15[%c8_165, %c32_166], %606 {strides = array<i32>} : memref<64x64xf32, #tpu.memory_space<vmem>>, vector<8x32xf32>,
    %608 = vector.extract_strided_slice %331 {offsets = [56, 0], sizes = [8, 128], strides = [1, 1]} : vector<64x128xf32> to vector<8x128xf32>
    %cst_167 = arith.constant dense<0.000000e+00> : vector<8x128xf32>
    %609 = tpu.matmul %587, %327, %cst_167 {dimension_numbers = #tpu.dot_dimension_numbers<[1], [0], [0], [1], [0, 0, 1, 1], [], []>} : vector<8x32xf32>, vector<32x128xf32>, vector<8x128xf32> -> vector<8x128xf32>
    %610 = arith.addf %608, %609 : vector<8x128xf32>
    %611 = arith.negf %610 : vector<8x128xf32>
    %612 = math.exp %611 : vector<8x128xf32>
    %cst_168 = arith.constant 1.000000e+00 : f32
    %613 = vector.broadcast %cst_168 : f32 to vector<8x128xf32>
    %614 = arith.addf %613, %612 : vector<8x128xf32>
    %615 = arith.divf %613, %614 : vector<8x128xf32>
    %616 = vector.extract_strided_slice %610 {offsets = [0, 64], sizes = [8, 32], strides = [1, 1]} : vector<8x128xf32> to vector<8x32xf32>
    %617 = math.tanh %616 : vector<8x32xf32>
    %618 = vector.extract_strided_slice %615 {offsets = [0, 32], sizes = [8, 32], strides = [1, 1]} : vector<8x128xf32> to vector<8x32xf32>
    %619 = arith.mulf %618, %584 : vector<8x32xf32>
    %620 = vector.extract_strided_slice %615 {offsets = [0, 0], sizes = [8, 32], strides = [1, 1]} : vector<8x128xf32> to vector<8x32xf32>
    %621 = arith.mulf %620, %617 : vector<8x32xf32>
    %622 = arith.addf %619, %621 : vector<8x32xf32>
    %623 = vector.extract_strided_slice %615 {offsets = [0, 96], sizes = [8, 32], strides = [1, 1]} : vector<8x128xf32> to vector<8x32xf32>
    %624 = math.tanh %622 : vector<8x32xf32>
    %625 = arith.mulf %623, %624 : vector<8x32xf32>
    %c56_169 = arith.constant 56 : index
    %c0_170 = arith.constant 0 : index
    %626 = vector.load %arg15[%c56_169, %c0_170] : memref<64x64xf32, #tpu.memory_space<vmem>>, vector<8x32xf32>
    tpu.vector_store %arg15[%c56_169, %c0_170], %625 {strides = array<i32>} : memref<64x64xf32, #tpu.memory_space<vmem>>, vector<8x32xf32>,
    %627 = vector.extract_strided_slice %339 {offsets = [0, 0], sizes = [8, 128], strides = [1, 1]} : vector<64x128xf32> to vector<8x128xf32>
    %cst_171 = arith.constant dense<0.000000e+00> : vector<8x128xf32>
    %628 = tpu.matmul %606, %335, %cst_171 {dimension_numbers = #tpu.dot_dimension_numbers<[1], [0], [0], [1], [0, 0, 1, 1], [], []>} : vector<8x32xf32>, vector<32x128xf32>, vector<8x128xf32> -> vector<8x128xf32>
    %629 = arith.addf %627, %628 : vector<8x128xf32>
    %630 = arith.negf %629 : vector<8x128xf32>
    %631 = math.exp %630 : vector<8x128xf32>
    %cst_172 = arith.constant 1.000000e+00 : f32
    %632 = vector.broadcast %cst_172 : f32 to vector<8x128xf32>
    %633 = arith.addf %632, %631 : vector<8x128xf32>
    %634 = arith.divf %632, %633 : vector<8x128xf32>
    %635 = vector.extract_strided_slice %629 {offsets = [0, 64], sizes = [8, 32], strides = [1, 1]} : vector<8x128xf32> to vector<8x32xf32>
    %636 = math.tanh %635 : vector<8x32xf32>
    %637 = vector.extract_strided_slice %634 {offsets = [0, 32], sizes = [8, 32], strides = [1, 1]} : vector<8x128xf32> to vector<8x32xf32>
    %638 = arith.mulf %637, %603 : vector<8x32xf32>
    %639 = vector.extract_strided_slice %634 {offsets = [0, 0], sizes = [8, 32], strides = [1, 1]} : vector<8x128xf32> to vector<8x32xf32>
    %640 = arith.mulf %639, %636 : vector<8x32xf32>
    %641 = arith.addf %638, %640 : vector<8x32xf32>
    %642 = vector.extract_strided_slice %634 {offsets = [0, 96], sizes = [8, 32], strides = [1, 1]} : vector<8x128xf32> to vector<8x32xf32>
    %643 = math.tanh %641 : vector<8x32xf32>
    %644 = arith.mulf %642, %643 : vector<8x32xf32>
    %c0_173 = arith.constant 0 : index
    %c32_174 = arith.constant 32 : index
    %645 = vector.load %arg15[%c0_173, %c32_174] : memref<64x64xf32, #tpu.memory_space<vmem>>, vector<8x32xf32>
    tpu.vector_store %arg15[%c0_173, %c32_174], %644 {strides = array<i32>} : memref<64x64xf32, #tpu.memory_space<vmem>>, vector<8x32xf32>,
    %c16_175 = arith.constant 16 : index
    %c0_176 = arith.constant 0 : index
    %646 = vector.load %arg16[%c16_175, %c0_176] : memref<32x32xf32, #tpu.memory_space<vmem>>, vector<8x32xf32>
    tpu.vector_store %arg16[%c16_175, %c0_176], %625 {strides = array<i32>} : memref<32x32xf32, #tpu.memory_space<vmem>>, vector<8x32xf32>,
    %c16_177 = arith.constant 16 : index
    %c0_178 = arith.constant 0 : index
    %647 = vector.load %arg17[%c16_177, %c0_178] : memref<32x32xf32, #tpu.memory_space<vmem>>, vector<8x32xf32>
    tpu.vector_store %arg17[%c16_177, %c0_178], %622 {strides = array<i32>} : memref<32x32xf32, #tpu.memory_space<vmem>>, vector<8x32xf32>,
    %c24_179 = arith.constant 24 : index
    %c0_180 = arith.constant 0 : index
    %648 = vector.load %arg16[%c24_179, %c0_180] : memref<32x32xf32, #tpu.memory_space<vmem>>, vector<8x32xf32>
    tpu.vector_store %arg16[%c24_179, %c0_180], %644 {strides = array<i32>} : memref<32x32xf32, #tpu.memory_space<vmem>>, vector<8x32xf32>,
    %c24_181 = arith.constant 24 : index
    %c0_182 = arith.constant 0 : index
    %649 = vector.load %arg17[%c24_181, %c0_182] : memref<32x32xf32, #tpu.memory_space<vmem>>, vector<8x32xf32>
    tpu.vector_store %arg17[%c24_181, %c0_182], %641 {strides = array<i32>} : memref<32x32xf32, #tpu.memory_space<vmem>>, vector<8x32xf32>,
    return
  }
}

</mosaic_0001>

<llo_original>
// kernel: _lambda_.1
$region0: #{_lambda_.1}
  #allocation0 [shape = 'u32[]', space=smem, size = 0x4, offset = 0x4, fixed_abs, tag = 'smem constant byte address 0x4 - core index']
  #allocation1 [shape = 'u32[72,128]{1,0:T(1,128)}', space=vmem, size = 0x9000, scoped, tag = 'internal scratch']
  #allocation2 [shape = 'f32[64,64]{1,0:T(8,128)}', space=vmem, size = 0x8000, scoped, tag = 'scratch operand']
  %s0 = inlined_call_operand.vmem [shape: f32[64,64], index: 0, kind: input, shape index: {}]
  %s1 = inlined_call_operand.vmem [shape: f32[32,32], index: 1, kind: input, shape index: {}, may-alias: {1,2}]
  %s2 = inlined_call_operand.vmem [shape: f32[32,32], index: 2, kind: input, shape index: {}, may-alias: {1,2}]
  %s3 = inlined_call_operand.vmem [shape: f32[64,128], index: 3, kind: input, shape index: {}]
  %s4 = inlined_call_operand.hbm [shape: f32[32,128], index: 4, kind: input, shape index: {}]
  %s5 = inlined_call_operand.vmem [shape: f32[1,128], index: 5, kind: input, shape index: {}]
  %s6 = inlined_call_operand.vmem [shape: f32[64,128], index: 6, kind: input, shape index: {}]
  %s7 = inlined_call_operand.hbm [shape: f32[32,128], index: 7, kind: input, shape index: {}]
  %s8 = inlined_call_operand.vmem [shape: f32[1,128], index: 8, kind: input, shape index: {}]
  %s9 = inlined_call_operand.hbm [shape: f32[64,128], index: 9, kind: input, shape index: {}]
  %s10 = inlined_call_operand.hbm [shape: f32[32,128], index: 10, kind: input, shape index: {}]
  %s11 = inlined_call_operand.vmem [shape: f32[1,128], index: 11, kind: input, shape index: {}]
  %s12 = inlined_call_operand.hbm [shape: f32[64,128], index: 12, kind: input, shape index: {}]
  %s13 = inlined_call_operand.hbm [shape: f32[32,128], index: 13, kind: input, shape index: {}]
  %s14 = inlined_call_operand.vmem [shape: f32[1,128], index: 14, kind: input, shape index: {}]
  %s15 = inlined_call_operand.vmem [shape: f32[64,64], index: 15, kind: output, shape index: {0}]
  %s16 = inlined_call_operand.vmem [shape: f32[32,32], index: 16, kind: output, shape index: {1}]
  %s17 = inlined_call_operand.vmem [shape: f32[32,32], index: 17, kind: output, shape index: {2}]
  %18 = xla_tuple %s15, %s16, %s17
  %s19 = sld [smem:[#allocation0]]
  $region110: #{_lambda_.1} parent=0
    _
  %s21 = ssub.s32 1, %s19
  %s22 = scalar_select 0, %s21, %s19
  $region1: #{_lambda_.1} parent=0
    #allocation3 [shape = 'u8[16384]{0}', space=vmem, size = 0x4000, scoped, tag = 'input window, operand 4, single buffered']
    #allocation4 [shape = 's32[1]{0}', space=sflag, size = 0x4, scoped, tag = 'scoped memory for _lambda_.1']
    #allocation5 [shape = 'u8[16384]{0}', space=vmem, size = 0x4000, scoped, tag = 'input window, operand 7, single buffered']
    #allocation6 [shape = 's32[1]{0}', space=sflag, size = 0x4, scoped, tag = 'scoped memory for _lambda_.1']
    #allocation7 [shape = 'u8[32768]{0}', space=vmem, size = 0x8000, scoped, tag = 'input window, operand 9, single buffered']
    #allocation8 [shape = 'u8[16384]{0}', space=vmem, size = 0x4000, scoped, tag = 'input window, operand 10, single buffered']
    #allocation9 [shape = 's32[1]{0}', space=sflag, size = 0x4, scoped, tag = 'scoped memory for _lambda_.1']
    #allocation10 [shape = 'u8[32768]{0}', space=vmem, size = 0x8000, scoped, tag = 'input window, operand 12, single buffered']
    #allocation11 [shape = 'u8[16384]{0}', space=vmem, size = 0x4000, scoped, tag = 'input window, operand 13, single buffered']
    #allocation12 [shape = 's32[1]{0}', space=sflag, size = 0x4, scoped, tag = 'scoped memory for _lambda_.1']
    %23 = vsyncpa [#allocation4], 0
    %24 = vsyncpa [#allocation6], 0
    %25 = vsyncpa [#allocation9], 0
    %26 = vsyncpa [#allocation12], 0
    // Predicated region
    $region2: #{_lambda_.1} parent=1 // pred_check
      _
    $region3: #{_lambda_.1} parent=1 // pred_check_branch
      %28 = sbr.rel (0) target = $region5
    $region4: #{_lambda_.1} parent=1 // pred_region
      _
    $region5: #{_lambda_.1} parent=1 // pred_fallthru
      _
    // Predicated region
    $region6: #{_lambda_.1} parent=1 // pred_check
      _
    $region7: #{_lambda_.1} parent=1 // pred_check_branch
      %30 = sbr.rel (0) target = $region9
    $region8: #{_lambda_.1} parent=1 // pred_region
      _
    $region9: #{_lambda_.1} parent=1 // pred_fallthru
      _
    // Predicated region
    $region10: #{_lambda_.1} parent=1 // pred_check
      _
    $region11: #{_lambda_.1} parent=1 // pred_check_branch
      %32 = sbr.rel (0) target = $region13
    $region12: #{_lambda_.1} parent=1 // pred_region
      _
    $region13: #{_lambda_.1} parent=1 // pred_fallthru
      _
    // Predicated region
    $region14: #{_lambda_.1} parent=1 // pred_check
      _
    $region15: #{_lambda_.1} parent=1 // pred_check_branch
      %34 = sbr.rel (0) target = $region17
    $region16: #{_lambda_.1} parent=1 // pred_region
      _
    $region17: #{_lambda_.1} parent=1 // pred_fallthru
      _
    // Predicated region
    $region18: #{_lambda_.1} parent=1 // pred_check
      _
    $region19: #{_lambda_.1} parent=1 // pred_check_branch
      %36 = sbr.rel (0) target = $region21
    $region20: #{_lambda_.1} parent=1 // pred_region
      %38 = vsyncadd [#allocation4], 0
      %s39 = sshll.u32 %s4, 4
      %s40 = int_to_ptr.hbm [resolvable:$true] %s39
      %s41 = sshll.u32 [#allocation3], 4
      %s42 = int_to_ptr.vmem [resolvable:$true] %s41
      %47 = dma.hbm_to_vmem [thread:$0]  %s40, 512, %s42, [#allocation4], 128, 128, 8
    $region21: #{_lambda_.1} parent=1 // pred_fallthru
      _
    // Predicated region
    $region22: #{_lambda_.1} parent=1 // pred_check
      _
    $region23: #{_lambda_.1} parent=1 // pred_check_branch
      %49 = sbr.rel (0) target = $region25
    $region24: #{_lambda_.1} parent=1 // pred_region
      _
    $region25: #{_lambda_.1} parent=1 // pred_fallthru
      _
    // Predicated region
    $region26: #{_lambda_.1} parent=1 // pred_check
      _
    $region27: #{_lambda_.1} parent=1 // pred_check_branch
      %51 = sbr.rel (0) target = $region29
    $region28: #{_lambda_.1} parent=1 // pred_region
      _
    $region29: #{_lambda_.1} parent=1 // pred_fallthru
      _
    // Predicated region
    $region30: #{_lambda_.1} parent=1 // pred_check
      _
    $region31: #{_lambda_.1} parent=1 // pred_check_branch
      %53 = sbr.rel (0) target = $region33
    $region32: #{_lambda_.1} parent=1 // pred_region
      %55 = vsyncadd [#allocation6], 0
      %s56 = sshll.u32 %s7, 4
      %s57 = int_to_ptr.hbm [resolvable:$true] %s56
      %s58 = sshll.u32 [#allocation5], 4
      %s59 = int_to_ptr.vmem [resolvable:$true] %s58
      %64 = dma.hbm_to_vmem [thread:$0]  %s57, 512, %s59, [#allocation6], 128, 128, 8
    $region33: #{_lambda_.1} parent=1 // pred_fallthru
      _
    // Predicated region
    $region34: #{_lambda_.1} parent=1 // pred_check
      _
    $region35: #{_lambda_.1} parent=1 // pred_check_branch
      %66 = sbr.rel (0) target = $region37
    $region36: #{_lambda_.1} parent=1 // pred_region
      _
    $region37: #{_lambda_.1} parent=1 // pred_fallthru
      _
    // Predicated region
    $region38: #{_lambda_.1} parent=1 // pred_check
      _
    $region39: #{_lambda_.1} parent=1 // pred_check_branch
      %68 = sbr.rel (0) target = $region41
    $region40: #{_lambda_.1} parent=1 // pred_region
      %70 = vsyncadd [#allocation6], 0
      %s71 = sshll.u32 %s9, 4
      %s72 = int_to_ptr.hbm [resolvable:$true] %s71
      %s73 = sshll.u32 [#allocation7], 4
      %s74 = int_to_ptr.vmem [resolvable:$true] %s73
      %79 = dma.hbm_to_vmem [thread:$0]  %s72, 1024, %s74, [#allocation6], 128, 128, 8
    $region41: #{_lambda_.1} parent=1 // pred_fallthru
      _
    // Predicated region
    $region42: #{_lambda_.1} parent=1 // pred_check
      _
    $region43: #{_lambda_.1} parent=1 // pred_check_branch
      %81 = sbr.rel (0) target = $region45
    $region44: #{_lambda_.1} parent=1 // pred_region
      %83 = vsyncadd [#allocation9], 0
      %s84 = sshll.u32 %s10, 4
      %s85 = int_to_ptr.hbm [resolvable:$true] %s84
      %s86 = sshll.u32 [#allocation8], 4
      %s87 = int_to_ptr.vmem [resolvable:$true] %s86
      %92 = dma.hbm_to_vmem [thread:$0]  %s85, 512, %s87, [#allocation9], 128, 128, 8
    $region45: #{_lambda_.1} parent=1 // pred_fallthru
      _
    // Predicated region
    $region46: #{_lambda_.1} parent=1 // pred_check
      _
    $region47: #{_lambda_.1} parent=1 // pred_check_branch
      %94 = sbr.rel (0) target = $region49
    $region48: #{_lambda_.1} parent=1 // pred_region
      _
    $region49: #{_lambda_.1} parent=1 // pred_fallthru
      _
    // Predicated region
    $region50: #{_lambda_.1} parent=1 // pred_check
      _
    $region51: #{_lambda_.1} parent=1 // pred_check_branch
      %96 = sbr.rel (0) target = $region53
    $region52: #{_lambda_.1} parent=1 // pred_region
      %98 = vsyncadd [#allocation9], 0
      %s99 = sshll.u32 %s12, 4
      %s100 = int_to_ptr.hbm [resolvable:$true] %s99
      %s101 = sshll.u32 [#allocation10], 4
      %s102 = int_to_ptr.vmem [resolvable:$true] %s101
      %107 = dma.hbm_to_vmem [thread:$0]  %s100, 1024, %s102, [#allocation9], 128, 128, 8
    $region53: #{_lambda_.1} parent=1 // pred_fallthru
      _
    // Predicated region
    $region54: #{_lambda_.1} parent=1 // pred_check
      _
    $region55: #{_lambda_.1} parent=1 // pred_check_branch
      %109 = sbr.rel (0) target = $region57
    $region56: #{_lambda_.1} parent=1 // pred_region
      %111 = vsyncadd [#allocation12], 0
      %s112 = sshll.u32 %s13, 4
      %s113 = int_to_ptr.hbm [resolvable:$true] %s112
      %s114 = sshll.u32 [#allocation11], 4
      %s115 = int_to_ptr.vmem [resolvable:$true] %s114
      %120 = dma.hbm_to_vmem [thread:$0]  %s113, 512, %s115, [#allocation12], 128, 128, 8
    $region57: #{_lambda_.1} parent=1 // pred_fallthru
      _
    // Predicated region
    $region58: #{_lambda_.1} parent=1 // pred_check
      _
    $region59: #{_lambda_.1} parent=1 // pred_check_branch
      %122 = sbr.rel (0) target = $region61
    $region60: #{_lambda_.1} parent=1 // pred_region
      _
    $region61: #{_lambda_.1} parent=1 // pred_fallthru
      _
    // Predicated region
    $region62: #{_lambda_.1} parent=1 // pred_check
      _
    $region63: #{_lambda_.1} parent=1 // pred_check_branch
      %124 = sbr.rel (0) target = $region65
    $region64: #{_lambda_.1} parent=1 // pred_region
      %126 = dma.done [#allocation4], 512
    $region65: #{_lambda_.1} parent=1 // pred_fallthru
      _
    // Predicated region
    $region66: #{_lambda_.1} parent=1 // pred_check
      _
    $region67: #{_lambda_.1} parent=1 // pred_check_branch
      %128 = sbr.rel (0) target = $region69
    $region68: #{_lambda_.1} parent=1 // pred_region
      %130 = dma.done [#allocation6], 512
    $region69: #{_lambda_.1} parent=1 // pred_fallthru
      _
    // Predicated region
    $region70: #{_lambda_.1} parent=1 // pred_check
      _
    $region71: #{_lambda_.1} parent=1 // pred_check_branch
      %132 = sbr.rel (0) target = $region73
    $region72: #{_lambda_.1} parent=1 // pred_region
      %134 = dma.done [#allocation6], 1024
    $region73: #{_lambda_.1} parent=1 // pred_fallthru
      _
    // Predicated region
    $region74: #{_lambda_.1} parent=1 // pred_check
      _
    $region75: #{_lambda_.1} parent=1 // pred_check_branch
      %136 = sbr.rel (0) target = $region77
    $region76: #{_lambda_.1} parent=1 // pred_region
      %138 = dma.done [#allocation9], 512
    $region77: #{_lambda_.1} parent=1 // pred_fallthru
      _
    // Predicated region
    $region78: #{_lambda_.1} parent=1 // pred_check
      _
    $region79: #{_lambda_.1} parent=1 // pred_check_branch
      %140 = sbr.rel (0) target = $region81
    $region80: #{_lambda_.1} parent=1 // pred_region
      %142 = dma.done [#allocation9], 1024
    $region81: #{_lambda_.1} parent=1 // pred_fallthru
      _
    // Predicated region
    $region82: #{_lambda_.1} parent=1 // pred_check
      _
    $region83: #{_lambda_.1} parent=1 // pred_check_branch
      %144 = sbr.rel (0) target = $region85
    $region84: #{_lambda_.1} parent=1 // pred_region
      %146 = dma.done [#allocation12], 512
    $region85: #{_lambda_.1} parent=1 // pred_fallthru
      _
    %v147 = vld [vmem:[%s0] sm:$0xff]
    %v148 = vld [vmem:[%s0 + $0x8] sm:$0xff]
    %v149 = vld [vmem:[%s0 + $0x10] sm:$0xff]
    %v150 = vld [vmem:[%s0 + $0x18] sm:$0xff]
    %v151 = vld [vmem:[%s0 + $0x20] sm:$0xff]
    %v152 = vld [vmem:[%s0 + $0x28] sm:$0xff]
    %v153 = vld [vmem:[%s0 + $0x30] sm:$0xff]
    %v154 = vld [vmem:[%s0 + $0x38] sm:$0xff]
    %v155 = vld [vmem:[%s3] sm:$0xff]
    %v156 = vld [vmem:[%s3 + $0x8] sm:$0xff]
    %v157 = vld [vmem:[%s3 + $0x10] sm:$0xff]
    %v158 = vld [vmem:[%s3 + $0x18] sm:$0xff]
    %v159 = vld [vmem:[%s3 + $0x20] sm:$0xff]
    %v160 = vld [vmem:[%s3 + $0x28] sm:$0xff]
    %v161 = vld [vmem:[%s3 + $0x30] sm:$0xff]
    %v162 = vld [vmem:[%s3 + $0x38] sm:$0xff]
    %v163 = vld [vmem:[#allocation3] sm:$0xff]
    %v164 = vld [vmem:[#allocation3 + $0x8] sm:$0xff]
    %v165 = vld [vmem:[#allocation3 + $0x10] sm:$0xff]
    %v166 = vld [vmem:[#allocation3 + $0x18] sm:$0xff]
    %v167 = vld [vmem:[%s5] sm:$0x1]
    %v169 = vperm.slane %v167, 0
    %vm171 = vcmask 523264
    %v173 = vsel %vm171, %v147, 0
    %v176 = vsel %vm171, %v148, 0
    %v179 = vsel %vm171, %v149, 0
    %v182 = vsel %vm171, %v150, 0
    %v185 = vsel %vm171, %v151, 0
    %v188 = vsel %vm171, %v152, 0
    %v191 = vsel %vm171, %v153, 0
    %v194 = vsel %vm171, %v154, 0
    %196 = vmatpush.msra.mxu0 0.0
    %197 = vmatpush.msra.mxu0 0.0
    %198 = vmatpush.msra.mxu0 0.0
    %199 = vmatpush.msra.mxu0 0.0
    %200 = vmatpush.msra.mxu0 0.0
    %201 = vmatpush.msra.mxu0 0.0
    %202 = vmatpush.msra.mxu0 0.0
    %203 = vmatpush.msra.mxu0 0.0
    %204 = vmatpush.msra.mxu0 %v162
    %205 = vmatpush.msra.mxu0 %v161
    %206 = vmatpush.msra.mxu0 %v160
    %207 = vmatpush.msra.mxu0 %v159
    %208 = vmatpush.msra.mxu0 %v158
    %209 = vmatpush.msra.mxu0 %v157
    %210 = vmatpush.msra.mxu0 %v156
    %211 = vmatpush.msra.mxu0 %v155
    %212 = vmatmul.f32.gmra.mxu0 %v173
    %v213 = vpop.f32.mrf.mxu0
    %v214 = vadd.f32 %v169, %v213
    %215 = vmatmul.f32.gmra.mxu0 %v176
    %v216 = vpop.f32.mrf.mxu0
    %v217 = vadd.f32 %v169, %v216
    %218 = vmatmul.f32.gmra.mxu0 %v179
    %v219 = vpop.f32.mrf.mxu0
    %v220 = vadd.f32 %v169, %v219
    %221 = vmatmul.f32.gmra.mxu0 %v182
    %v222 = vpop.f32.mrf.mxu0
    %v223 = vadd.f32 %v169, %v222
    %224 = vmatmul.f32.gmra.mxu0 %v185
    %v225 = vpop.f32.mrf.mxu0
    %v226 = vadd.f32 %v169, %v225
    %227 = vmatmul.f32.gmra.mxu0 %v188
    %v228 = vpop.f32.mrf.mxu0
    %v229 = vadd.f32 %v169, %v228
    %230 = vmatmul.f32.gmra.mxu0 %v191
    %v231 = vpop.f32.mrf.mxu0
    %v232 = vadd.f32 %v169, %v231
    %233 = vmatmul.f32.gmra.mxu0 %v194
    %v234 = vpop.f32.mrf.mxu0
    %v235 = vadd.f32 %v169, %v234
    %236 = vdwg.mxu0
    %v237 = vld [vmem:[%s1] sm:$0xff]
    %v238 = vld [vmem:[%s2] sm:$0xff]
    %v239 = vld [vmem:[%s6] sm:$0xff]
    %v240 = vld [vmem:[%s6 + $0x8] sm:$0xff]
    %v241 = vld [vmem:[%s6 + $0x10] sm:$0xff]
    %v242 = vld [vmem:[%s6 + $0x18] sm:$0xff]
    %v243 = vld [vmem:[%s6 + $0x20] sm:$0xff]
    %v244 = vld [vmem:[%s6 + $0x28] sm:$0xff]
    %v245 = vld [vmem:[%s6 + $0x30] sm:$0xff]
    %v246 = vld [vmem:[%s6 + $0x38] sm:$0xff]
    %v247 = vld [vmem:[#allocation5] sm:$0xff]
    %v248 = vld [vmem:[#allocation5 + $0x8] sm:$0xff]
    %v249 = vld [vmem:[#allocation5 + $0x10] sm:$0xff]
    %v250 = vld [vmem:[#allocation5 + $0x18] sm:$0xff]
    %v251 = vld [vmem:[%s8] sm:$0x1]
    %v253 = vperm.slane %v251, 0
    %255 = vmatpush.msra.mxu0 0.0
    %256 = vmatpush.msra.mxu0 0.0
    %257 = vmatpush.msra.mxu0 0.0
    %258 = vmatpush.msra.mxu0 0.0
    %259 = vmatpush.msra.mxu0 0.0
    %260 = vmatpush.msra.mxu0 0.0
    %261 = vmatpush.msra.mxu0 0.0
    %262 = vmatpush.msra.mxu0 0.0
    %263 = vmatpush.msra.mxu0 %v246
    %264 = vmatpush.msra.mxu0 %v245
    %265 = vmatpush.msra.mxu0 %v244
    %266 = vmatpush.msra.mxu0 %v243
    %267 = vmatpush.msra.mxu0 %v242
    %268 = vmatpush.msra.mxu0 %v241
    %269 = vmatpush.msra.mxu0 %v240
    %270 = vmatpush.msra.mxu0 %v239
    %271 = vmatmul.f32.gmra.mxu0 %v173
    %v272 = vpop.f32.mrf.mxu0
    %v273 = vadd.f32 %v253, %v272
    %274 = vmatmul.f32.gmra.mxu0 %v176
    %v275 = vpop.f32.mrf.mxu0
    %v276 = vadd.f32 %v253, %v275
    %277 = vmatmul.f32.gmra.mxu0 %v179
    %v278 = vpop.f32.mrf.mxu0
    %v279 = vadd.f32 %v253, %v278
    %280 = vmatmul.f32.gmra.mxu0 %v182
    %v281 = vpop.f32.mrf.mxu0
    %v282 = vadd.f32 %v253, %v281
    %283 = vmatmul.f32.gmra.mxu0 %v185
    %v284 = vpop.f32.mrf.mxu0
    %v285 = vadd.f32 %v253, %v284
    %286 = vmatmul.f32.gmra.mxu0 %v188
    %v287 = vpop.f32.mrf.mxu0
    %v288 = vadd.f32 %v253, %v287
    %289 = vmatmul.f32.gmra.mxu0 %v191
    %v290 = vpop.f32.mrf.mxu0
    %v291 = vadd.f32 %v253, %v290
    %292 = vmatmul.f32.gmra.mxu0 %v194
    %v293 = vpop.f32.mrf.mxu0
    %v294 = vadd.f32 %v253, %v293
    %295 = vdwg.mxu0
    %v296 = vld [vmem:[%s1 + $0x8] sm:$0xff]
    %v297 = vld [vmem:[%s2 + $0x8] sm:$0xff]
    %vm298 = vcmask 261120
    %v300 = vsel %vm298, %v237, 0
    %302 = vmatpush.msra.mxu0 0.0
    %303 = vmatpush.msra.mxu0 0.0
    %304 = vmatpush.msra.mxu0 0.0
    %305 = vmatpush.msra.mxu0 0.0
    %306 = vmatpush.msra.mxu0 0.0
    %307 = vmatpush.msra.mxu0 0.0
    %308 = vmatpush.msra.mxu0 0.0
    %309 = vmatpush.msra.mxu0 0.0
    %310 = vmatpush.msra.mxu0 0.0
    %311 = vmatpush.msra.mxu0 0.0
    %312 = vmatpush.msra.mxu0 0.0
    %313 = vmatpush.msra.mxu0 0.0
    %314 = vmatpush.msra.mxu0 %v166
    %315 = vmatpush.msra.mxu0 %v165
    %316 = vmatpush.msra.mxu0 %v164
    %317 = vmatpush.msra.mxu0 %v163
    %318 = vmatmul.f32.gmra.mxu0 %v300
    %v319 = vpop.f32.mrf.mxu0
    %v320 = vadd.f32 0.0, %v319
    %321 = vdwg.mxu0
    %v322 = vadd.f32 %v214, %v320
    %v323 = vxor.u32 %v322, 2147483648
    %v324 = vmul.f32 %v323, 1.442695
    %v325 = vpow.pop %v324
    %v326 = vadd.f32 %v325, 1.0
    %v327 = vrcp.pop %v326
    %v328 = vmul.f32 %v326, %v327
    %v329 = vsub.f32 1.0, %v328
    %v330 = vmul.f32 %v327, %v329
    %v331 = vadd.f32 %v327, %v330
    %vm332 = vweird.f32 %v326
    %vm333 = vweird.f32 %v327
    %vm334 = vmor %vm332, %vm333
    %v335 = vsel %vm334, %v327, %v331
    %v336 = vand.u32 2147483647, %v326
    %vm337 = vcmp.eq.f32.partialorder %v336, 8.507059e+37
    %v338 = vand.u32 %v326, 2147483648
    %v339 = vor.u32 1.1754944e-38, %v338
    %v340 = vsel %vm337, %v339, %v335
    %v341 = vmul.f32 1.0, %v340
    %v342 = vtanh.pop %v322
    %344 = vrot.lane.b32.xlu0 %v238, 32
    %v345 = vpop.permute.xlu0 %344
    %v347 = vmul.f32 %v341, %v345
    %349 = vrot.lane.b32.xlu0 %v342, 64
    %v350 = vpop.permute.xlu0 %349
    %v352 = vmul.f32 %v341, %v350
    %354 = vrot.lane.b32.xlu0 %v352, 32
    %v355 = vpop.permute.xlu0 %354
    %v357 = vadd.f32 %v347, %v355
    %v358 = vtanh.pop %v357
    %360 = vrot.lane.b32.xlu0 %v358, 64
    %v361 = vpop.permute.xlu0 %360
    %v363 = vmul.f32 %v341, %v361
    %365 = vrot.lane.b32.xlu0 %v363, 32
    %v366 = vpop.permute.xlu0 %365
    %368 = vst.msk [vmem:[#allocation2] sm:$0xff] %vm298, %v366
    %v370 = vsel %vm298, %v296, 0
    %372 = vmatpush.msra.mxu0 0.0
    %373 = vmatpush.msra.mxu0 0.0
    %374 = vmatpush.msra.mxu0 0.0
    %375 = vmatpush.msra.mxu0 0.0
    %376 = vmatpush.msra.mxu0 0.0
    %377 = vmatpush.msra.mxu0 0.0
    %378 = vmatpush.msra.mxu0 0.0
    %379 = vmatpush.msra.mxu0 0.0
    %380 = vmatpush.msra.mxu0 0.0
    %381 = vmatpush.msra.mxu0 0.0
    %382 = vmatpush.msra.mxu0 0.0
    %383 = vmatpush.msra.mxu0 0.0
    %384 = vmatpush.msra.mxu0 %v250
    %385 = vmatpush.msra.mxu0 %v249
    %386 = vmatpush.msra.mxu0 %v248
    %387 = vmatpush.msra.mxu0 %v247
    %388 = vmatmul.f32.gmra.mxu0 %v370
    %v389 = vpop.f32.mrf.mxu0
    %v390 = vadd.f32 0.0, %v389
    %391 = vdwg.mxu0
    %v392 = vadd.f32 %v294, %v390
    %v393 = vxor.u32 %v392, 2147483648
    %v394 = vmul.f32 %v393, 1.442695
    %v395 = vpow.pop %v394
    %v396 = vadd.f32 %v395, 1.0
    %v397 = vrcp.pop %v396
    %v398 = vmul.f32 %v396, %v397
    %v399 = vsub.f32 1.0, %v398
    %v400 = vmul.f32 %v397, %v399
    %v401 = vadd.f32 %v397, %v400
    %vm402 = vweird.f32 %v396
    %vm403 = vweird.f32 %v397
    %vm404 = vmor %vm402, %vm403
    %v405 = vsel %vm404, %v397, %v401
    %v406 = vand.u32 2147483647, %v396
    %vm407 = vcmp.eq.f32.partialorder %v406, 8.507059e+37
    %v408 = vand.u32 %v396, 2147483648
    %v409 = vor.u32 1.1754944e-38, %v408
    %v410 = vsel %vm407, %v409, %v405
    %v411 = vmul.f32 1.0, %v410
    %v412 = vtanh.pop %v392
    %414 = vrot.lane.b32.xlu0 %v297, 32
    %v415 = vpop.permute.xlu0 %414
    %v417 = vmul.f32 %v411, %v415
    %419 = vrot.lane.b32.xlu0 %v412, 64
    %v420 = vpop.permute.xlu0 %419
    %v422 = vmul.f32 %v411, %v420
    %424 = vrot.lane.b32.xlu0 %v422, 32
    %v425 = vpop.permute.xlu0 %424
    %v427 = vadd.f32 %v417, %v425
    %v428 = vtanh.pop %v427
    %430 = vrot.lane.b32.xlu0 %v428, 64
    %v431 = vpop.permute.xlu0 %430
    %v433 = vmul.f32 %v411, %v431
    %435 = vrot.lane.b32.xlu0 %v433, 64
    %v436 = vpop.permute.xlu0 %435
    %vm438 = vcmask 523520
    %439 = vst.msk [vmem:[#allocation2 + $0x38] sm:$0xff] %vm438, %v436
    %v440 = vsel %vm298, %v366, 0
    %442 = vmatpush.msra.mxu0 0.0
    %443 = vmatpush.msra.mxu0 0.0
    %444 = vmatpush.msra.mxu0 0.0
    %445 = vmatpush.msra.mxu0 0.0
    %446 = vmatpush.msra.mxu0 0.0
    %447 = vmatpush.msra.mxu0 0.0
    %448 = vmatpush.msra.mxu0 0.0
    %449 = vmatpush.msra.mxu0 0.0
    %450 = vmatpush.msra.mxu0 0.0
    %451 = vmatpush.msra.mxu0 0.0
    %452 = vmatpush.msra.mxu0 0.0
    %453 = vmatpush.msra.mxu0 0.0
    %454 = vmatpush.msra.mxu0 %v166
    %455 = vmatpush.msra.mxu0 %v165
    %456 = vmatpush.msra.mxu0 %v164
    %457 = vmatpush.msra.mxu0 %v163
    %458 = vmatmul.f32.gmra.mxu0 %v440
    %v459 = vpop.f32.mrf.mxu0
    %v460 = vadd.f32 0.0, %v459
    %461 = vdwg.mxu0
    %v462 = vadd.f32 %v217, %v460
    %v463 = vxor.u32 %v462, 2147483648
    %v464 = vmul.f32 %v463, 1.442695
    %v465 = vpow.pop %v464
    %v466 = vadd.f32 %v465, 1.0
    %v467 = vrcp.pop %v466
    %v468 = vmul.f32 %v466, %v467
    %v469 = vsub.f32 1.0, %v468
    %v470 = vmul.f32 %v467, %v469
    %v471 = vadd.f32 %v467, %v470
    %vm472 = vweird.f32 %v466
    %vm473 = vweird.f32 %v467
    %vm474 = vmor %vm472, %vm473
    %v475 = vsel %vm474, %v467, %v471
    %v476 = vand.u32 2147483647, %v466
    %vm477 = vcmp.eq.f32.partialorder %v476, 8.507059e+37
    %v478 = vand.u32 %v466, 2147483648
    %v479 = vor.u32 1.1754944e-38, %v478
    %v480 = vsel %vm477, %v479, %v475
    %v481 = vmul.f32 1.0, %v480
    %v482 = vtanh.pop %v462
    %v483 = vmul.f32 %v481, %v357
    %485 = vrot.lane.b32.xlu0 %v482, 64
    %v486 = vpop.permute.xlu0 %485
    %v488 = vmul.f32 %v481, %v486
    %490 = vrot.lane.b32.xlu0 %v488, 32
    %v491 = vpop.permute.xlu0 %490
    %v493 = vadd.f32 %v483, %v491
    %v494 = vtanh.pop %v493
    %496 = vrot.lane.b32.xlu0 %v494, 64
    %v497 = vpop.permute.xlu0 %496
    %v499 = vmul.f32 %v481, %v497
    %501 = vrot.lane.b32.xlu0 %v499, 32
    %v502 = vpop.permute.xlu0 %501
    %504 = vst.msk [vmem:[#allocation2 + $0x8] sm:$0xff] %vm298, %v502
    %505 = vrot.lane.b32.xlu0 %v433, 32
    %v506 = vpop.permute.xlu0 %505
    %v507 = vsel %vm298, %v506, 0
    %509 = vmatpush.msra.mxu0 0.0
    %510 = vmatpush.msra.mxu0 0.0
    %511 = vmatpush.msra.mxu0 0.0
    %512 = vmatpush.msra.mxu0 0.0
    %513 = vmatpush.msra.mxu0 0.0
    %514 = vmatpush.msra.mxu0 0.0
    %515 = vmatpush.msra.mxu0 0.0
    %516 = vmatpush.msra.mxu0 0.0
    %517 = vmatpush.msra.mxu0 0.0
    %518 = vmatpush.msra.mxu0 0.0
    %519 = vmatpush.msra.mxu0 0.0
    %520 = vmatpush.msra.mxu0 0.0
    %521 = vmatpush.msra.mxu0 %v250
    %522 = vmatpush.msra.mxu0 %v249
    %523 = vmatpush.msra.mxu0 %v248
    %524 = vmatpush.msra.mxu0 %v247
    %525 = vmatmul.f32.gmra.mxu0 %v507
    %v526 = vpop.f32.mrf.mxu0
    %v527 = vadd.f32 0.0, %v526
    %528 = vdwg.mxu0
    %v529 = vadd.f32 %v291, %v527
    %v530 = vxor.u32 %v529, 2147483648
    %v531 = vmul.f32 %v530, 1.442695
    %v532 = vpow.pop %v531
    %v533 = vadd.f32 %v532, 1.0
    %v534 = vrcp.pop %v533
    %v535 = vmul.f32 %v533, %v534
    %v536 = vsub.f32 1.0, %v535
    %v537 = vmul.f32 %v534, %v536
    %v538 = vadd.f32 %v534, %v537
    %vm539 = vweird.f32 %v533
    %vm540 = vweird.f32 %v534
    %vm541 = vmor %vm539, %vm540
    %v542 = vsel %vm541, %v534, %v538
    %v543 = vand.u32 2147483647, %v533
    %vm544 = vcmp.eq.f32.partialorder %v543, 8.507059e+37
    %v545 = vand.u32 %v533, 2147483648
    %v546 = vor.u32 1.1754944e-38, %v545
    %v547 = vsel %vm544, %v546, %v542
    %v548 = vmul.f32 1.0, %v547
    %v549 = vtanh.pop %v529
    %v550 = vmul.f32 %v548, %v427
    %552 = vrot.lane.b32.xlu0 %v549, 64
    %v553 = vpop.permute.xlu0 %552
    %v555 = vmul.f32 %v548, %v553
    %557 = vrot.lane.b32.xlu0 %v555, 32
    %v558 = vpop.permute.xlu0 %557
    %v560 = vadd.f32 %v550, %v558
    %v561 = vtanh.pop %v560
    %563 = vrot.lane.b32.xlu0 %v561, 64
    %v564 = vpop.permute.xlu0 %563
    %v566 = vmul.f32 %v548, %v564
    %568 = vrot.lane.b32.xlu0 %v566, 64
    %v569 = vpop.permute.xlu0 %568
    %571 = vst.msk [vmem:[#allocation2 + $0x30] sm:$0xff] %vm438, %v569
    %v572 = vsel %vm298, %v502, 0
    %574 = vmatpush.msra.mxu0 0.0
    %575 = vmatpush.msra.mxu0 0.0
    %576 = vmatpush.msra.mxu0 0.0
    %577 = vmatpush.msra.mxu0 0.0
    %578 = vmatpush.msra.mxu0 0.0
    %579 = vmatpush.msra.mxu0 0.0
    %580 = vmatpush.msra.mxu0 0.0
    %581 = vmatpush.msra.mxu0 0.0
    %582 = vmatpush.msra.mxu0 0.0
    %583 = vmatpush.msra.mxu0 0.0
    %584 = vmatpush.msra.mxu0 0.0
    %585 = vmatpush.msra.mxu0 0.0
    %586 = vmatpush.msra.mxu0 %v166
    %587 = vmatpush.msra.mxu0 %v165
    %588 = vmatpush.msra.mxu0 %v164
    %589 = vmatpush.msra.mxu0 %v163
    %590 = vmatmul.f32.gmra.mxu0 %v572
    %v591 = vpop.f32.mrf.mxu0
    %v592 = vadd.f32 0.0, %v591
    %593 = vdwg.mxu0
    %v594 = vadd.f32 %v220, %v592
    %v595 = vxor.u32 %v594, 2147483648
    %v596 = vmul.f32 %v595, 1.442695
    %v597 = vpow.pop %v596
    %v598 = vadd.f32 %v597, 1.0
    %v599 = vrcp.pop %v598
    %v600 = vmul.f32 %v598, %v599
    %v601 = vsub.f32 1.0, %v600
    %v602 = vmul.f32 %v599, %v601
    %v603 = vadd.f32 %v599, %v602
    %vm604 = vweird.f32 %v598
    %vm605 = vweird.f32 %v599
    %vm606 = vmor %vm604, %vm605
    %v607 = vsel %vm606, %v599, %v603
    %v608 = vand.u32 2147483647, %v598
    %vm609 = vcmp.eq.f32.partialorder %v608, 8.507059e+37
    %v610 = vand.u32 %v598, 2147483648
    %v611 = vor.u32 1.1754944e-38, %v610
    %v612 = vsel %vm609, %v611, %v607
    %v613 = vmul.f32 1.0, %v612
    %v614 = vtanh.pop %v594
    %v615 = vmul.f32 %v613, %v493
    %617 = vrot.lane.b32.xlu0 %v614, 64
    %v618 = vpop.permute.xlu0 %617
    %v620 = vmul.f32 %v613, %v618
    %622 = vrot.lane.b32.xlu0 %v620, 32
    %v623 = vpop.permute.xlu0 %622
    %v625 = vadd.f32 %v615, %v623
    %v626 = vtanh.pop %v625
    %628 = vrot.lane.b32.xlu0 %v626, 64
    %v629 = vpop.permute.xlu0 %628
    %v631 = vmul.f32 %v613, %v629
    %633 = vrot.lane.b32.xlu0 %v631, 32
    %v634 = vpop.permute.xlu0 %633
    %636 = vst.msk [vmem:[#allocation2 + $0x10] sm:$0xff] %vm298, %v634
    %637 = vrot.lane.b32.xlu0 %v566, 32
    %v638 = vpop.permute.xlu0 %637
    %v639 = vsel %vm298, %v638, 0
    %641 = vmatpush.msra.mxu0 0.0
    %642 = vmatpush.msra.mxu0 0.0
    %643 = vmatpush.msra.mxu0 0.0
    %644 = vmatpush.msra.mxu0 0.0
    %645 = vmatpush.msra.mxu0 0.0
    %646 = vmatpush.msra.mxu0 0.0
    %647 = vmatpush.msra.mxu0 0.0
    %648 = vmatpush.msra.mxu0 0.0
    %649 = vmatpush.msra.mxu0 0.0
    %650 = vmatpush.msra.mxu0 0.0
    %651 = vmatpush.msra.mxu0 0.0
    %652 = vmatpush.msra.mxu0 0.0
    %653 = vmatpush.msra.mxu0 %v250
    %654 = vmatpush.msra.mxu0 %v249
    %655 = vmatpush.msra.mxu0 %v248
    %656 = vmatpush.msra.mxu0 %v247
    %657 = vmatmul.f32.gmra.mxu0 %v639
    %v658 = vpop.f32.mrf.mxu0
    %v659 = vadd.f32 0.0, %v658
    %660 = vdwg.mxu0
    %v661 = vadd.f32 %v288, %v659
    %v662 = vxor.u32 %v661, 2147483648
    %v663 = vmul.f32 %v662, 1.442695
    %v664 = vpow.pop %v663
    %v665 = vadd.f32 %v664, 1.0
    %v666 = vrcp.pop %v665
    %v667 = vmul.f32 %v665, %v666
    %v668 = vsub.f32 1.0, %v667
    %v669 = vmul.f32 %v666, %v668
    %v670 = vadd.f32 %v666, %v669
    %vm671 = vweird.f32 %v665
    %vm672 = vweird.f32 %v666
    %vm673 = vmor %vm671, %vm672
    %v674 = vsel %vm673, %v666, %v670
    %v675 = vand.u32 2147483647, %v665
    %vm676 = vcmp.eq.f32.partialorder %v675, 8.507059e+37
    %v677 = vand.u32 %v665, 2147483648
    %v678 = vor.u32 1.1754944e-38, %v677
    %v679 = vsel %vm676, %v678, %v674
    %v680 = vmul.f32 1.0, %v679
    %v681 = vtanh.pop %v661
    %v682 = vmul.f32 %v680, %v560
    %684 = vrot.lane.b32.xlu0 %v681, 64
    %v685 = vpop.permute.xlu0 %684
    %v687 = vmul.f32 %v680, %v685
    %689 = vrot.lane.b32.xlu0 %v687, 32
    %v690 = vpop.permute.xlu0 %689
    %v692 = vadd.f32 %v682, %v690
    %v693 = vtanh.pop %v692
    %695 = vrot.lane.b32.xlu0 %v693, 64
    %v696 = vpop.permute.xlu0 %695
    %v698 = vmul.f32 %v680, %v696
    %700 = vrot.lane.b32.xlu0 %v698, 64
    %v701 = vpop.permute.xlu0 %700
    %703 = vst.msk [vmem:[#allocation2 + $0x28] sm:$0xff] %vm438, %v701
    %v704 = vsel %vm298, %v634, 0
    %706 = vmatpush.msra.mxu0 0.0
    %707 = vmatpush.msra.mxu0 0.0
    %708 = vmatpush.msra.mxu0 0.0
    %709 = vmatpush.msra.mxu0 0.0
    %710 = vmatpush.msra.mxu0 0.0
    %711 = vmatpush.msra.mxu0 0.0
    %712 = vmatpush.msra.mxu0 0.0
    %713 = vmatpush.msra.mxu0 0.0
    %714 = vmatpush.msra.mxu0 0.0
    %715 = vmatpush.msra.mxu0 0.0
    %716 = vmatpush.msra.mxu0 0.0
    %717 = vmatpush.msra.mxu0 0.0
    %718 = vmatpush.msra.mxu0 %v166
    %719 = vmatpush.msra.mxu0 %v165
    %720 = vmatpush.msra.mxu0 %v164
    %721 = vmatpush.msra.mxu0 %v163
    %722 = vmatmul.f32.gmra.mxu0 %v704
    %v723 = vpop.f32.mrf.mxu0
    %v724 = vadd.f32 0.0, %v723
    %725 = vdwg.mxu0
    %v726 = vadd.f32 %v223, %v724
    %v727 = vxor.u32 %v726, 2147483648
    %v728 = vmul.f32 %v727, 1.442695
    %v729 = vpow.pop %v728
    %v730 = vadd.f32 %v729, 1.0
    %v731 = vrcp.pop %v730
    %v732 = vmul.f32 %v730, %v731
    %v733 = vsub.f32 1.0, %v732
    %v734 = vmul.f32 %v731, %v733
    %v735 = vadd.f32 %v731, %v734
    %vm736 = vweird.f32 %v730
    %vm737 = vweird.f32 %v731
    %vm738 = vmor %vm736, %vm737
    %v739 = vsel %vm738, %v731, %v735
    %v740 = vand.u32 2147483647, %v730
    %vm741 = vcmp.eq.f32.partialorder %v740, 8.507059e+37
    %v742 = vand.u32 %v730, 2147483648
    %v743 = vor.u32 1.1754944e-38, %v742
    %v744 = vsel %vm741, %v743, %v739
    %v745 = vmul.f32 1.0, %v744
    %v746 = vtanh.pop %v726
    %v747 = vmul.f32 %v745, %v625
    %749 = vrot.lane.b32.xlu0 %v746, 64
    %v750 = vpop.permute.xlu0 %749
    %v752 = vmul.f32 %v745, %v750
    %754 = vrot.lane.b32.xlu0 %v752, 32
    %v755 = vpop.permute.xlu0 %754
    %v757 = vadd.f32 %v747, %v755
    %v758 = vtanh.pop %v757
    %760 = vrot.lane.b32.xlu0 %v758, 64
    %v761 = vpop.permute.xlu0 %760
    %v763 = vmul.f32 %v745, %v761
    %765 = vrot.lane.b32.xlu0 %v763, 32
    %v766 = vpop.permute.xlu0 %765
    %768 = vst.msk [vmem:[#allocation2 + $0x18] sm:$0xff] %vm298, %v766
    %769 = vrot.lane.b32.xlu0 %v698, 32
    %v770 = vpop.permute.xlu0 %769
    %v771 = vsel %vm298, %v770, 0
    %773 = vmatpush.msra.mxu0 0.0
    %774 = vmatpush.msra.mxu0 0.0
    %775 = vmatpush.msra.mxu0 0.0
    %776 = vmatpush.msra.mxu0 0.0
    %777 = vmatpush.msra.mxu0 0.0
    %778 = vmatpush.msra.mxu0 0.0
    %779 = vmatpush.msra.mxu0 0.0
    %780 = vmatpush.msra.mxu0 0.0
    %781 = vmatpush.msra.mxu0 0.0
    %782 = vmatpush.msra.mxu0 0.0
    %783 = vmatpush.msra.mxu0 0.0
    %784 = vmatpush.msra.mxu0 0.0
    %785 = vmatpush.msra.mxu0 %v250
    %786 = vmatpush.msra.mxu0 %v249
    %787 = vmatpush.msra.mxu0 %v248
    %788 = vmatpush.msra.mxu0 %v247
    %789 = vmatmul.f32.gmra.mxu0 %v771
    %v790 = vpop.f32.mrf.mxu0
    %v791 = vadd.f32 0.0, %v790
    %792 = vdwg.mxu0
    %v793 = vadd.f32 %v285, %v791
    %v794 = vxor.u32 %v793, 2147483648
    %v795 = vmul.f32 %v794, 1.442695
    %v796 = vpow.pop %v795
    %v797 = vadd.f32 %v796, 1.0
    %v798 = vrcp.pop %v797
    %v799 = vmul.f32 %v797, %v798
    %v800 = vsub.f32 1.0, %v799
    %v801 = vmul.f32 %v798, %v800
    %v802 = vadd.f32 %v798, %v801
    %vm803 = vweird.f32 %v797
    %vm804 = vweird.f32 %v798
    %vm805 = vmor %vm803, %vm804
    %v806 = vsel %vm805, %v798, %v802
    %v807 = vand.u32 2147483647, %v797
    %vm808 = vcmp.eq.f32.partialorder %v807, 8.507059e+37
    %v809 = vand.u32 %v797, 2147483648
    %v810 = vor.u32 1.1754944e-38, %v809
    %v811 = vsel %vm808, %v810, %v806
    %v812 = vmul.f32 1.0, %v811
    %v813 = vtanh.pop %v793
    %v814 = vmul.f32 %v812, %v692
    %816 = vrot.lane.b32.xlu0 %v813, 64
    %v817 = vpop.permute.xlu0 %816
    %v819 = vmul.f32 %v812, %v817
    %821 = vrot.lane.b32.xlu0 %v819, 32
    %v822 = vpop.permute.xlu0 %821
    %v824 = vadd.f32 %v814, %v822
    %v825 = vtanh.pop %v824
    %827 = vrot.lane.b32.xlu0 %v825, 64
    %v828 = vpop.permute.xlu0 %827
    %v830 = vmul.f32 %v812, %v828
    %832 = vrot.lane.b32.xlu0 %v830, 64
    %v833 = vpop.permute.xlu0 %832
    %835 = vst.msk [vmem:[#allocation2 + $0x20] sm:$0xff] %vm438, %v833
    %v836 = vsel %vm298, %v766, 0
    %838 = vmatpush.msra.mxu0 0.0
    %839 = vmatpush.msra.mxu0 0.0
    %840 = vmatpush.msra.mxu0 0.0
    %841 = vmatpush.msra.mxu0 0.0
    %842 = vmatpush.msra.mxu0 0.0
    %843 = vmatpush.msra.mxu0 0.0
    %844 = vmatpush.msra.mxu0 0.0
    %845 = vmatpush.msra.mxu0 0.0
    %846 = vmatpush.msra.mxu0 0.0
    %847 = vmatpush.msra.mxu0 0.0
    %848 = vmatpush.msra.mxu0 0.0
    %849 = vmatpush.msra.mxu0 0.0
    %850 = vmatpush.msra.mxu0 %v166
    %851 = vmatpush.msra.mxu0 %v165
    %852 = vmatpush.msra.mxu0 %v164
    %853 = vmatpush.msra.mxu0 %v163
    %854 = vmatmul.f32.gmra.mxu0 %v836
    %v855 = vpop.f32.mrf.mxu0
    %v856 = vadd.f32 0.0, %v855
    %857 = vdwg.mxu0
    %v858 = vadd.f32 %v226, %v856
    %v859 = vxor.u32 %v858, 2147483648
    %v860 = vmul.f32 %v859, 1.442695
    %v861 = vpow.pop %v860
    %v862 = vadd.f32 %v861, 1.0
    %v863 = vrcp.pop %v862
    %v864 = vmul.f32 %v862, %v863
    %v865 = vsub.f32 1.0, %v864
    %v866 = vmul.f32 %v863, %v865
    %v867 = vadd.f32 %v863, %v866
    %vm868 = vweird.f32 %v862
    %vm869 = vweird.f32 %v863
    %vm870 = vmor %vm868, %vm869
    %v871 = vsel %vm870, %v863, %v867
    %v872 = vand.u32 2147483647, %v862
    %vm873 = vcmp.eq.f32.partialorder %v872, 8.507059e+37
    %v874 = vand.u32 %v862, 2147483648
    %v875 = vor.u32 1.1754944e-38, %v874
    %v876 = vsel %vm873, %v875, %v871
    %v877 = vmul.f32 1.0, %v876
    %v878 = vtanh.pop %v858
    %v879 = vmul.f32 %v877, %v757
    %881 = vrot.lane.b32.xlu0 %v878, 64
    %v882 = vpop.permute.xlu0 %881
    %v884 = vmul.f32 %v877, %v882
    %886 = vrot.lane.b32.xlu0 %v884, 32
    %v887 = vpop.permute.xlu0 %886
    %v889 = vadd.f32 %v879, %v887
    %v890 = vtanh.pop %v889
    %892 = vrot.lane.b32.xlu0 %v890, 64
    %v893 = vpop.permute.xlu0 %892
    %v895 = vmul.f32 %v877, %v893
    %897 = vrot.lane.b32.xlu0 %v895, 32
    %v898 = vpop.permute.xlu0 %897
    %900 = vst.msk [vmem:[#allocation2 + $0x20] sm:$0xff] %vm298, %v898
    %901 = vrot.lane.b32.xlu0 %v830, 32
    %v902 = vpop.permute.xlu0 %901
    %v903 = vsel %vm298, %v902, 0
    %905 = vmatpush.msra.mxu0 0.0
    %906 = vmatpush.msra.mxu0 0.0
    %907 = vmatpush.msra.mxu0 0.0
    %908 = vmatpush.msra.mxu0 0.0
    %909 = vmatpush.msra.mxu0 0.0
    %910 = vmatpush.msra.mxu0 0.0
    %911 = vmatpush.msra.mxu0 0.0
    %912 = vmatpush.msra.mxu0 0.0
    %913 = vmatpush.msra.mxu0 0.0
    %914 = vmatpush.msra.mxu0 0.0
    %915 = vmatpush.msra.mxu0 0.0
    %916 = vmatpush.msra.mxu0 0.0
    %917 = vmatpush.msra.mxu0 %v250
    %918 = vmatpush.msra.mxu0 %v249
    %919 = vmatpush.msra.mxu0 %v248
    %920 = vmatpush.msra.mxu0 %v247
    %921 = vmatmul.f32.gmra.mxu0 %v903
    %v922 = vpop.f32.mrf.mxu0
    %v923 = vadd.f32 0.0, %v922
    %924 = vdwg.mxu0
    %v925 = vadd.f32 %v282, %v923
    %v926 = vxor.u32 %v925, 2147483648
    %v927 = vmul.f32 %v926, 1.442695
    %v928 = vpow.pop %v927
    %v929 = vadd.f32 %v928, 1.0
    %v930 = vrcp.pop %v929
    %v931 = vmul.f32 %v929, %v930
    %v932 = vsub.f32 1.0, %v931
    %v933 = vmul.f32 %v930, %v932
    %v934 = vadd.f32 %v930, %v933
    %vm935 = vweird.f32 %v929
    %vm936 = vweird.f32 %v930
    %vm937 = vmor %vm935, %vm936
    %v938 = vsel %vm937, %v930, %v934
    %v939 = vand.u32 2147483647, %v929
    %vm940 = vcmp.eq.f32.partialorder %v939, 8.507059e+37
    %v941 = vand.u32 %v929, 2147483648
    %v942 = vor.u32 1.1754944e-38, %v941
    %v943 = vsel %vm940, %v942, %v938
    %v944 = vmul.f32 1.0, %v943
    %v945 = vtanh.pop %v925
    %v946 = vmul.f32 %v944, %v824
    %948 = vrot.lane.b32.xlu0 %v945, 64
    %v949 = vpop.permute.xlu0 %948
    %v951 = vmul.f32 %v944, %v949
    %953 = vrot.lane.b32.xlu0 %v951, 32
    %v954 = vpop.permute.xlu0 %953
    %v956 = vadd.f32 %v946, %v954
    %v957 = vtanh.pop %v956
    %959 = vrot.lane.b32.xlu0 %v957, 64
    %v960 = vpop.permute.xlu0 %959
    %v962 = vmul.f32 %v944, %v960
    %964 = vrot.lane.b32.xlu0 %v962, 64
    %v965 = vpop.permute.xlu0 %964
    %967 = vst.msk [vmem:[#allocation2 + $0x18] sm:$0xff] %vm438, %v965
    %v968 = vsel %vm298, %v898, 0
    %970 = vmatpush.msra.mxu0 0.0
    %971 = vmatpush.msra.mxu0 0.0
    %972 = vmatpush.msra.mxu0 0.0
    %973 = vmatpush.msra.mxu0 0.0
    %974 = vmatpush.msra.mxu0 0.0
    %975 = vmatpush.msra.mxu0 0.0
    %976 = vmatpush.msra.mxu0 0.0
    %977 = vmatpush.msra.mxu0 0.0
    %978 = vmatpush.msra.mxu0 0.0
    %979 = vmatpush.msra.mxu0 0.0
    %980 = vmatpush.msra.mxu0 0.0
    %981 = vmatpush.msra.mxu0 0.0
    %982 = vmatpush.msra.mxu0 %v166
    %983 = vmatpush.msra.mxu0 %v165
    %984 = vmatpush.msra.mxu0 %v164
    %985 = vmatpush.msra.mxu0 %v163
    %986 = vmatmul.f32.gmra.mxu0 %v968
    %v987 = vpop.f32.mrf.mxu0
    %v988 = vadd.f32 0.0, %v987
    %989 = vdwg.mxu0
    %v990 = vadd.f32 %v229, %v988
    %v991 = vxor.u32 %v990, 2147483648
    %v992 = vmul.f32 %v991, 1.442695
    %v993 = vpow.pop %v992
    %v994 = vadd.f32 %v993, 1.0
    %v995 = vrcp.pop %v994
    %v996 = vmul.f32 %v994, %v995
    %v997 = vsub.f32 1.0, %v996
    %v998 = vmul.f32 %v995, %v997
    %v999 = vadd.f32 %v995, %v998
    %vm1000 = vweird.f32 %v994
    %vm1001 = vweird.f32 %v995
    %vm1002 = vmor %vm1000, %vm1001
    %v1003 = vsel %vm1002, %v995, %v999
    %v1004 = vand.u32 2147483647, %v994
    %vm1005 = vcmp.eq.f32.partialorder %v1004, 8.507059e+37
    %v1006 = vand.u32 %v994, 2147483648
    %v1007 = vor.u32 1.1754944e-38, %v1006
    %v1008 = vsel %vm1005, %v1007, %v1003
    %v1009 = vmul.f32 1.0, %v1008
    %v1010 = vtanh.pop %v990
    %v1011 = vmul.f32 %v1009, %v889
    %1013 = vrot.lane.b32.xlu0 %v1010, 64
    %v1014 = vpop.permute.xlu0 %1013
    %v1016 = vmul.f32 %v1009, %v1014
    %1018 = vrot.lane.b32.xlu0 %v1016, 32
    %v1019 = vpop.permute.xlu0 %1018
    %v1021 = vadd.f32 %v1011, %v1019
    %v1022 = vtanh.pop %v1021
    %1024 = vrot.lane.b32.xlu0 %v1022, 64
    %v1025 = vpop.permute.xlu0 %1024
    %v1027 = vmul.f32 %v1009, %v1025
    %1029 = vrot.lane.b32.xlu0 %v1027, 32
    %v1030 = vpop.permute.xlu0 %1029
    %1032 = vst.msk [vmem:[#allocation2 + $0x28] sm:$0xff] %vm298, %v1030
    %1033 = vrot.lane.b32.xlu0 %v962, 32
    %v1034 = vpop.permute.xlu0 %1033
    %v1035 = vsel %vm298, %v1034, 0
    %1037 = vmatpush.msra.mxu0 0.0
    %1038 = vmatpush.msra.mxu0 0.0
    %1039 = vmatpush.msra.mxu0 0.0
    %1040 = vmatpush.msra.mxu0 0.0
    %1041 = vmatpush.msra.mxu0 0.0
    %1042 = vmatpush.msra.mxu0 0.0
    %1043 = vmatpush.msra.mxu0 0.0
    %1044 = vmatpush.msra.mxu0 0.0
    %1045 = vmatpush.msra.mxu0 0.0
    %1046 = vmatpush.msra.mxu0 0.0
    %1047 = vmatpush.msra.mxu0 0.0
    %1048 = vmatpush.msra.mxu0 0.0
    %1049 = vmatpush.msra.mxu0 %v250
    %1050 = vmatpush.msra.mxu0 %v249
    %1051 = vmatpush.msra.mxu0 %v248
    %1052 = vmatpush.msra.mxu0 %v247
    %1053 = vmatmul.f32.gmra.mxu0 %v1035
    %v1054 = vpop.f32.mrf.mxu0
    %v1055 = vadd.f32 0.0, %v1054
    %1056 = vdwg.mxu0
    %v1057 = vadd.f32 %v279, %v1055
    %v1058 = vxor.u32 %v1057, 2147483648
    %v1059 = vmul.f32 %v1058, 1.442695
    %v1060 = vpow.pop %v1059
    %v1061 = vadd.f32 %v1060, 1.0
    %v1062 = vrcp.pop %v1061
    %v1063 = vmul.f32 %v1061, %v1062
    %v1064 = vsub.f32 1.0, %v1063
    %v1065 = vmul.f32 %v1062, %v1064
    %v1066 = vadd.f32 %v1062, %v1065
    %vm1067 = vweird.f32 %v1061
    %vm1068 = vweird.f32 %v1062
    %vm1069 = vmor %vm1067, %vm1068
    %v1070 = vsel %vm1069, %v1062, %v1066
    %v1071 = vand.u32 2147483647, %v1061
    %vm1072 = vcmp.eq.f32.partialorder %v1071, 8.507059e+37
    %v1073 = vand.u32 %v1061, 2147483648
    %v1074 = vor.u32 1.1754944e-38, %v1073
    %v1075 = vsel %vm1072, %v1074, %v1070
    %v1076 = vmul.f32 1.0, %v1075
    %v1077 = vtanh.pop %v1057
    %v1078 = vmul.f32 %v1076, %v956
    %1080 = vrot.lane.b32.xlu0 %v1077, 64
    %v1081 = vpop.permute.xlu0 %1080
    %v1083 = vmul.f32 %v1076, %v1081
    %1085 = vrot.lane.b32.xlu0 %v1083, 32
    %v1086 = vpop.permute.xlu0 %1085
    %v1088 = vadd.f32 %v1078, %v1086
    %v1089 = vtanh.pop %v1088
    %1091 = vrot.lane.b32.xlu0 %v1089, 64
    %v1092 = vpop.permute.xlu0 %1091
    %v1094 = vmul.f32 %v1076, %v1092
    %1096 = vrot.lane.b32.xlu0 %v1094, 64
    %v1097 = vpop.permute.xlu0 %1096
    %1099 = vst.msk [vmem:[#allocation2 + $0x10] sm:$0xff] %vm438, %v1097
    %v1100 = vsel %vm298, %v1030, 0
    %1102 = vmatpush.msra.mxu0 0.0
    %1103 = vmatpush.msra.mxu0 0.0
    %1104 = vmatpush.msra.mxu0 0.0
    %1105 = vmatpush.msra.mxu0 0.0
    %1106 = vmatpush.msra.mxu0 0.0
    %1107 = vmatpush.msra.mxu0 0.0
    %1108 = vmatpush.msra.mxu0 0.0
    %1109 = vmatpush.msra.mxu0 0.0
    %1110 = vmatpush.msra.mxu0 0.0
    %1111 = vmatpush.msra.mxu0 0.0
    %1112 = vmatpush.msra.mxu0 0.0
    %1113 = vmatpush.msra.mxu0 0.0
    %1114 = vmatpush.msra.mxu0 %v166
    %1115 = vmatpush.msra.mxu0 %v165
    %1116 = vmatpush.msra.mxu0 %v164
    %1117 = vmatpush.msra.mxu0 %v163
    %1118 = vmatmul.f32.gmra.mxu0 %v1100
    %v1119 = vpop.f32.mrf.mxu0
    %v1120 = vadd.f32 0.0, %v1119
    %1121 = vdwg.mxu0
    %v1122 = vadd.f32 %v232, %v1120
    %v1123 = vxor.u32 %v1122, 2147483648
    %v1124 = vmul.f32 %v1123, 1.442695
    %v1125 = vpow.pop %v1124
    %v1126 = vadd.f32 %v1125, 1.0
    %v1127 = vrcp.pop %v1126
    %v1128 = vmul.f32 %v1126, %v1127
    %v1129 = vsub.f32 1.0, %v1128
    %v1130 = vmul.f32 %v1127, %v1129
    %v1131 = vadd.f32 %v1127, %v1130
    %vm1132 = vweird.f32 %v1126
    %vm1133 = vweird.f32 %v1127
    %vm1134 = vmor %vm1132, %vm1133
    %v1135 = vsel %vm1134, %v1127, %v1131
    %v1136 = vand.u32 2147483647, %v1126
    %vm1137 = vcmp.eq.f32.partialorder %v1136, 8.507059e+37
    %v1138 = vand.u32 %v1126, 2147483648
    %v1139 = vor.u32 1.1754944e-38, %v1138
    %v1140 = vsel %vm1137, %v1139, %v1135
    %v1141 = vmul.f32 1.0, %v1140
    %v1142 = vtanh.pop %v1122
    %v1143 = vmul.f32 %v1141, %v1021
    %1145 = vrot.lane.b32.xlu0 %v1142, 64
    %v1146 = vpop.permute.xlu0 %1145
    %v1148 = vmul.f32 %v1141, %v1146
    %1150 = vrot.lane.b32.xlu0 %v1148, 32
    %v1151 = vpop.permute.xlu0 %1150
    %v1153 = vadd.f32 %v1143, %v1151
    %v1154 = vtanh.pop %v1153
    %1156 = vrot.lane.b32.xlu0 %v1154, 64
    %v1157 = vpop.permute.xlu0 %1156
    %v1159 = vmul.f32 %v1141, %v1157
    %1161 = vrot.lane.b32.xlu0 %v1159, 32
    %v1162 = vpop.permute.xlu0 %1161
    %1164 = vst.msk [vmem:[#allocation2 + $0x30] sm:$0xff] %vm298, %v1162
    %1165 = vrot.lane.b32.xlu0 %v1094, 32
    %v1166 = vpop.permute.xlu0 %1165
    %v1167 = vsel %vm298, %v1166, 0
    %1169 = vmatpush.msra.mxu0 0.0
    %1170 = vmatpush.msra.mxu0 0.0
    %1171 = vmatpush.msra.mxu0 0.0
    %1172 = vmatpush.msra.mxu0 0.0
    %1173 = vmatpush.msra.mxu0 0.0
    %1174 = vmatpush.msra.mxu0 0.0
    %1175 = vmatpush.msra.mxu0 0.0
    %1176 = vmatpush.msra.mxu0 0.0
    %1177 = vmatpush.msra.mxu0 0.0
    %1178 = vmatpush.msra.mxu0 0.0
    %1179 = vmatpush.msra.mxu0 0.0
    %1180 = vmatpush.msra.mxu0 0.0
    %1181 = vmatpush.msra.mxu0 %v250
    %1182 = vmatpush.msra.mxu0 %v249
    %1183 = vmatpush.msra.mxu0 %v248
    %1184 = vmatpush.msra.mxu0 %v247
    %1185 = vmatmul.f32.gmra.mxu0 %v1167
    %v1186 = vpop.f32.mrf.mxu0
    %v1187 = vadd.f32 0.0, %v1186
    %1188 = vdwg.mxu0
    %v1189 = vadd.f32 %v276, %v1187
    %v1190 = vxor.u32 %v1189, 2147483648
    %v1191 = vmul.f32 %v1190, 1.442695
    %v1192 = vpow.pop %v1191
    %v1193 = vadd.f32 %v1192, 1.0
    %v1194 = vrcp.pop %v1193
    %v1195 = vmul.f32 %v1193, %v1194
    %v1196 = vsub.f32 1.0, %v1195
    %v1197 = vmul.f32 %v1194, %v1196
    %v1198 = vadd.f32 %v1194, %v1197
    %vm1199 = vweird.f32 %v1193
    %vm1200 = vweird.f32 %v1194
    %vm1201 = vmor %vm1199, %vm1200
    %v1202 = vsel %vm1201, %v1194, %v1198
    %v1203 = vand.u32 2147483647, %v1193
    %vm1204 = vcmp.eq.f32.partialorder %v1203, 8.507059e+37
    %v1205 = vand.u32 %v1193, 2147483648
    %v1206 = vor.u32 1.1754944e-38, %v1205
    %v1207 = vsel %vm1204, %v1206, %v1202
    %v1208 = vmul.f32 1.0, %v1207
    %v1209 = vtanh.pop %v1189
    %v1210 = vmul.f32 %v1208, %v1088
    %1212 = vrot.lane.b32.xlu0 %v1209, 64
    %v1213 = vpop.permute.xlu0 %1212
    %v1215 = vmul.f32 %v1208, %v1213
    %1217 = vrot.lane.b32.xlu0 %v1215, 32
    %v1218 = vpop.permute.xlu0 %1217
    %v1220 = vadd.f32 %v1210, %v1218
    %v1221 = vtanh.pop %v1220
    %1223 = vrot.lane.b32.xlu0 %v1221, 64
    %v1224 = vpop.permute.xlu0 %1223
    %v1226 = vmul.f32 %v1208, %v1224
    %1228 = vrot.lane.b32.xlu0 %v1226, 64
    %v1229 = vpop.permute.xlu0 %1228
    %1231 = vst.msk [vmem:[#allocation2 + $0x8] sm:$0xff] %vm438, %v1229
    %v1232 = vsel %vm298, %v1162, 0
    %1234 = vmatpush.msra.mxu0 0.0
    %1235 = vmatpush.msra.mxu0 0.0
    %1236 = vmatpush.msra.mxu0 0.0
    %1237 = vmatpush.msra.mxu0 0.0
    %1238 = vmatpush.msra.mxu0 0.0
    %1239 = vmatpush.msra.mxu0 0.0
    %1240 = vmatpush.msra.mxu0 0.0
    %1241 = vmatpush.msra.mxu0 0.0
    %1242 = vmatpush.msra.mxu0 0.0
    %1243 = vmatpush.msra.mxu0 0.0
    %1244 = vmatpush.msra.mxu0 0.0
    %1245 = vmatpush.msra.mxu0 0.0
    %1246 = vmatpush.msra.mxu0 %v166
    %1247 = vmatpush.msra.mxu0 %v165
    %1248 = vmatpush.msra.mxu0 %v164
    %1249 = vmatpush.msra.mxu0 %v163
    %1250 = vmatmul.f32.gmra.mxu0 %v1232
    %v1251 = vpop.f32.mrf.mxu0
    %v1252 = vadd.f32 0.0, %v1251
    %1253 = vdwg.mxu0
    %v1254 = vadd.f32 %v235, %v1252
    %v1255 = vxor.u32 %v1254, 2147483648
    %v1256 = vmul.f32 %v1255, 1.442695
    %v1257 = vpow.pop %v1256
    %v1258 = vadd.f32 %v1257, 1.0
    %v1259 = vrcp.pop %v1258
    %v1260 = vmul.f32 %v1258, %v1259
    %v1261 = vsub.f32 1.0, %v1260
    %v1262 = vmul.f32 %v1259, %v1261
    %v1263 = vadd.f32 %v1259, %v1262
    %vm1264 = vweird.f32 %v1258
    %vm1265 = vweird.f32 %v1259
    %vm1266 = vmor %vm1264, %vm1265
    %v1267 = vsel %vm1266, %v1259, %v1263
    %v1268 = vand.u32 2147483647, %v1258
    %vm1269 = vcmp.eq.f32.partialorder %v1268, 8.507059e+37
    %v1270 = vand.u32 %v1258, 2147483648
    %v1271 = vor.u32 1.1754944e-38, %v1270
    %v1272 = vsel %vm1269, %v1271, %v1267
    %v1273 = vmul.f32 1.0, %v1272
    %v1274 = vtanh.pop %v1254
    %v1275 = vmul.f32 %v1273, %v1153
    %1277 = vrot.lane.b32.xlu0 %v1274, 64
    %v1278 = vpop.permute.xlu0 %1277
    %v1280 = vmul.f32 %v1273, %v1278
    %1282 = vrot.lane.b32.xlu0 %v1280, 32
    %v1283 = vpop.permute.xlu0 %1282
    %v1285 = vadd.f32 %v1275, %v1283
    %v1286 = vtanh.pop %v1285
    %1288 = vrot.lane.b32.xlu0 %v1286, 64
    %v1289 = vpop.permute.xlu0 %1288
    %v1291 = vmul.f32 %v1273, %v1289
    %1293 = vrot.lane.b32.xlu0 %v1291, 32
    %v1294 = vpop.permute.xlu0 %1293
    %1296 = vst.msk [vmem:[#allocation2 + $0x38] sm:$0xff] %vm298, %v1294
    %1297 = vrot.lane.b32.xlu0 %v1226, 32
    %v1298 = vpop.permute.xlu0 %1297
    %v1299 = vsel %vm298, %v1298, 0
    %1301 = vmatpush.msra.mxu0 0.0
    %1302 = vmatpush.msra.mxu0 0.0
    %1303 = vmatpush.msra.mxu0 0.0
    %1304 = vmatpush.msra.mxu0 0.0
    %1305 = vmatpush.msra.mxu0 0.0
    %1306 = vmatpush.msra.mxu0 0.0
    %1307 = vmatpush.msra.mxu0 0.0
    %1308 = vmatpush.msra.mxu0 0.0
    %1309 = vmatpush.msra.mxu0 0.0
    %1310 = vmatpush.msra.mxu0 0.0
    %1311 = vmatpush.msra.mxu0 0.0
    %1312 = vmatpush.msra.mxu0 0.0
    %1313 = vmatpush.msra.mxu0 %v250
    %1314 = vmatpush.msra.mxu0 %v249
    %1315 = vmatpush.msra.mxu0 %v248
    %1316 = vmatpush.msra.mxu0 %v247
    %1317 = vmatmul.f32.gmra.mxu0 %v1299
    %v1318 = vpop.f32.mrf.mxu0
    %v1319 = vadd.f32 0.0, %v1318
    %1320 = vdwg.mxu0
    %v1321 = vadd.f32 %v273, %v1319
    %v1322 = vxor.u32 %v1321, 2147483648
    %v1323 = vmul.f32 %v1322, 1.442695
    %v1324 = vpow.pop %v1323
    %v1325 = vadd.f32 %v1324, 1.0
    %v1326 = vrcp.pop %v1325
    %v1327 = vmul.f32 %v1325, %v1326
    %v1328 = vsub.f32 1.0, %v1327
    %v1329 = vmul.f32 %v1326, %v1328
    %v1330 = vadd.f32 %v1326, %v1329
    %vm1331 = vweird.f32 %v1325
    %vm1332 = vweird.f32 %v1326
    %vm1333 = vmor %vm1331, %vm1332
    %v1334 = vsel %vm1333, %v1326, %v1330
    %v1335 = vand.u32 2147483647, %v1325
    %vm1336 = vcmp.eq.f32.partialorder %v1335, 8.507059e+37
    %v1337 = vand.u32 %v1325, 2147483648
    %v1338 = vor.u32 1.1754944e-38, %v1337
    %v1339 = vsel %vm1336, %v1338, %v1334
    %v1340 = vmul.f32 1.0, %v1339
    %v1341 = vtanh.pop %v1321
    %v1342 = vmul.f32 %v1340, %v1220
    %1344 = vrot.lane.b32.xlu0 %v1341, 64
    %v1345 = vpop.permute.xlu0 %1344
    %v1347 = vmul.f32 %v1340, %v1345
    %1349 = vrot.lane.b32.xlu0 %v1347, 32
    %v1350 = vpop.permute.xlu0 %1349
    %v1352 = vadd.f32 %v1342, %v1350
    %v1353 = vtanh.pop %v1352
    %1355 = vrot.lane.b32.xlu0 %v1353, 64
    %v1356 = vpop.permute.xlu0 %1355
    %v1358 = vmul.f32 %v1340, %v1356
    %1360 = vrot.lane.b32.xlu0 %v1358, 64
    %v1361 = vpop.permute.xlu0 %1360
    %1363 = vst.msk [vmem:[#allocation2] sm:$0xff] %vm438, %v1361
    %1364 = vst.msk [vmem:[%s16] sm:$0xff] %vm298, %v1294
    %1366 = vrot.lane.b32.xlu0 %v1285, 96
    %v1367 = vpop.permute.xlu0 %1366
    %1369 = vst.msk [vmem:[%s17] sm:$0xff] %vm298, %v1367
    %1370 = vrot.lane.b32.xlu0 %v1358, 32
    %v1371 = vpop.permute.xlu0 %1370
    %1373 = vst.msk [vmem:[%s16 + $0x8] sm:$0xff] %vm298, %v1371
    %1375 = vrot.lane.b32.xlu0 %v1352, 96
    %v1376 = vpop.permute.xlu0 %1375
    %1378 = vst.msk [vmem:[%s17 + $0x8] sm:$0xff] %vm298, %v1376
    %v1379 = vld [vmem:[#allocation2] sm:$0xff]
    %v1380 = vld [vmem:[#allocation2 + $0x8] sm:$0xff]
    %v1381 = vld [vmem:[#allocation2 + $0x10] sm:$0xff]
    %v1382 = vld [vmem:[#allocation2 + $0x18] sm:$0xff]
    %v1383 = vld [vmem:[#allocation2 + $0x20] sm:$0xff]
    %v1384 = vld [vmem:[#allocation2 + $0x28] sm:$0xff]
    %v1385 = vld [vmem:[#allocation2 + $0x30] sm:$0xff]
    %v1386 = vld [vmem:[#allocation2 + $0x38] sm:$0xff]
    %v1387 = vld [vmem:[#allocation7] sm:$0xff]
    %v1388 = vld [vmem:[#allocation7 + $0x8] sm:$0xff]
    %v1389 = vld [vmem:[#allocation7 + $0x10] sm:$0xff]
    %v1390 = vld [vmem:[#allocation7 + $0x18] sm:$0xff]
    %v1391 = vld [vmem:[#allocation7 + $0x20] sm:$0xff]
    %v1392 = vld [vmem:[#allocation7 + $0x28] sm:$0xff]
    %v1393 = vld [vmem:[#allocation7 + $0x30] sm:$0xff]
    %v1394 = vld [vmem:[#allocation7 + $0x38] sm:$0xff]
    %v1395 = vld [vmem:[#allocation8] sm:$0xff]
    %v1396 = vld [vmem:[#allocation8 + $0x8] sm:$0xff]
    %v1397 = vld [vmem:[#allocation8 + $0x10] sm:$0xff]
    %v1398 = vld [vmem:[#allocation8 + $0x18] sm:$0xff]
    %v1399 = vld [vmem:[%s11] sm:$0x1]
    %v1401 = vperm.slane %v1399, 0
    %v1404 = vsel %vm171, %v1379, 0
    %v1407 = vsel %vm171, %v1380, 0
    %v1410 = vsel %vm171, %v1381, 0
    %v1413 = vsel %vm171, %v1382, 0
    %v1416 = vsel %vm171, %v1383, 0
    %v1419 = vsel %vm171, %v1384, 0
    %v1422 = vsel %vm171, %v1385, 0
    %v1425 = vsel %vm171, %v1386, 0
    %1427 = vmatpush.msra.mxu0 0.0
    %1428 = vmatpush.msra.mxu0 0.0
    %1429 = vmatpush.msra.mxu0 0.0
    %1430 = vmatpush.msra.mxu0 0.0
    %1431 = vmatpush.msra.mxu0 0.0
    %1432 = vmatpush.msra.mxu0 0.0
    %1433 = vmatpush.msra.mxu0 0.0
    %1434 = vmatpush.msra.mxu0 0.0
    %1435 = vmatpush.msra.mxu0 %v1394
    %1436 = vmatpush.msra.mxu0 %v1393
    %1437 = vmatpush.msra.mxu0 %v1392
    %1438 = vmatpush.msra.mxu0 %v1391
    %1439 = vmatpush.msra.mxu0 %v1390
    %1440 = vmatpush.msra.mxu0 %v1389
    %1441 = vmatpush.msra.mxu0 %v1388
    %1442 = vmatpush.msra.mxu0 %v1387
    %1443 = vmatmul.f32.gmra.mxu0 %v1404
    %v1444 = vpop.f32.mrf.mxu0
    %v1445 = vadd.f32 %v1401, %v1444
    %1446 = vmatmul.f32.gmra.mxu0 %v1407
    %v1447 = vpop.f32.mrf.mxu0
    %v1448 = vadd.f32 %v1401, %v1447
    %1449 = vmatmul.f32.gmra.mxu0 %v1410
    %v1450 = vpop.f32.mrf.mxu0
    %v1451 = vadd.f32 %v1401, %v1450
    %1452 = vmatmul.f32.gmra.mxu0 %v1413
    %v1453 = vpop.f32.mrf.mxu0
    %v1454 = vadd.f32 %v1401, %v1453
    %1455 = vmatmul.f32.gmra.mxu0 %v1416
    %v1456 = vpop.f32.mrf.mxu0
    %v1457 = vadd.f32 %v1401, %v1456
    %1458 = vmatmul.f32.gmra.mxu0 %v1419
    %v1459 = vpop.f32.mrf.mxu0
    %v1460 = vadd.f32 %v1401, %v1459
    %1461 = vmatmul.f32.gmra.mxu0 %v1422
    %v1462 = vpop.f32.mrf.mxu0
    %v1463 = vadd.f32 %v1401, %v1462
    %1464 = vmatmul.f32.gmra.mxu0 %v1425
    %v1465 = vpop.f32.mrf.mxu0
    %v1466 = vadd.f32 %v1401, %v1465
    %1467 = vdwg.mxu0
    %v1468 = vld [vmem:[%s1 + $0x10] sm:$0xff]
    %v1469 = vld [vmem:[%s2 + $0x10] sm:$0xff]
    %v1470 = vld [vmem:[#allocation10] sm:$0xff]
    %v1471 = vld [vmem:[#allocation10 + $0x8] sm:$0xff]
    %v1472 = vld [vmem:[#allocation10 + $0x10] sm:$0xff]
    %v1473 = vld [vmem:[#allocation10 + $0x18] sm:$0xff]
    %v1474 = vld [vmem:[#allocation10 + $0x20] sm:$0xff]
    %v1475 = vld [vmem:[#allocation10 + $0x28] sm:$0xff]
    %v1476 = vld [vmem:[#allocation10 + $0x30] sm:$0xff]
    %v1477 = vld [vmem:[#allocation10 + $0x38] sm:$0xff]
    %v1478 = vld [vmem:[#allocation11] sm:$0xff]
    %v1479 = vld [vmem:[#allocation11 + $0x8] sm:$0xff]
    %v1480 = vld [vmem:[#allocation11 + $0x10] sm:$0xff]
    %v1481 = vld [vmem:[#allocation11 + $0x18] sm:$0xff]
    %v1482 = vld [vmem:[%s14] sm:$0x1]
    %v1484 = vperm.slane %v1482, 0
    %1486 = vmatpush.msra.mxu0 0.0
    %1487 = vmatpush.msra.mxu0 0.0
    %1488 = vmatpush.msra.mxu0 0.0
    %1489 = vmatpush.msra.mxu0 0.0
    %1490 = vmatpush.msra.mxu0 0.0
    %1491 = vmatpush.msra.mxu0 0.0
    %1492 = vmatpush.msra.mxu0 0.0
    %1493 = vmatpush.msra.mxu0 0.0
    %1494 = vmatpush.msra.mxu0 %v1477
    %1495 = vmatpush.msra.mxu0 %v1476
    %1496 = vmatpush.msra.mxu0 %v1475
    %1497 = vmatpush.msra.mxu0 %v1474
    %1498 = vmatpush.msra.mxu0 %v1473
    %1499 = vmatpush.msra.mxu0 %v1472
    %1500 = vmatpush.msra.mxu0 %v1471
    %1501 = vmatpush.msra.mxu0 %v1470
    %1502 = vmatmul.f32.gmra.mxu0 %v1404
    %v1503 = vpop.f32.mrf.mxu0
    %v1504 = vadd.f32 %v1484, %v1503
    %1505 = vmatmul.f32.gmra.mxu0 %v1407
    %v1506 = vpop.f32.mrf.mxu0
    %v1507 = vadd.f32 %v1484, %v1506
    %1508 = vmatmul.f32.gmra.mxu0 %v1410
    %v1509 = vpop.f32.mrf.mxu0
    %v1510 = vadd.f32 %v1484, %v1509
    %1511 = vmatmul.f32.gmra.mxu0 %v1413
    %v1512 = vpop.f32.mrf.mxu0
    %v1513 = vadd.f32 %v1484, %v1512
    %1514 = vmatmul.f32.gmra.mxu0 %v1416
    %v1515 = vpop.f32.mrf.mxu0
    %v1516 = vadd.f32 %v1484, %v1515
    %1517 = vmatmul.f32.gmra.mxu0 %v1419
    %v1518 = vpop.f32.mrf.mxu0
    %v1519 = vadd.f32 %v1484, %v1518
    %1520 = vmatmul.f32.gmra.mxu0 %v1422
    %v1521 = vpop.f32.mrf.mxu0
    %v1522 = vadd.f32 %v1484, %v1521
    %1523 = vmatmul.f32.gmra.mxu0 %v1425
    %v1524 = vpop.f32.mrf.mxu0
    %v1525 = vadd.f32 %v1484, %v1524
    %1526 = vdwg.mxu0
    %v1527 = vld [vmem:[%s1 + $0x18] sm:$0xff]
    %v1528 = vld [vmem:[%s2 + $0x18] sm:$0xff]
    %v1530 = vsel %vm298, %v1468, 0
    %1532 = vmatpush.msra.mxu0 0.0
    %1533 = vmatpush.msra.mxu0 0.0
    %1534 = vmatpush.msra.mxu0 0.0
    %1535 = vmatpush.msra.mxu0 0.0
    %1536 = vmatpush.msra.mxu0 0.0
    %1537 = vmatpush.msra.mxu0 0.0
    %1538 = vmatpush.msra.mxu0 0.0
    %1539 = vmatpush.msra.mxu0 0.0
    %1540 = vmatpush.msra.mxu0 0.0
    %1541 = vmatpush.msra.mxu0 0.0
    %1542 = vmatpush.msra.mxu0 0.0
    %1543 = vmatpush.msra.mxu0 0.0
    %1544 = vmatpush.msra.mxu0 %v1398
    %1545 = vmatpush.msra.mxu0 %v1397
    %1546 = vmatpush.msra.mxu0 %v1396
    %1547 = vmatpush.msra.mxu0 %v1395
    %1548 = vmatmul.f32.gmra.mxu0 %v1530
    %v1549 = vpop.f32.mrf.mxu0
    %v1550 = vadd.f32 0.0, %v1549
    %1551 = vdwg.mxu0
    %v1552 = vadd.f32 %v1445, %v1550
    %v1553 = vxor.u32 %v1552, 2147483648
    %v1554 = vmul.f32 %v1553, 1.442695
    %v1555 = vpow.pop %v1554
    %v1556 = vadd.f32 %v1555, 1.0
    %v1557 = vrcp.pop %v1556
    %v1558 = vmul.f32 %v1556, %v1557
    %v1559 = vsub.f32 1.0, %v1558
    %v1560 = vmul.f32 %v1557, %v1559
    %v1561 = vadd.f32 %v1557, %v1560
    %vm1562 = vweird.f32 %v1556
    %vm1563 = vweird.f32 %v1557
    %vm1564 = vmor %vm1562, %vm1563
    %v1565 = vsel %vm1564, %v1557, %v1561
    %v1566 = vand.u32 2147483647, %v1556
    %vm1567 = vcmp.eq.f32.partialorder %v1566, 8.507059e+37
    %v1568 = vand.u32 %v1556, 2147483648
    %v1569 = vor.u32 1.1754944e-38, %v1568
    %v1570 = vsel %vm1567, %v1569, %v1565
    %v1571 = vmul.f32 1.0, %v1570
    %v1572 = vtanh.pop %v1552
    %1574 = vrot.lane.b32.xlu0 %v1469, 32
    %v1575 = vpop.permute.xlu0 %1574
    %v1577 = vmul.f32 %v1571, %v1575
    %1579 = vrot.lane.b32.xlu0 %v1572, 64
    %v1580 = vpop.permute.xlu0 %1579
    %v1582 = vmul.f32 %v1571, %v1580
    %1584 = vrot.lane.b32.xlu0 %v1582, 32
    %v1585 = vpop.permute.xlu0 %1584
    %v1587 = vadd.f32 %v1577, %v1585
    %v1588 = vtanh.pop %v1587
    %1590 = vrot.lane.b32.xlu0 %v1588, 64
    %v1591 = vpop.permute.xlu0 %1590
    %v1593 = vmul.f32 %v1571, %v1591
    %1595 = vrot.lane.b32.xlu0 %v1593, 32
    %v1596 = vpop.permute.xlu0 %1595
    %1598 = vst.msk [vmem:[%s15] sm:$0xff] %vm298, %v1596
    %v1600 = vsel %vm298, %v1527, 0
    %1602 = vmatpush.msra.mxu0 0.0
    %1603 = vmatpush.msra.mxu0 0.0
    %1604 = vmatpush.msra.mxu0 0.0
    %1605 = vmatpush.msra.mxu0 0.0
    %1606 = vmatpush.msra.mxu0 0.0
    %1607 = vmatpush.msra.mxu0 0.0
    %1608 = vmatpush.msra.mxu0 0.0
    %1609 = vmatpush.msra.mxu0 0.0
    %1610 = vmatpush.msra.mxu0 0.0
    %1611 = vmatpush.msra.mxu0 0.0
    %1612 = vmatpush.msra.mxu0 0.0
    %1613 = vmatpush.msra.mxu0 0.0
    %1614 = vmatpush.msra.mxu0 %v1481
    %1615 = vmatpush.msra.mxu0 %v1480
    %1616 = vmatpush.msra.mxu0 %v1479
    %1617 = vmatpush.msra.mxu0 %v1478
    %1618 = vmatmul.f32.gmra.mxu0 %v1600
    %v1619 = vpop.f32.mrf.mxu0
    %v1620 = vadd.f32 0.0, %v1619
    %1621 = vdwg.mxu0
    %v1622 = vadd.f32 %v1525, %v1620
    %v1623 = vxor.u32 %v1622, 2147483648
    %v1624 = vmul.f32 %v1623, 1.442695
    %v1625 = vpow.pop %v1624
    %v1626 = vadd.f32 %v1625, 1.0
    %v1627 = vrcp.pop %v1626
    %v1628 = vmul.f32 %v1626, %v1627
    %v1629 = vsub.f32 1.0, %v1628
    %v1630 = vmul.f32 %v1627, %v1629
    %v1631 = vadd.f32 %v1627, %v1630
    %vm1632 = vweird.f32 %v1626
    %vm1633 = vweird.f32 %v1627
    %vm1634 = vmor %vm1632, %vm1633
    %v1635 = vsel %vm1634, %v1627, %v1631
    %v1636 = vand.u32 2147483647, %v1626
    %vm1637 = vcmp.eq.f32.partialorder %v1636, 8.507059e+37
    %v1638 = vand.u32 %v1626, 2147483648
    %v1639 = vor.u32 1.1754944e-38, %v1638
    %v1640 = vsel %vm1637, %v1639, %v1635
    %v1641 = vmul.f32 1.0, %v1640
    %v1642 = vtanh.pop %v1622
    %1644 = vrot.lane.b32.xlu0 %v1528, 32
    %v1645 = vpop.permute.xlu0 %1644
    %v1647 = vmul.f32 %v1641, %v1645
    %1649 = vrot.lane.b32.xlu0 %v1642, 64
    %v1650 = vpop.permute.xlu0 %1649
    %v1652 = vmul.f32 %v1641, %v1650
    %1654 = vrot.lane.b32.xlu0 %v1652, 32
    %v1655 = vpop.permute.xlu0 %1654
    %v1657 = vadd.f32 %v1647, %v1655
    %v1658 = vtanh.pop %v1657
    %1660 = vrot.lane.b32.xlu0 %v1658, 64
    %v1661 = vpop.permute.xlu0 %1660
    %v1663 = vmul.f32 %v1641, %v1661
    %1665 = vrot.lane.b32.xlu0 %v1663, 64
    %v1666 = vpop.permute.xlu0 %1665
    %1668 = vst.msk [vmem:[%s15 + $0x38] sm:$0xff] %vm438, %v1666
    %v1669 = vsel %vm298, %v1596, 0
    %1671 = vmatpush.msra.mxu0 0.0
    %1672 = vmatpush.msra.mxu0 0.0
    %1673 = vmatpush.msra.mxu0 0.0
    %1674 = vmatpush.msra.mxu0 0.0
    %1675 = vmatpush.msra.mxu0 0.0
    %1676 = vmatpush.msra.mxu0 0.0
    %1677 = vmatpush.msra.mxu0 0.0
    %1678 = vmatpush.msra.mxu0 0.0
    %1679 = vmatpush.msra.mxu0 0.0
    %1680 = vmatpush.msra.mxu0 0.0
    %1681 = vmatpush.msra.mxu0 0.0
    %1682 = vmatpush.msra.mxu0 0.0
    %1683 = vmatpush.msra.mxu0 %v1398
    %1684 = vmatpush.msra.mxu0 %v1397
    %1685 = vmatpush.msra.mxu0 %v1396
    %1686 = vmatpush.msra.mxu0 %v1395
    %1687 = vmatmul.f32.gmra.mxu0 %v1669
    %v1688 = vpop.f32.mrf.mxu0
    %v1689 = vadd.f32 0.0, %v1688
    %1690 = vdwg.mxu0
    %v1691 = vadd.f32 %v1448, %v1689
    %v1692 = vxor.u32 %v1691, 2147483648
    %v1693 = vmul.f32 %v1692, 1.442695
    %v1694 = vpow.pop %v1693
    %v1695 = vadd.f32 %v1694, 1.0
    %v1696 = vrcp.pop %v1695
    %v1697 = vmul.f32 %v1695, %v1696
    %v1698 = vsub.f32 1.0, %v1697
    %v1699 = vmul.f32 %v1696, %v1698
    %v1700 = vadd.f32 %v1696, %v1699
    %vm1701 = vweird.f32 %v1695
    %vm1702 = vweird.f32 %v1696
    %vm1703 = vmor %vm1701, %vm1702
    %v1704 = vsel %vm1703, %v1696, %v1700
    %v1705 = vand.u32 2147483647, %v1695
    %vm1706 = vcmp.eq.f32.partialorder %v1705, 8.507059e+37
    %v1707 = vand.u32 %v1695, 2147483648
    %v1708 = vor.u32 1.1754944e-38, %v1707
    %v1709 = vsel %vm1706, %v1708, %v1704
    %v1710 = vmul.f32 1.0, %v1709
    %v1711 = vtanh.pop %v1691
    %v1712 = vmul.f32 %v1710, %v1587
    %1714 = vrot.lane.b32.xlu0 %v1711, 64
    %v1715 = vpop.permute.xlu0 %1714
    %v1717 = vmul.f32 %v1710, %v1715
    %1719 = vrot.lane.b32.xlu0 %v1717, 32
    %v1720 = vpop.permute.xlu0 %1719
    %v1722 = vadd.f32 %v1712, %v1720
    %v1723 = vtanh.pop %v1722
    %1725 = vrot.lane.b32.xlu0 %v1723, 64
    %v1726 = vpop.permute.xlu0 %1725
    %v1728 = vmul.f32 %v1710, %v1726
    %1730 = vrot.lane.b32.xlu0 %v1728, 32
    %v1731 = vpop.permute.xlu0 %1730
    %1733 = vst.msk [vmem:[%s15 + $0x8] sm:$0xff] %vm298, %v1731
    %1734 = vrot.lane.b32.xlu0 %v1663, 32
    %v1735 = vpop.permute.xlu0 %1734
    %v1736 = vsel %vm298, %v1735, 0
    %1738 = vmatpush.msra.mxu0 0.0
    %1739 = vmatpush.msra.mxu0 0.0
    %1740 = vmatpush.msra.mxu0 0.0
    %1741 = vmatpush.msra.mxu0 0.0
    %1742 = vmatpush.msra.mxu0 0.0
    %1743 = vmatpush.msra.mxu0 0.0
    %1744 = vmatpush.msra.mxu0 0.0
    %1745 = vmatpush.msra.mxu0 0.0
    %1746 = vmatpush.msra.mxu0 0.0
    %1747 = vmatpush.msra.mxu0 0.0
    %1748 = vmatpush.msra.mxu0 0.0
    %1749 = vmatpush.msra.mxu0 0.0
    %1750 = vmatpush.msra.mxu0 %v1481
    %1751 = vmatpush.msra.mxu0 %v1480
    %1752 = vmatpush.msra.mxu0 %v1479
    %1753 = vmatpush.msra.mxu0 %v1478
    %1754 = vmatmul.f32.gmra.mxu0 %v1736
    %v1755 = vpop.f32.mrf.mxu0
    %v1756 = vadd.f32 0.0, %v1755
    %1757 = vdwg.mxu0
    %v1758 = vadd.f32 %v1522, %v1756
    %v1759 = vxor.u32 %v1758, 2147483648
    %v1760 = vmul.f32 %v1759, 1.442695
    %v1761 = vpow.pop %v1760
    %v1762 = vadd.f32 %v1761, 1.0
    %v1763 = vrcp.pop %v1762
    %v1764 = vmul.f32 %v1762, %v1763
    %v1765 = vsub.f32 1.0, %v1764
    %v1766 = vmul.f32 %v1763, %v1765
    %v1767 = vadd.f32 %v1763, %v1766
    %vm1768 = vweird.f32 %v1762
    %vm1769 = vweird.f32 %v1763
    %vm1770 = vmor %vm1768, %vm1769
    %v1771 = vsel %vm1770, %v1763, %v1767
    %v1772 = vand.u32 2147483647, %v1762
    %vm1773 = vcmp.eq.f32.partialorder %v1772, 8.507059e+37
    %v1774 = vand.u32 %v1762, 2147483648
    %v1775 = vor.u32 1.1754944e-38, %v1774
    %v1776 = vsel %vm1773, %v1775, %v1771
    %v1777 = vmul.f32 1.0, %v1776
    %v1778 = vtanh.pop %v1758
    %v1779 = vmul.f32 %v1777, %v1657
    %1781 = vrot.lane.b32.xlu0 %v1778, 64
    %v1782 = vpop.permute.xlu0 %1781
    %v1784 = vmul.f32 %v1777, %v1782
    %1786 = vrot.lane.b32.xlu0 %v1784, 32
    %v1787 = vpop.permute.xlu0 %1786
    %v1789 = vadd.f32 %v1779, %v1787
    %v1790 = vtanh.pop %v1789
    %1792 = vrot.lane.b32.xlu0 %v1790, 64
    %v1793 = vpop.permute.xlu0 %1792
    %v1795 = vmul.f32 %v1777, %v1793
    %1797 = vrot.lane.b32.xlu0 %v1795, 64
    %v1798 = vpop.permute.xlu0 %1797
    %1800 = vst.msk [vmem:[%s15 + $0x30] sm:$0xff] %vm438, %v1798
    %v1801 = vsel %vm298, %v1731, 0
    %1803 = vmatpush.msra.mxu0 0.0
    %1804 = vmatpush.msra.mxu0 0.0
    %1805 = vmatpush.msra.mxu0 0.0
    %1806 = vmatpush.msra.mxu0 0.0
    %1807 = vmatpush.msra.mxu0 0.0
    %1808 = vmatpush.msra.mxu0 0.0
    %1809 = vmatpush.msra.mxu0 0.0
    %1810 = vmatpush.msra.mxu0 0.0
    %1811 = vmatpush.msra.mxu0 0.0
    %1812 = vmatpush.msra.mxu0 0.0
    %1813 = vmatpush.msra.mxu0 0.0
    %1814 = vmatpush.msra.mxu0 0.0
    %1815 = vmatpush.msra.mxu0 %v1398
    %1816 = vmatpush.msra.mxu0 %v1397
    %1817 = vmatpush.msra.mxu0 %v1396
    %1818 = vmatpush.msra.mxu0 %v1395
    %1819 = vmatmul.f32.gmra.mxu0 %v1801
    %v1820 = vpop.f32.mrf.mxu0
    %v1821 = vadd.f32 0.0, %v1820
    %1822 = vdwg.mxu0
    %v1823 = vadd.f32 %v1451, %v1821
    %v1824 = vxor.u32 %v1823, 2147483648
    %v1825 = vmul.f32 %v1824, 1.442695
    %v1826 = vpow.pop %v1825
    %v1827 = vadd.f32 %v1826, 1.0
    %v1828 = vrcp.pop %v1827
    %v1829 = vmul.f32 %v1827, %v1828
    %v1830 = vsub.f32 1.0, %v1829
    %v1831 = vmul.f32 %v1828, %v1830
    %v1832 = vadd.f32 %v1828, %v1831
    %vm1833 = vweird.f32 %v1827
    %vm1834 = vweird.f32 %v1828
    %vm1835 = vmor %vm1833, %vm1834
    %v1836 = vsel %vm1835, %v1828, %v1832
    %v1837 = vand.u32 2147483647, %v1827
    %vm1838 = vcmp.eq.f32.partialorder %v1837, 8.507059e+37
    %v1839 = vand.u32 %v1827, 2147483648
    %v1840 = vor.u32 1.1754944e-38, %v1839
    %v1841 = vsel %vm1838, %v1840, %v1836
    %v1842 = vmul.f32 1.0, %v1841
    %v1843 = vtanh.pop %v1823
    %v1844 = vmul.f32 %v1842, %v1722
    %1846 = vrot.lane.b32.xlu0 %v1843, 64
    %v1847 = vpop.permute.xlu0 %1846
    %v1849 = vmul.f32 %v1842, %v1847
    %1851 = vrot.lane.b32.xlu0 %v1849, 32
    %v1852 = vpop.permute.xlu0 %1851
    %v1854 = vadd.f32 %v1844, %v1852
    %v1855 = vtanh.pop %v1854
    %1857 = vrot.lane.b32.xlu0 %v1855, 64
    %v1858 = vpop.permute.xlu0 %1857
    %v1860 = vmul.f32 %v1842, %v1858
    %1862 = vrot.lane.b32.xlu0 %v1860, 32
    %v1863 = vpop.permute.xlu0 %1862
    %1865 = vst.msk [vmem:[%s15 + $0x10] sm:$0xff] %vm298, %v1863
    %1866 = vrot.lane.b32.xlu0 %v1795, 32
    %v1867 = vpop.permute.xlu0 %1866
    %v1868 = vsel %vm298, %v1867, 0
    %1870 = vmatpush.msra.mxu0 0.0
    %1871 = vmatpush.msra.mxu0 0.0
    %1872 = vmatpush.msra.mxu0 0.0
    %1873 = vmatpush.msra.mxu0 0.0
    %1874 = vmatpush.msra.mxu0 0.0
    %1875 = vmatpush.msra.mxu0 0.0
    %1876 = vmatpush.msra.mxu0 0.0
    %1877 = vmatpush.msra.mxu0 0.0
    %1878 = vmatpush.msra.mxu0 0.0
    %1879 = vmatpush.msra.mxu0 0.0
    %1880 = vmatpush.msra.mxu0 0.0
    %1881 = vmatpush.msra.mxu0 0.0
    %1882 = vmatpush.msra.mxu0 %v1481
    %1883 = vmatpush.msra.mxu0 %v1480
    %1884 = vmatpush.msra.mxu0 %v1479
    %1885 = vmatpush.msra.mxu0 %v1478
    %1886 = vmatmul.f32.gmra.mxu0 %v1868
    %v1887 = vpop.f32.mrf.mxu0
    %v1888 = vadd.f32 0.0, %v1887
    %1889 = vdwg.mxu0
    %v1890 = vadd.f32 %v1519, %v1888
    %v1891 = vxor.u32 %v1890, 2147483648
    %v1892 = vmul.f32 %v1891, 1.442695
    %v1893 = vpow.pop %v1892
    %v1894 = vadd.f32 %v1893, 1.0
    %v1895 = vrcp.pop %v1894
    %v1896 = vmul.f32 %v1894, %v1895
    %v1897 = vsub.f32 1.0, %v1896
    %v1898 = vmul.f32 %v1895, %v1897
    %v1899 = vadd.f32 %v1895, %v1898
    %vm1900 = vweird.f32 %v1894
    %vm1901 = vweird.f32 %v1895
    %vm1902 = vmor %vm1900, %vm1901
    %v1903 = vsel %vm1902, %v1895, %v1899
    %v1904 = vand.u32 2147483647, %v1894
    %vm1905 = vcmp.eq.f32.partialorder %v1904, 8.507059e+37
    %v1906 = vand.u32 %v1894, 2147483648
    %v1907 = vor.u32 1.1754944e-38, %v1906
    %v1908 = vsel %vm1905, %v1907, %v1903
    %v1909 = vmul.f32 1.0, %v1908
    %v1910 = vtanh.pop %v1890
    %v1911 = vmul.f32 %v1909, %v1789
    %1913 = vrot.lane.b32.xlu0 %v1910, 64
    %v1914 = vpop.permute.xlu0 %1913
    %v1916 = vmul.f32 %v1909, %v1914
    %1918 = vrot.lane.b32.xlu0 %v1916, 32
    %v1919 = vpop.permute.xlu0 %1918
    %v1921 = vadd.f32 %v1911, %v1919
    %v1922 = vtanh.pop %v1921
    %1924 = vrot.lane.b32.xlu0 %v1922, 64
    %v1925 = vpop.permute.xlu0 %1924
    %v1927 = vmul.f32 %v1909, %v1925
    %1929 = vrot.lane.b32.xlu0 %v1927, 64
    %v1930 = vpop.permute.xlu0 %1929
    %1932 = vst.msk [vmem:[%s15 + $0x28] sm:$0xff] %vm438, %v1930
    %v1933 = vsel %vm298, %v1863, 0
    %1935 = vmatpush.msra.mxu0 0.0
    %1936 = vmatpush.msra.mxu0 0.0
    %1937 = vmatpush.msra.mxu0 0.0
    %1938 = vmatpush.msra.mxu0 0.0
    %1939 = vmatpush.msra.mxu0 0.0
    %1940 = vmatpush.msra.mxu0 0.0
    %1941 = vmatpush.msra.mxu0 0.0
    %1942 = vmatpush.msra.mxu0 0.0
    %1943 = vmatpush.msra.mxu0 0.0
    %1944 = vmatpush.msra.mxu0 0.0
    %1945 = vmatpush.msra.mxu0 0.0
    %1946 = vmatpush.msra.mxu0 0.0
    %1947 = vmatpush.msra.mxu0 %v1398
    %1948 = vmatpush.msra.mxu0 %v1397
    %1949 = vmatpush.msra.mxu0 %v1396
    %1950 = vmatpush.msra.mxu0 %v1395
    %1951 = vmatmul.f32.gmra.mxu0 %v1933
    %v1952 = vpop.f32.mrf.mxu0
    %v1953 = vadd.f32 0.0, %v1952
    %1954 = vdwg.mxu0
    %v1955 = vadd.f32 %v1454, %v1953
    %v1956 = vxor.u32 %v1955, 2147483648
    %v1957 = vmul.f32 %v1956, 1.442695
    %v1958 = vpow.pop %v1957
    %v1959 = vadd.f32 %v1958, 1.0
    %v1960 = vrcp.pop %v1959
    %v1961 = vmul.f32 %v1959, %v1960
    %v1962 = vsub.f32 1.0, %v1961
    %v1963 = vmul.f32 %v1960, %v1962
    %v1964 = vadd.f32 %v1960, %v1963
    %vm1965 = vweird.f32 %v1959
    %vm1966 = vweird.f32 %v1960
    %vm1967 = vmor %vm1965, %vm1966
    %v1968 = vsel %vm1967, %v1960, %v1964
    %v1969 = vand.u32 2147483647, %v1959
    %vm1970 = vcmp.eq.f32.partialorder %v1969, 8.507059e+37
    %v1971 = vand.u32 %v1959, 2147483648
    %v1972 = vor.u32 1.1754944e-38, %v1971
    %v1973 = vsel %vm1970, %v1972, %v1968
    %v1974 = vmul.f32 1.0, %v1973
    %v1975 = vtanh.pop %v1955
    %v1976 = vmul.f32 %v1974, %v1854
    %1978 = vrot.lane.b32.xlu0 %v1975, 64
    %v1979 = vpop.permute.xlu0 %1978
    %v1981 = vmul.f32 %v1974, %v1979
    %1983 = vrot.lane.b32.xlu0 %v1981, 32
    %v1984 = vpop.permute.xlu0 %1983
    %v1986 = vadd.f32 %v1976, %v1984
    %v1987 = vtanh.pop %v1986
    %1989 = vrot.lane.b32.xlu0 %v1987, 64
    %v1990 = vpop.permute.xlu0 %1989
    %v1992 = vmul.f32 %v1974, %v1990
    %1994 = vrot.lane.b32.xlu0 %v1992, 32
    %v1995 = vpop.permute.xlu0 %1994
    %1997 = vst.msk [vmem:[%s15 + $0x18] sm:$0xff] %vm298, %v1995
    %1998 = vrot.lane.b32.xlu0 %v1927, 32
    %v1999 = vpop.permute.xlu0 %1998
    %v2000 = vsel %vm298, %v1999, 0
    %2002 = vmatpush.msra.mxu0 0.0
    %2003 = vmatpush.msra.mxu0 0.0
    %2004 = vmatpush.msra.mxu0 0.0
    %2005 = vmatpush.msra.mxu0 0.0
    %2006 = vmatpush.msra.mxu0 0.0
    %2007 = vmatpush.msra.mxu0 0.0
    %2008 = vmatpush.msra.mxu0 0.0
    %2009 = vmatpush.msra.mxu0 0.0
    %2010 = vmatpush.msra.mxu0 0.0
    %2011 = vmatpush.msra.mxu0 0.0
    %2012 = vmatpush.msra.mxu0 0.0
    %2013 = vmatpush.msra.mxu0 0.0
    %2014 = vmatpush.msra.mxu0 %v1481
    %2015 = vmatpush.msra.mxu0 %v1480
    %2016 = vmatpush.msra.mxu0 %v1479
    %2017 = vmatpush.msra.mxu0 %v1478
    %2018 = vmatmul.f32.gmra.mxu0 %v2000
    %v2019 = vpop.f32.mrf.mxu0
    %v2020 = vadd.f32 0.0, %v2019
    %2021 = vdwg.mxu0
    %v2022 = vadd.f32 %v1516, %v2020
    %v2023 = vxor.u32 %v2022, 2147483648
    %v2024 = vmul.f32 %v2023, 1.442695
    %v2025 = vpow.pop %v2024
    %v2026 = vadd.f32 %v2025, 1.0
    %v2027 = vrcp.pop %v2026
    %v2028 = vmul.f32 %v2026, %v2027
    %v2029 = vsub.f32 1.0, %v2028
    %v2030 = vmul.f32 %v2027, %v2029
    %v2031 = vadd.f32 %v2027, %v2030
    %vm2032 = vweird.f32 %v2026
    %vm2033 = vweird.f32 %v2027
    %vm2034 = vmor %vm2032, %vm2033
    %v2035 = vsel %vm2034, %v2027, %v2031
    %v2036 = vand.u32 2147483647, %v2026
    %vm2037 = vcmp.eq.f32.partialorder %v2036, 8.507059e+37
    %v2038 = vand.u32 %v2026, 2147483648
    %v2039 = vor.u32 1.1754944e-38, %v2038
    %v2040 = vsel %vm2037, %v2039, %v2035
    %v2041 = vmul.f32 1.0, %v2040
    %v2042 = vtanh.pop %v2022
    %v2043 = vmul.f32 %v2041, %v1921
    %2045 = vrot.lane.b32.xlu0 %v2042, 64
    %v2046 = vpop.permute.xlu0 %2045
    %v2048 = vmul.f32 %v2041, %v2046
    %2050 = vrot.lane.b32.xlu0 %v2048, 32
    %v2051 = vpop.permute.xlu0 %2050
    %v2053 = vadd.f32 %v2043, %v2051
    %v2054 = vtanh.pop %v2053
    %2056 = vrot.lane.b32.xlu0 %v2054, 64
    %v2057 = vpop.permute.xlu0 %2056
    %v2059 = vmul.f32 %v2041, %v2057
    %2061 = vrot.lane.b32.xlu0 %v2059, 64
    %v2062 = vpop.permute.xlu0 %2061
    %2064 = vst.msk [vmem:[%s15 + $0x20] sm:$0xff] %vm438, %v2062
    %v2065 = vsel %vm298, %v1995, 0
    %2067 = vmatpush.msra.mxu0 0.0
    %2068 = vmatpush.msra.mxu0 0.0
    %2069 = vmatpush.msra.mxu0 0.0
    %2070 = vmatpush.msra.mxu0 0.0
    %2071 = vmatpush.msra.mxu0 0.0
    %2072 = vmatpush.msra.mxu0 0.0
    %2073 = vmatpush.msra.mxu0 0.0
    %2074 = vmatpush.msra.mxu0 0.0
    %2075 = vmatpush.msra.mxu0 0.0
    %2076 = vmatpush.msra.mxu0 0.0
    %2077 = vmatpush.msra.mxu0 0.0
    %2078 = vmatpush.msra.mxu0 0.0
    %2079 = vmatpush.msra.mxu0 %v1398
    %2080 = vmatpush.msra.mxu0 %v1397
    %2081 = vmatpush.msra.mxu0 %v1396
    %2082 = vmatpush.msra.mxu0 %v1395
    %2083 = vmatmul.f32.gmra.mxu0 %v2065
    %v2084 = vpop.f32.mrf.mxu0
    %v2085 = vadd.f32 0.0, %v2084
    %2086 = vdwg.mxu0
    %v2087 = vadd.f32 %v1457, %v2085
    %v2088 = vxor.u32 %v2087, 2147483648
    %v2089 = vmul.f32 %v2088, 1.442695
    %v2090 = vpow.pop %v2089
    %v2091 = vadd.f32 %v2090, 1.0
    %v2092 = vrcp.pop %v2091
    %v2093 = vmul.f32 %v2091, %v2092
    %v2094 = vsub.f32 1.0, %v2093
    %v2095 = vmul.f32 %v2092, %v2094
    %v2096 = vadd.f32 %v2092, %v2095
    %vm2097 = vweird.f32 %v2091
    %vm2098 = vweird.f32 %v2092
    %vm2099 = vmor %vm2097, %vm2098
    %v2100 = vsel %vm2099, %v2092, %v2096
    %v2101 = vand.u32 2147483647, %v2091
    %vm2102 = vcmp.eq.f32.partialorder %v2101, 8.507059e+37
    %v2103 = vand.u32 %v2091, 2147483648
    %v2104 = vor.u32 1.1754944e-38, %v2103
    %v2105 = vsel %vm2102, %v2104, %v2100
    %v2106 = vmul.f32 1.0, %v2105
    %v2107 = vtanh.pop %v2087
    %v2108 = vmul.f32 %v2106, %v1986
    %2110 = vrot.lane.b32.xlu0 %v2107, 64
    %v2111 = vpop.permute.xlu0 %2110
    %v2113 = vmul.f32 %v2106, %v2111
    %2115 = vrot.lane.b32.xlu0 %v2113, 32
    %v2116 = vpop.permute.xlu0 %2115
    %v2118 = vadd.f32 %v2108, %v2116
    %v2119 = vtanh.pop %v2118
    %2121 = vrot.lane.b32.xlu0 %v2119, 64
    %v2122 = vpop.permute.xlu0 %2121
    %v2124 = vmul.f32 %v2106, %v2122
    %2126 = vrot.lane.b32.xlu0 %v2124, 32
    %v2127 = vpop.permute.xlu0 %2126
    %2129 = vst.msk [vmem:[%s15 + $0x20] sm:$0xff] %vm298, %v2127
    %2130 = vrot.lane.b32.xlu0 %v2059, 32
    %v2131 = vpop.permute.xlu0 %2130
    %v2132 = vsel %vm298, %v2131, 0
    %2134 = vmatpush.msra.mxu0 0.0
    %2135 = vmatpush.msra.mxu0 0.0
    %2136 = vmatpush.msra.mxu0 0.0
    %2137 = vmatpush.msra.mxu0 0.0
    %2138 = vmatpush.msra.mxu0 0.0
    %2139 = vmatpush.msra.mxu0 0.0
    %2140 = vmatpush.msra.mxu0 0.0
    %2141 = vmatpush.msra.mxu0 0.0
    %2142 = vmatpush.msra.mxu0 0.0
    %2143 = vmatpush.msra.mxu0 0.0
    %2144 = vmatpush.msra.mxu0 0.0
    %2145 = vmatpush.msra.mxu0 0.0
    %2146 = vmatpush.msra.mxu0 %v1481
    %2147 = vmatpush.msra.mxu0 %v1480
    %2148 = vmatpush.msra.mxu0 %v1479
    %2149 = vmatpush.msra.mxu0 %v1478
    %2150 = vmatmul.f32.gmra.mxu0 %v2132
    %v2151 = vpop.f32.mrf.mxu0
    %v2152 = vadd.f32 0.0, %v2151
    %2153 = vdwg.mxu0
    %v2154 = vadd.f32 %v1513, %v2152
    %v2155 = vxor.u32 %v2154, 2147483648
    %v2156 = vmul.f32 %v2155, 1.442695
    %v2157 = vpow.pop %v2156
    %v2158 = vadd.f32 %v2157, 1.0
    %v2159 = vrcp.pop %v2158
    %v2160 = vmul.f32 %v2158, %v2159
    %v2161 = vsub.f32 1.0, %v2160
    %v2162 = vmul.f32 %v2159, %v2161
    %v2163 = vadd.f32 %v2159, %v2162
    %vm2164 = vweird.f32 %v2158
    %vm2165 = vweird.f32 %v2159
    %vm2166 = vmor %vm2164, %vm2165
    %v2167 = vsel %vm2166, %v2159, %v2163
    %v2168 = vand.u32 2147483647, %v2158
    %vm2169 = vcmp.eq.f32.partialorder %v2168, 8.507059e+37
    %v2170 = vand.u32 %v2158, 2147483648
    %v2171 = vor.u32 1.1754944e-38, %v2170
    %v2172 = vsel %vm2169, %v2171, %v2167
    %v2173 = vmul.f32 1.0, %v2172
    %v2174 = vtanh.pop %v2154
    %v2175 = vmul.f32 %v2173, %v2053
    %2177 = vrot.lane.b32.xlu0 %v2174, 64
    %v2178 = vpop.permute.xlu0 %2177
    %v2180 = vmul.f32 %v2173, %v2178
    %2182 = vrot.lane.b32.xlu0 %v2180, 32
    %v2183 = vpop.permute.xlu0 %2182
    %v2185 = vadd.f32 %v2175, %v2183
    %v2186 = vtanh.pop %v2185
    %2188 = vrot.lane.b32.xlu0 %v2186, 64
    %v2189 = vpop.permute.xlu0 %2188
    %v2191 = vmul.f32 %v2173, %v2189
    %2193 = vrot.lane.b32.xlu0 %v2191, 64
    %v2194 = vpop.permute.xlu0 %2193
    %2196 = vst.msk [vmem:[%s15 + $0x18] sm:$0xff] %vm438, %v2194
    %v2197 = vsel %vm298, %v2127, 0
    %2199 = vmatpush.msra.mxu0 0.0
    %2200 = vmatpush.msra.mxu0 0.0
    %2201 = vmatpush.msra.mxu0 0.0
    %2202 = vmatpush.msra.mxu0 0.0
    %2203 = vmatpush.msra.mxu0 0.0
    %2204 = vmatpush.msra.mxu0 0.0
    %2205 = vmatpush.msra.mxu0 0.0
    %2206 = vmatpush.msra.mxu0 0.0
    %2207 = vmatpush.msra.mxu0 0.0
    %2208 = vmatpush.msra.mxu0 0.0
    %2209 = vmatpush.msra.mxu0 0.0
    %2210 = vmatpush.msra.mxu0 0.0
    %2211 = vmatpush.msra.mxu0 %v1398
    %2212 = vmatpush.msra.mxu0 %v1397
    %2213 = vmatpush.msra.mxu0 %v1396
    %2214 = vmatpush.msra.mxu0 %v1395
    %2215 = vmatmul.f32.gmra.mxu0 %v2197
    %v2216 = vpop.f32.mrf.mxu0
    %v2217 = vadd.f32 0.0, %v2216
    %2218 = vdwg.mxu0
    %v2219 = vadd.f32 %v1460, %v2217
    %v2220 = vxor.u32 %v2219, 2147483648
    %v2221 = vmul.f32 %v2220, 1.442695
    %v2222 = vpow.pop %v2221
    %v2223 = vadd.f32 %v2222, 1.0
    %v2224 = vrcp.pop %v2223
    %v2225 = vmul.f32 %v2223, %v2224
    %v2226 = vsub.f32 1.0, %v2225
    %v2227 = vmul.f32 %v2224, %v2226
    %v2228 = vadd.f32 %v2224, %v2227
    %vm2229 = vweird.f32 %v2223
    %vm2230 = vweird.f32 %v2224
    %vm2231 = vmor %vm2229, %vm2230
    %v2232 = vsel %vm2231, %v2224, %v2228
    %v2233 = vand.u32 2147483647, %v2223
    %vm2234 = vcmp.eq.f32.partialorder %v2233, 8.507059e+37
    %v2235 = vand.u32 %v2223, 2147483648
    %v2236 = vor.u32 1.1754944e-38, %v2235
    %v2237 = vsel %vm2234, %v2236, %v2232
    %v2238 = vmul.f32 1.0, %v2237
    %v2239 = vtanh.pop %v2219
    %v2240 = vmul.f32 %v2238, %v2118
    %2242 = vrot.lane.b32.xlu0 %v2239, 64
    %v2243 = vpop.permute.xlu0 %2242
    %v2245 = vmul.f32 %v2238, %v2243
    %2247 = vrot.lane.b32.xlu0 %v2245, 32
    %v2248 = vpop.permute.xlu0 %2247
    %v2250 = vadd.f32 %v2240, %v2248
    %v2251 = vtanh.pop %v2250
    %2253 = vrot.lane.b32.xlu0 %v2251, 64
    %v2254 = vpop.permute.xlu0 %2253
    %v2256 = vmul.f32 %v2238, %v2254
    %2258 = vrot.lane.b32.xlu0 %v2256, 32
    %v2259 = vpop.permute.xlu0 %2258
    %2261 = vst.msk [vmem:[%s15 + $0x28] sm:$0xff] %vm298, %v2259
    %2262 = vrot.lane.b32.xlu0 %v2191, 32
    %v2263 = vpop.permute.xlu0 %2262
    %v2264 = vsel %vm298, %v2263, 0
    %2266 = vmatpush.msra.mxu0 0.0
    %2267 = vmatpush.msra.mxu0 0.0
    %2268 = vmatpush.msra.mxu0 0.0
    %2269 = vmatpush.msra.mxu0 0.0
    %2270 = vmatpush.msra.mxu0 0.0
    %2271 = vmatpush.msra.mxu0 0.0
    %2272 = vmatpush.msra.mxu0 0.0
    %2273 = vmatpush.msra.mxu0 0.0
    %2274 = vmatpush.msra.mxu0 0.0
    %2275 = vmatpush.msra.mxu0 0.0
    %2276 = vmatpush.msra.mxu0 0.0
    %2277 = vmatpush.msra.mxu0 0.0
    %2278 = vmatpush.msra.mxu0 %v1481
    %2279 = vmatpush.msra.mxu0 %v1480
    %2280 = vmatpush.msra.mxu0 %v1479
    %2281 = vmatpush.msra.mxu0 %v1478
    %2282 = vmatmul.f32.gmra.mxu0 %v2264
    %v2283 = vpop.f32.mrf.mxu0
    %v2284 = vadd.f32 0.0, %v2283
    %2285 = vdwg.mxu0
    %v2286 = vadd.f32 %v1510, %v2284
    %v2287 = vxor.u32 %v2286, 2147483648
    %v2288 = vmul.f32 %v2287, 1.442695
    %v2289 = vpow.pop %v2288
    %v2290 = vadd.f32 %v2289, 1.0
    %v2291 = vrcp.pop %v2290
    %v2292 = vmul.f32 %v2290, %v2291
    %v2293 = vsub.f32 1.0, %v2292
    %v2294 = vmul.f32 %v2291, %v2293
    %v2295 = vadd.f32 %v2291, %v2294
    %vm2296 = vweird.f32 %v2290
    %vm2297 = vweird.f32 %v2291
    %vm2298 = vmor %vm2296, %vm2297
    %v2299 = vsel %vm2298, %v2291, %v2295
    %v2300 = vand.u32 2147483647, %v2290
    %vm2301 = vcmp.eq.f32.partialorder %v2300, 8.507059e+37
    %v2302 = vand.u32 %v2290, 2147483648
    %v2303 = vor.u32 1.1754944e-38, %v2302
    %v2304 = vsel %vm2301, %v2303, %v2299
    %v2305 = vmul.f32 1.0, %v2304
    %v2306 = vtanh.pop %v2286
    %v2307 = vmul.f32 %v2305, %v2185
    %2309 = vrot.lane.b32.xlu0 %v2306, 64
    %v2310 = vpop.permute.xlu0 %2309
    %v2312 = vmul.f32 %v2305, %v2310
    %2314 = vrot.lane.b32.xlu0 %v2312, 32
    %v2315 = vpop.permute.xlu0 %2314
    %v2317 = vadd.f32 %v2307, %v2315
    %v2318 = vtanh.pop %v2317
    %2320 = vrot.lane.b32.xlu0 %v2318, 64
    %v2321 = vpop.permute.xlu0 %2320
    %v2323 = vmul.f32 %v2305, %v2321
    %2325 = vrot.lane.b32.xlu0 %v2323, 64
    %v2326 = vpop.permute.xlu0 %2325
    %2328 = vst.msk [vmem:[%s15 + $0x10] sm:$0xff] %vm438, %v2326
    %v2329 = vsel %vm298, %v2259, 0
    %2331 = vmatpush.msra.mxu0 0.0
    %2332 = vmatpush.msra.mxu0 0.0
    %2333 = vmatpush.msra.mxu0 0.0
    %2334 = vmatpush.msra.mxu0 0.0
    %2335 = vmatpush.msra.mxu0 0.0
    %2336 = vmatpush.msra.mxu0 0.0
    %2337 = vmatpush.msra.mxu0 0.0
    %2338 = vmatpush.msra.mxu0 0.0
    %2339 = vmatpush.msra.mxu0 0.0
    %2340 = vmatpush.msra.mxu0 0.0
    %2341 = vmatpush.msra.mxu0 0.0
    %2342 = vmatpush.msra.mxu0 0.0
    %2343 = vmatpush.msra.mxu0 %v1398
    %2344 = vmatpush.msra.mxu0 %v1397
    %2345 = vmatpush.msra.mxu0 %v1396
    %2346 = vmatpush.msra.mxu0 %v1395
    %2347 = vmatmul.f32.gmra.mxu0 %v2329
    %v2348 = vpop.f32.mrf.mxu0
    %v2349 = vadd.f32 0.0, %v2348
    %2350 = vdwg.mxu0
    %v2351 = vadd.f32 %v1463, %v2349
    %v2352 = vxor.u32 %v2351, 2147483648
    %v2353 = vmul.f32 %v2352, 1.442695
    %v2354 = vpow.pop %v2353
    %v2355 = vadd.f32 %v2354, 1.0
    %v2356 = vrcp.pop %v2355
    %v2357 = vmul.f32 %v2355, %v2356
    %v2358 = vsub.f32 1.0, %v2357
    %v2359 = vmul.f32 %v2356, %v2358
    %v2360 = vadd.f32 %v2356, %v2359
    %vm2361 = vweird.f32 %v2355
    %vm2362 = vweird.f32 %v2356
    %vm2363 = vmor %vm2361, %vm2362
    %v2364 = vsel %vm2363, %v2356, %v2360
    %v2365 = vand.u32 2147483647, %v2355
    %vm2366 = vcmp.eq.f32.partialorder %v2365, 8.507059e+37
    %v2367 = vand.u32 %v2355, 2147483648
    %v2368 = vor.u32 1.1754944e-38, %v2367
    %v2369 = vsel %vm2366, %v2368, %v2364
    %v2370 = vmul.f32 1.0, %v2369
    %v2371 = vtanh.pop %v2351
    %v2372 = vmul.f32 %v2370, %v2250
    %2374 = vrot.lane.b32.xlu0 %v2371, 64
    %v2375 = vpop.permute.xlu0 %2374
    %v2377 = vmul.f32 %v2370, %v2375
    %2379 = vrot.lane.b32.xlu0 %v2377, 32
    %v2380 = vpop.permute.xlu0 %2379
    %v2382 = vadd.f32 %v2372, %v2380
    %v2383 = vtanh.pop %v2382
    %2385 = vrot.lane.b32.xlu0 %v2383, 64
    %v2386 = vpop.permute.xlu0 %2385
    %v2388 = vmul.f32 %v2370, %v2386
    %2390 = vrot.lane.b32.xlu0 %v2388, 32
    %v2391 = vpop.permute.xlu0 %2390
    %2393 = vst.msk [vmem:[%s15 + $0x30] sm:$0xff] %vm298, %v2391
    %2394 = vrot.lane.b32.xlu0 %v2323, 32
    %v2395 = vpop.permute.xlu0 %2394
    %v2396 = vsel %vm298, %v2395, 0
    %2398 = vmatpush.msra.mxu0 0.0
    %2399 = vmatpush.msra.mxu0 0.0
    %2400 = vmatpush.msra.mxu0 0.0
    %2401 = vmatpush.msra.mxu0 0.0
    %2402 = vmatpush.msra.mxu0 0.0
    %2403 = vmatpush.msra.mxu0 0.0
    %2404 = vmatpush.msra.mxu0 0.0
    %2405 = vmatpush.msra.mxu0 0.0
    %2406 = vmatpush.msra.mxu0 0.0
    %2407 = vmatpush.msra.mxu0 0.0
    %2408 = vmatpush.msra.mxu0 0.0
    %2409 = vmatpush.msra.mxu0 0.0
    %2410 = vmatpush.msra.mxu0 %v1481
    %2411 = vmatpush.msra.mxu0 %v1480
    %2412 = vmatpush.msra.mxu0 %v1479
    %2413 = vmatpush.msra.mxu0 %v1478
    %2414 = vmatmul.f32.gmra.mxu0 %v2396
    %v2415 = vpop.f32.mrf.mxu0
    %v2416 = vadd.f32 0.0, %v2415
    %2417 = vdwg.mxu0
    %v2418 = vadd.f32 %v1507, %v2416
    %v2419 = vxor.u32 %v2418, 2147483648
    %v2420 = vmul.f32 %v2419, 1.442695
    %v2421 = vpow.pop %v2420
    %v2422 = vadd.f32 %v2421, 1.0
    %v2423 = vrcp.pop %v2422
    %v2424 = vmul.f32 %v2422, %v2423
    %v2425 = vsub.f32 1.0, %v2424
    %v2426 = vmul.f32 %v2423, %v2425
    %v2427 = vadd.f32 %v2423, %v2426
    %vm2428 = vweird.f32 %v2422
    %vm2429 = vweird.f32 %v2423
    %vm2430 = vmor %vm2428, %vm2429
    %v2431 = vsel %vm2430, %v2423, %v2427
    %v2432 = vand.u32 2147483647, %v2422
    %vm2433 = vcmp.eq.f32.partialorder %v2432, 8.507059e+37
    %v2434 = vand.u32 %v2422, 2147483648
    %v2435 = vor.u32 1.1754944e-38, %v2434
    %v2436 = vsel %vm2433, %v2435, %v2431
    %v2437 = vmul.f32 1.0, %v2436
    %v2438 = vtanh.pop %v2418
    %v2439 = vmul.f32 %v2437, %v2317
    %2441 = vrot.lane.b32.xlu0 %v2438, 64
    %v2442 = vpop.permute.xlu0 %2441
    %v2444 = vmul.f32 %v2437, %v2442
    %2446 = vrot.lane.b32.xlu0 %v2444, 32
    %v2447 = vpop.permute.xlu0 %2446
    %v2449 = vadd.f32 %v2439, %v2447
    %v2450 = vtanh.pop %v2449
    %2452 = vrot.lane.b32.xlu0 %v2450, 64
    %v2453 = vpop.permute.xlu0 %2452
    %v2455 = vmul.f32 %v2437, %v2453
    %2457 = vrot.lane.b32.xlu0 %v2455, 64
    %v2458 = vpop.permute.xlu0 %2457
    %2460 = vst.msk [vmem:[%s15 + $0x8] sm:$0xff] %vm438, %v2458
    %v2461 = vsel %vm298, %v2391, 0
    %2463 = vmatpush.msra.mxu0 0.0
    %2464 = vmatpush.msra.mxu0 0.0
    %2465 = vmatpush.msra.mxu0 0.0
    %2466 = vmatpush.msra.mxu0 0.0
    %2467 = vmatpush.msra.mxu0 0.0
    %2468 = vmatpush.msra.mxu0 0.0
    %2469 = vmatpush.msra.mxu0 0.0
    %2470 = vmatpush.msra.mxu0 0.0
    %2471 = vmatpush.msra.mxu0 0.0
    %2472 = vmatpush.msra.mxu0 0.0
    %2473 = vmatpush.msra.mxu0 0.0
    %2474 = vmatpush.msra.mxu0 0.0
    %2475 = vmatpush.msra.mxu0 %v1398
    %2476 = vmatpush.msra.mxu0 %v1397
    %2477 = vmatpush.msra.mxu0 %v1396
    %2478 = vmatpush.msra.mxu0 %v1395
    %2479 = vmatmul.f32.gmra.mxu0 %v2461
    %v2480 = vpop.f32.mrf.mxu0
    %v2481 = vadd.f32 0.0, %v2480
    %2482 = vdwg.mxu0
    %v2483 = vadd.f32 %v1466, %v2481
    %v2484 = vxor.u32 %v2483, 2147483648
    %v2485 = vmul.f32 %v2484, 1.442695
    %v2486 = vpow.pop %v2485
    %v2487 = vadd.f32 %v2486, 1.0
    %v2488 = vrcp.pop %v2487
    %v2489 = vmul.f32 %v2487, %v2488
    %v2490 = vsub.f32 1.0, %v2489
    %v2491 = vmul.f32 %v2488, %v2490
    %v2492 = vadd.f32 %v2488, %v2491
    %vm2493 = vweird.f32 %v2487
    %vm2494 = vweird.f32 %v2488
    %vm2495 = vmor %vm2493, %vm2494
    %v2496 = vsel %vm2495, %v2488, %v2492
    %v2497 = vand.u32 2147483647, %v2487
    %vm2498 = vcmp.eq.f32.partialorder %v2497, 8.507059e+37
    %v2499 = vand.u32 %v2487, 2147483648
    %v2500 = vor.u32 1.1754944e-38, %v2499
    %v2501 = vsel %vm2498, %v2500, %v2496
    %v2502 = vmul.f32 1.0, %v2501
    %v2503 = vtanh.pop %v2483
    %v2504 = vmul.f32 %v2502, %v2382
    %2506 = vrot.lane.b32.xlu0 %v2503, 64
    %v2507 = vpop.permute.xlu0 %2506
    %v2509 = vmul.f32 %v2502, %v2507
    %2511 = vrot.lane.b32.xlu0 %v2509, 32
    %v2512 = vpop.permute.xlu0 %2511
    %v2514 = vadd.f32 %v2504, %v2512
    %v2515 = vtanh.pop %v2514
    %2517 = vrot.lane.b32.xlu0 %v2515, 64
    %v2518 = vpop.permute.xlu0 %2517
    %v2520 = vmul.f32 %v2502, %v2518
    %2522 = vrot.lane.b32.xlu0 %v2520, 32
    %v2523 = vpop.permute.xlu0 %2522
    %2525 = vst.msk [vmem:[%s15 + $0x38] sm:$0xff] %vm298, %v2523
    %2526 = vrot.lane.b32.xlu0 %v2455, 32
    %v2527 = vpop.permute.xlu0 %2526
    %v2528 = vsel %vm298, %v2527, 0
    %2530 = vmatpush.msra.mxu0 0.0
    %2531 = vmatpush.msra.mxu0 0.0
    %2532 = vmatpush.msra.mxu0 0.0
    %2533 = vmatpush.msra.mxu0 0.0
    %2534 = vmatpush.msra.mxu0 0.0
    %2535 = vmatpush.msra.mxu0 0.0
    %2536 = vmatpush.msra.mxu0 0.0
    %2537 = vmatpush.msra.mxu0 0.0
    %2538 = vmatpush.msra.mxu0 0.0
    %2539 = vmatpush.msra.mxu0 0.0
    %2540 = vmatpush.msra.mxu0 0.0
    %2541 = vmatpush.msra.mxu0 0.0
    %2542 = vmatpush.msra.mxu0 %v1481
    %2543 = vmatpush.msra.mxu0 %v1480
    %2544 = vmatpush.msra.mxu0 %v1479
    %2545 = vmatpush.msra.mxu0 %v1478
    %2546 = vmatmul.f32.gmra.mxu0 %v2528
    %v2547 = vpop.f32.mrf.mxu0
    %v2548 = vadd.f32 0.0, %v2547
    %2549 = vdwg.mxu0
    %v2550 = vadd.f32 %v1504, %v2548
    %v2551 = vxor.u32 %v2550, 2147483648
    %v2552 = vmul.f32 %v2551, 1.442695
    %v2553 = vpow.pop %v2552
    %v2554 = vadd.f32 %v2553, 1.0
    %v2555 = vrcp.pop %v2554
    %v2556 = vmul.f32 %v2554, %v2555
    %v2557 = vsub.f32 1.0, %v2556
    %v2558 = vmul.f32 %v2555, %v2557
    %v2559 = vadd.f32 %v2555, %v2558
    %vm2560 = vweird.f32 %v2554
    %vm2561 = vweird.f32 %v2555
    %vm2562 = vmor %vm2560, %vm2561
    %v2563 = vsel %vm2562, %v2555, %v2559
    %v2564 = vand.u32 2147483647, %v2554
    %vm2565 = vcmp.eq.f32.partialorder %v2564, 8.507059e+37
    %v2566 = vand.u32 %v2554, 2147483648
    %v2567 = vor.u32 1.1754944e-38, %v2566
    %v2568 = vsel %vm2565, %v2567, %v2563
    %v2569 = vmul.f32 1.0, %v2568
    %v2570 = vtanh.pop %v2550
    %v2571 = vmul.f32 %v2569, %v2449
    %2573 = vrot.lane.b32.xlu0 %v2570, 64
    %v2574 = vpop.permute.xlu0 %2573
    %v2576 = vmul.f32 %v2569, %v2574
    %2578 = vrot.lane.b32.xlu0 %v2576, 32
    %v2579 = vpop.permute.xlu0 %2578
    %v2581 = vadd.f32 %v2571, %v2579
    %v2582 = vtanh.pop %v2581
    %2584 = vrot.lane.b32.xlu0 %v2582, 64
    %v2585 = vpop.permute.xlu0 %2584
    %v2587 = vmul.f32 %v2569, %v2585
    %2589 = vrot.lane.b32.xlu0 %v2587, 64
    %v2590 = vpop.permute.xlu0 %2589
    %2592 = vst.msk [vmem:[%s15] sm:$0xff] %vm438, %v2590
    %2593 = vst.msk [vmem:[%s16 + $0x10] sm:$0xff] %vm298, %v2523
    %2595 = vrot.lane.b32.xlu0 %v2514, 96
    %v2596 = vpop.permute.xlu0 %2595
    %2598 = vst.msk [vmem:[%s17 + $0x10] sm:$0xff] %vm298, %v2596
    %2599 = vrot.lane.b32.xlu0 %v2587, 32
    %v2600 = vpop.permute.xlu0 %2599
    %2602 = vst.msk [vmem:[%s16 + $0x18] sm:$0xff] %vm298, %v2600
    %2604 = vrot.lane.b32.xlu0 %v2581, 96
    %v2605 = vpop.permute.xlu0 %2604
    %2607 = vst.msk [vmem:[%s17 + $0x18] sm:$0xff] %vm298, %v2605
    // Predicated region
    $region86: #{_lambda_.1} parent=1 // pred_check
      _
    $region87: #{_lambda_.1} parent=1 // pred_check_branch
      %2609 = sbr.rel (0) target = $region89
    $region88: #{_lambda_.1} parent=1 // pred_region
      _
    $region89: #{_lambda_.1} parent=1 // pred_fallthru
      _
    // Predicated region
    $region90: #{_lambda_.1} parent=1 // pred_check
      _
    $region91: #{_lambda_.1} parent=1 // pred_check_branch
      %2611 = sbr.rel (0) target = $region93
    $region92: #{_lambda_.1} parent=1 // pred_region
      _
    $region93: #{_lambda_.1} parent=1 // pred_fallthru
      _
    // Predicated region
    $region94: #{_lambda_.1} parent=1 // pred_check
      _
    $region95: #{_lambda_.1} parent=1 // pred_check_branch
      %2613 = sbr.rel (0) target = $region97
    $region96: #{_lambda_.1} parent=1 // pred_region
      _
    $region97: #{_lambda_.1} parent=1 // pred_fallthru
      _
    // Predicated region
    $region98: #{_lambda_.1} parent=1 // pred_check
      _
    $region99: #{_lambda_.1} parent=1 // pred_check_branch
      %2615 = sbr.rel (0) target = $region101
    $region100: #{_lambda_.1} parent=1 // pred_region
      _
    $region101: #{_lambda_.1} parent=1 // pred_fallthru
      _
    // Predicated region
    $region102: #{_lambda_.1} parent=1 // pred_check
      _
    $region103: #{_lambda_.1} parent=1 // pred_check_branch
      %2617 = sbr.rel (0) target = $region105
    $region104: #{_lambda_.1} parent=1 // pred_region
      _
    $region105: #{_lambda_.1} parent=1 // pred_fallthru
      _
    // Predicated region
    $region106: #{_lambda_.1} parent=1 // pred_check
      _
    $region107: #{_lambda_.1} parent=1 // pred_check_branch
      %2619 = sbr.rel (0) target = $region109
    $region108: #{_lambda_.1} parent=1 // pred_region
      _
    $region109: #{_lambda_.1} parent=1 // pred_fallthru
      _
    %2620 = vsyncpa [#allocation4], 1
    %2621 = vsyncpa [#allocation6], 1
    %2622 = vsyncpa [#allocation9], 1
    %2623 = vsyncpa [#allocation12], 1

</llo_original>
